<compile_context>
chip_gen: v7x
topology: tpu7x:2x2x1
jax: 0.10.0
libtpu: 0.0.40
codegen_flags: <defaults>
</compile_context>

<pallas_src>
import functools

import jax
import jax.numpy as jnp
from jax.experimental import pallas as pl
from jax.experimental.pallas import tpu as pltpu

# Row order inside the packed (18, D) bias / LayerNorm slab.
VD_ORDER = ("bq1", "bk1", "bv1", "bo1", "ln12_g", "ln12_b", "b12", "ln13_g", "ln13_b",
            "bq2", "bk2", "bv2", "bo2", "ln22_g", "ln22_b", "b22", "ln23_g", "ln23_b")
VD = {name: i for i, name in enumerate(VD_ORDER)}

# Column-block order inside the packed (D, 8*D) attention-weight slab.
ATTN_W_ORDER = ("wq1", "wk1", "wv1", "wo1", "wq2", "wk2", "wv2", "wo2")


# ----------------------------------------------------------------------------
# In-kernel helpers (operate on VMEM-resident values)
# ----------------------------------------------------------------------------
def _linear(x_f32, w_bf16, b_f32):
    # bf16 operands on the MXU, f32 accumulation, f32 bias add.
    return jnp.dot(x_f32.astype(jnp.bfloat16), w_bf16,
                   preferred_element_type=jnp.float32) + b_f32


def _layernorm(z, g, b):
    mean = jnp.mean(z, axis=-1, keepdims=True)
    var = jnp.mean(jnp.square(z - mean), axis=-1, keepdims=True)
    return (z - mean) * jax.lax.rsqrt(var + 1e-5) * g + b


def _attention(q_in, k_in, v_in, wq, bq, wk, bk, wv, bv, wo, bo, *, nhead):
    """Head-batched multi-head cross attention for one batch element.

    q_in: (Lq, D) f32, k_in / v_in: (Lk, D) f32. Returns (Lq, D) f32.
    """
    lq, d = q_in.shape
    lk = k_in.shape[0]
    dh = d // nhead
    scale = 1.0 / (dh ** 0.5)

    # Projections: one full (L, D) @ (D, D) matmul each; scale folded into q once.
    q = _linear(q_in, wq, bq) * scale                       # (Lq, D) f32
    k = _linear(k_in, wk, bk)                               # (Lk, D) f32
    v = _linear(v_in, wv, bv)                               # (Lk, D) f32

    # Head split: (L, D) -> (H, L, dh).
    qh = jnp.transpose(q.reshape(lq, nhead, dh), (1, 0, 2)).astype(jnp.bfloat16)
    kh = jnp.transpose(k.reshape(lk, nhead, dh), (1, 0, 2)).astype(jnp.bfloat16)
    vh = jnp.transpose(v.reshape(lk, nhead, dh), (1, 0, 2)).astype(jnp.bfloat16)

    # Scores: one batched dot_general over heads, contracting dh.  (H, Lq, Lk) f32.
    s = jax.lax.dot_general(qh, kh, (((2,), (2,)), ((0,), (0,))),
                            preferred_element_type=jnp.float32)
    s = s - jnp.max(s, axis=-1, keepdims=True)
    e = jnp.exp(s)
    p = e * pl.reciprocal(jnp.sum(e, axis=-1, keepdims=True), approx=True)

    # P @ V, batched over heads.  (H, Lq, dh) f32.
    oh = jax.lax.dot_general(p.astype(jnp.bfloat16), vh, (((2,), (1,)), ((0,), (0,))),
                             preferred_element_type=jnp.float32)

    # Head merge + single (Lq, D) @ (D, D) output projection.
    o = jnp.transpose(oh, (1, 0, 2)).reshape(lq, d)
    return jnp.dot(o.astype(jnp.bfloat16), wo, preferred_element_type=jnp.float32) + bo


# ----------------------------------------------------------------------------
# Single fused kernel: the entire FeatureFusionLayer forward for one batch element
# ----------------------------------------------------------------------------
def _ffl_kernel(s1_ref, s2_ref, p1_ref, p2_ref,
                attn_w_ref, ffn_w1_ref, ffn_w2_ref, vecd_ref, vecf_ref,
                o1_ref, o2_ref, *, nhead, d_model, dim_ff):
    D, F, H = d_model, dim_ff, nhead

    attn_w = attn_w_ref[...]           # (D, 8D)  bf16
    ffn_w1 = ffn_w1_ref[...]           # (D, 2F)  bf16
    ffn_w2 = ffn_w2_ref[...]           # (F, 2D)  bf16
    vecd = vecd_ref[...]               # (18, D)  f32
    vecf = vecf_ref[...]               # (2,  F)  f32

    def wsl(name):                     # (D, D) attention weight slice (static lane slice)
        i = ATTN_W_ORDER.index(name)
        return attn_w[:, i * D:(i + 1) * D]

    def vd(name):                      # (1, D) bias / LN row
        i = VD[name]
        return vecd[i:i + 1, :]

    src1 = s1_ref[...]                 # (L1, D) f32 (batch dim squeezed by BlockSpec)
    src2 = s2_ref[...]                 # (L2, D) f32
    pos1 = p1_ref[...]
    pos2 = p2_ref[...]

    s1p = src1 + pos1                  # with_pos_embed(src1, pos_src1)
    s2p = src2 + pos2                  # with_pos_embed(src2, pos_src2)

    # ---- block 1: src1 attends to src2 ----
    a1 = _attention(s1p, s2p, src2,
                    wsl("wq1"), vd("bq1"), wsl("wk1"), vd("bk1"),
                    wsl("wv1"), vd("bv1"), wsl("wo1"), vd("bo1"), nhead=H)
    x1 = _layernorm(src1 + a1, vd("ln12_g"), vd("ln12_b"))
    h1 = jnp.maximum(_linear(x1, ffn_w1[:, :F], vecf[0:1, :]), 0.0)     # ReLU
    f1 = _linear(h1, ffn_w2[:, :D], vd("b12"))
    x1 = _layernorm(x1 + f1, vd("ln13_g"), vd("ln13_b"))

    # ---- block 2: src2 attends to the UPDATED src1 ----
    a2 = _attention(s2p, x1 + pos1, x1,
                    wsl("wq2"), vd("bq2"), wsl("wk2"), vd("bk2"),
                    wsl("wv2"), vd("bv2"), wsl("wo2"), vd("bo2"), nhead=H)
    x2 = _layernorm(src2 + a2, vd("ln22_g"), vd("ln22_b"))
    h2 = jnp.maximum(_linear(x2, ffn_w1[:, F:], vecf[1:2, :]), 0.0)
    f2 = _linear(h2, ffn_w2[:, D:], vd("b22"))
    x2 = _layernorm(x2 + f2, vd("ln23_g"), vd("ln23_b"))

    o1_ref[...] = x1
    o2_ref[...] = x2


def feature_fusion_forward(params, src1, src2, pos_src1=None, pos_src2=None):
    """src1: (L1, B, D), src2: (L2, B, D); returns (src1', src2') in the same layout."""
    l1, b, d = src1.shape
    l2 = src2.shape[0]
    nhead = params["nhead"]
    dim_ff = params["w11"].shape[1]

    pos1 = jnp.zeros_like(src1) if pos_src1 is None else pos_src1
    pos2 = jnp.zeros_like(src2) if pos_src2 is None else pos_src2

    # (L, B, D) -> (B, L, D) so a batch-grid BlockSpec can slice one contiguous slab per step.
    to_bld = lambda x: jnp.transpose(x, (1, 0, 2))

    bf = jnp.bfloat16
    # Packed parameter slabs (few large DMAs instead of 36 tiny ones).
    attn_w = jnp.concatenate([params[n] for n in ATTN_W_ORDER], axis=1).astype(bf)   # (D, 8D)
    ffn_w1 = jnp.concatenate([params["w11"], params["w21"]], axis=1).astype(bf)      # (D, 2F)
    ffn_w2 = jnp.concatenate([params["w12"], params["w22"]], axis=1).astype(bf)      # (F, 2D)
    vecd = jnp.stack([params[n] for n in VD_ORDER]).astype(jnp.float32)              # (18, D)
    vecf = jnp.stack([params["b11"], params["b21"]]).astype(jnp.float32)             # (2, F)

    kernel = functools.partial(_ffl_kernel, nhead=nhead, d_model=d, dim_ff=dim_ff)

    def act_spec(length):   # one batch element per grid step; batch dim squeezed in-kernel
        return pl.BlockSpec((None, length, d), lambda bi: (bi, 0, 0))

    def full_spec(shape):   # parameters: full array, same block every step (stays resident)
        return pl.BlockSpec(shape, lambda bi: (0,) * len(shape))

    out1, out2 = pl.pallas_call(
        kernel,
        grid=(b,),
        out_shape=(jax.ShapeDtypeStruct((b, l1, d), jnp.float32),
                   jax.ShapeDtypeStruct((b, l2, d), jnp.float32)),
        in_specs=[act_spec(l1), act_spec(l2), act_spec(l1), act_spec(l2),
                  full_spec(attn_w.shape), full_spec(ffn_w1.shape),
                  full_spec(ffn_w2.shape), full_spec(vecd.shape), full_spec(vecf.shape)],
        out_specs=(act_spec(l1), act_spec(l2)),
        compiler_params=pltpu.CompilerParams(dimension_semantics=("parallel",)),
    )(to_bld(src1), to_bld(src2), to_bld(pos1), to_bld(pos2),
      attn_w, ffn_w1, ffn_w2, vecd, vecf)

    return jnp.transpose(out1, (1, 0, 2)), jnp.transpose(out2, (1, 0, 2))


# ----------------------------------------------------------------------------
# Pure-JAX (XLA) reference with the same precision policy (bf16 matmuls, f32
# accumulation, f32 softmax/LayerNorm) so the comparison isolates kernel logic.
# ----------------------------------------------------------------------------
def reference_forward(params, src1, src2, pos_src1, pos_src2):
    nhead = params["nhead"]

    def mm(x, w):
        return jnp.dot(x.astype(jnp.bfloat16), w.astype(jnp.bfloat16),
                       preferred_element_type=jnp.float32)

    def ln(z, g, b):
        mean = jnp.mean(z, axis=-1, keepdims=True)
        var = jnp.mean((z - mean) ** 2, axis=-1, keepdims=True)
        return (z - mean) * jax.lax.rsqrt(var + 1e-5) * g + b

    def mha(q_in, k_in, v_in, wq, bq, wk, bk, wv, bv, wo, bo):
        lq, bt, d = q_in.shape
        lk = k_in.shape[0]
        dh = d // nhead
        scale = 1.0 / (dh ** 0.5)
        q = mm(q_in, wq) + bq
        k = mm(k_in, wk) + bk
        v = mm(v_in, wv) + bv
        qh = q.reshape(lq, bt, nhead, dh).transpose(1, 2, 0, 3)   # (B, H, Lq, dh)
        kh = k.reshape(lk, bt, nhead, dh).transpose(1, 2, 0, 3)
        vh = v.reshape(lk, bt, nhead, dh).transpose(1, 2, 0, 3)
        s = jnp.einsum("bhqd,bhkd->bhqk",
                       (qh * scale).astype(jnp.bfloat16), kh.astype(jnp.bfloat16),
                       preferred_element_type=jnp.float32)
        p = jax.nn.softmax(s, axis=-1)
        oh = jnp.einsum("bhqk,bhkd->bhqd",
                        p.astype(jnp.bfloat16), vh.astype(jnp.bfloat16),
                        preferred_element_type=jnp.float32)
        o = oh.transpose(2, 0, 1, 3).reshape(lq, bt, d)
        return mm(o, wo) + bo

    s1p = src1 + pos_src1
    s2p = src2 + pos_src2

    a1 = mha(s1p, s2p, src2,
             params["wq1"], params["bq1"], params["wk1"], params["bk1"],
             params["wv1"], params["bv1"], params["wo1"], params["bo1"])
    x1 = ln(src1 + a1, params["ln12_g"], params["ln12_b"])
    f1 = mm(jnp.maximum(mm(x1, params["w11"]) + params["b11"], 0.0),
            params["w12"]) + params["b12"]
    x1 = ln(x1 + f1, params["ln13_g"], params["ln13_b"])

    a2 = mha(s2p, x1 + pos_src1, x1,
             params["wq2"], params["bq2"], params["wk2"], params["bk2"],
             params["wv2"], params["bv2"], params["wo2"], params["bo2"])
    x2 = ln(src2 + a2, params["ln22_g"], params["ln22_b"])
    f2 = mm(jnp.maximum(mm(x2, params["w21"]) + params["b21"], 0.0),
            params["w22"]) + params["b22"]
    x2 = ln(x2 + f2, params["ln23_g"], params["ln23_b"])
    return x1, x2


# ----------------------------------------------------------------------------
def init_params(key, d_model, nhead, dim_ff):
    keys = iter(jax.random.split(key, 64))

    def w(shape):
        return jax.random.normal(next(keys), shape, jnp.float32) / jnp.sqrt(
            jnp.float32(shape[0]))

    def bias(shape):
        return 0.1 * jax.random.normal(next(keys), shape, jnp.float32)

    p = {"nhead": nhead}
    for blk in ("1", "2"):
        for nm in ("q", "k", "v", "o"):
            p[f"w{nm}{blk}"] = w((d_model, d_model))
            p[f"b{nm}{blk}"] = bias((d_model,))
        p[f"w{blk}1"] = w((d_model, dim_ff))
        p[f"b{blk}1"] = bias((dim_ff,))
        p[f"w{blk}2"] = w((dim_ff, d_model))
        p[f"b{blk}2"] = bias((d_model,))
    for ln_name in ("ln12", "ln13", "ln22", "ln23"):
        p[f"{ln_name}_g"] = 1.0 + 0.1 * jax.random.normal(
            next(keys), (d_model,), jnp.float32)
        p[f"{ln_name}_b"] = 0.1 * jax.random.normal(
            next(keys), (d_model,), jnp.float32)
    return p


if __name__ == "__main__":
    d_model, nhead, dim_ff = 32, 4, 64
    L1, L2, batch = 8, 16, 2

    key = jax.random.PRNGKey(0)
    kp, k1, k2, kp1, kp2 = jax.random.split(key, 5)

    params = init_params(kp, d_model, nhead, dim_ff)
    src1 = jax.random.normal(k1, (L1, batch, d_model), jnp.float32)
    src2 = jax.random.normal(k2, (L2, batch, d_model), jnp.float32)
    pos_src1 = jax.random.normal(kp1, (L1, batch, d_model), jnp.float32)
    pos_src2 = jax.random.normal(kp2, (L2, batch, d_model), jnp.float32)

    out1, out2 = feature_fusion_forward(params, src1, src2, pos_src1, pos_src2)
    out1, out2 = jax.block_until_ready((out1, out2))

    ref1, ref2 = reference_forward(params, src1, src2, pos_src1, pos_src2)

    assert out1.shape == (L1, batch, d_model)
    assert out2.shape == (L2, batch, d_model)
    assert jnp.allclose(out1, ref1, atol=3e-2, rtol=3e-2), "src1 mismatch vs reference"
    assert jnp.allclose(out2, ref2, atol=3e-2, rtol=3e-2), "src2 mismatch vs reference"

    print("KERNEL_OK")
</pallas_src>

<mosaic_0001>
module attributes {stable_mosaic.version = 11 : i64} {
  func.func @_ffl_kernel(%arg0: i32, %arg1: memref<1x8x32xf32, #tpu.memory_space<vmem>>, %arg2: memref<1x16x32xf32, #tpu.memory_space<vmem>>, %arg3: memref<1x8x32xf32, #tpu.memory_space<vmem>>, %arg4: memref<1x16x32xf32, #tpu.memory_space<vmem>>, %arg5: memref<32x256xbf16, #tpu.memory_space<vmem>>, %arg6: memref<32x128xbf16, #tpu.memory_space<vmem>>, %arg7: memref<64x64xbf16, #tpu.memory_space<vmem>>, %arg8: memref<18x32xf32, #tpu.memory_space<vmem>>, %arg9: memref<2x64xf32, #tpu.memory_space<vmem>>, %arg10: memref<1x8x32xf32, #tpu.memory_space<vmem>>, %arg11: memref<1x16x32xf32, #tpu.memory_space<vmem>>) attributes {dimension_semantics = [#tpu.dimension_semantics<parallel>], iteration_bounds = array<i64: 2>, scalar_prefetch = 0 : i64, scratch_operands = 0 : i64, tpu.core_type = #tpu.core_type<tc>, window_params = [{transform_indices = @transform_0, window_bounds = array<i64: 1, 8, 32>}, {transform_indices = @transform_1, window_bounds = array<i64: 1, 16, 32>}, {transform_indices = @transform_2, window_bounds = array<i64: 1, 8, 32>}, {transform_indices = @transform_3, window_bounds = array<i64: 1, 16, 32>}, {pipeline_mode = #tpu.pipeline_mode<synchronous>, transform_indices = @transform_4, window_bounds = array<i64: 32, 256>}, {pipeline_mode = #tpu.pipeline_mode<synchronous>, transform_indices = @transform_5, window_bounds = array<i64: 32, 128>}, {pipeline_mode = #tpu.pipeline_mode<synchronous>, transform_indices = @transform_6, window_bounds = array<i64: 64, 64>}, {pipeline_mode = #tpu.pipeline_mode<synchronous>, transform_indices = @transform_7, window_bounds = array<i64: 18, 32>}, {pipeline_mode = #tpu.pipeline_mode<synchronous>, transform_indices = @transform_8, window_bounds = array<i64: 2, 64>}, {transform_indices = @transform_9, window_bounds = array<i64: 1, 8, 32>}, {transform_indices = @transform_10, window_bounds = array<i64: 1, 16, 32>}]} {
    %c0 = arith.constant 0 : index
    %c0_0 = arith.constant 0 : index
    %0 = vector.load %arg5[%c0, %c0_0] : memref<32x256xbf16, #tpu.memory_space<vmem>>, vector<32x256xbf16>
    %c0_1 = arith.constant 0 : index
    %c0_2 = arith.constant 0 : index
    %1 = vector.load %arg6[%c0_1, %c0_2] : memref<32x128xbf16, #tpu.memory_space<vmem>>, vector<32x128xbf16>
    %c0_3 = arith.constant 0 : index
    %c0_4 = arith.constant 0 : index
    %2 = vector.load %arg7[%c0_3, %c0_4] : memref<64x64xbf16, #tpu.memory_space<vmem>>, vector<64x64xbf16>
    %c0_5 = arith.constant 0 : index
    %c0_6 = arith.constant 0 : index
    %3 = vector.load %arg8[%c0_5, %c0_6] : memref<18x32xf32, #tpu.memory_space<vmem>>, vector<18x32xf32>
    %c0_7 = arith.constant 0 : index
    %c0_8 = arith.constant 0 : index
    %4 = vector.load %arg9[%c0_7, %c0_8] : memref<2x64xf32, #tpu.memory_space<vmem>>, vector<2x64xf32>
    %c0_9 = arith.constant 0 : index
    %c0_10 = arith.constant 0 : index
    %c0_11 = arith.constant 0 : index
    %5 = vector.load %arg1[%c0_9, %c0_10, %c0_11] : memref<1x8x32xf32, #tpu.memory_space<vmem>>, vector<1x8x32xf32>
    %6 = vector.shape_cast %5 : vector<1x8x32xf32> to vector<8x32xf32>
    %c0_12 = arith.constant 0 : index
    %c0_13 = arith.constant 0 : index
    %c0_14 = arith.constant 0 : index
    %7 = vector.load %arg2[%c0_12, %c0_13, %c0_14] : memref<1x16x32xf32, #tpu.memory_space<vmem>>, vector<1x16x32xf32>
    %8 = vector.shape_cast %7 : vector<1x16x32xf32> to vector<16x32xf32>
    %c0_15 = arith.constant 0 : index
    %c0_16 = arith.constant 0 : index
    %c0_17 = arith.constant 0 : index
    %9 = vector.load %arg3[%c0_15, %c0_16, %c0_17] : memref<1x8x32xf32, #tpu.memory_space<vmem>>, vector<1x8x32xf32>
    %10 = vector.shape_cast %9 : vector<1x8x32xf32> to vector<8x32xf32>
    %c0_18 = arith.constant 0 : index
    %c0_19 = arith.constant 0 : index
    %c0_20 = arith.constant 0 : index
    %11 = vector.load %arg4[%c0_18, %c0_19, %c0_20] : memref<1x16x32xf32, #tpu.memory_space<vmem>>, vector<1x16x32xf32>
    %12 = vector.shape_cast %11 : vector<1x16x32xf32> to vector<16x32xf32>
    %13 = arith.addf %6, %10 : vector<8x32xf32>
    %14 = arith.addf %8, %12 : vector<16x32xf32>
    %15 = vector.extract_strided_slice %0 {offsets = [0, 0], sizes = [32, 32], strides = [1, 1]} : vector<32x256xbf16> to vector<32x32xbf16>
    %16 = vector.extract_strided_slice %3 {offsets = [0, 0], sizes = [1, 32], strides = [1, 1]} : vector<18x32xf32> to vector<1x32xf32>
    %17 = vector.extract_strided_slice %0 {offsets = [0, 32], sizes = [32, 32], strides = [1, 1]} : vector<32x256xbf16> to vector<32x32xbf16>
    %18 = vector.extract_strided_slice %3 {offsets = [1, 0], sizes = [1, 32], strides = [1, 1]} : vector<18x32xf32> to vector<1x32xf32>
    %19 = vector.extract_strided_slice %0 {offsets = [0, 64], sizes = [32, 32], strides = [1, 1]} : vector<32x256xbf16> to vector<32x32xbf16>
    %20 = vector.extract_strided_slice %3 {offsets = [2, 0], sizes = [1, 32], strides = [1, 1]} : vector<18x32xf32> to vector<1x32xf32>
    %21 = vector.extract_strided_slice %0 {offsets = [0, 96], sizes = [32, 32], strides = [1, 1]} : vector<32x256xbf16> to vector<32x32xbf16>
    %22 = vector.extract_strided_slice %3 {offsets = [3, 0], sizes = [1, 32], strides = [1, 1]} : vector<18x32xf32> to vector<1x32xf32>
    %23 = arith.truncf %13 : vector<8x32xf32> to vector<8x32xbf16>
    %cst = arith.constant dense<0.000000e+00> : vector<8x32xf32>
    %24 = tpu.matmul %23, %15, %cst {dimension_numbers = #tpu.dot_dimension_numbers<[1], [0], [0], [1], [0, 0, 1, 1], [], []>} : vector<8x32xbf16>, vector<32x32xbf16>, vector<8x32xf32> -> vector<8x32xf32>
    %25 = vector.broadcast %16 : vector<1x32xf32> to vector<8x32xf32>
    %26 = arith.addf %24, %25 : vector<8x32xf32>
    %cst_21 = arith.constant 0.353553385 : f32
    %27 = vector.broadcast %cst_21 : f32 to vector<8x32xf32>
    %28 = arith.mulf %26, %27 : vector<8x32xf32>
    %29 = arith.truncf %14 : vector<16x32xf32> to vector<16x32xbf16>
    %cst_22 = arith.constant dense<0.000000e+00> : vector<16x32xf32>
    %30 = tpu.matmul %29, %17, %cst_22 {dimension_numbers = #tpu.dot_dimension_numbers<[1], [0], [0], [1], [0, 0, 1, 1], [], []>} : vector<16x32xbf16>, vector<32x32xbf16>, vector<16x32xf32> -> vector<16x32xf32>
    %31 = vector.broadcast %18 : vector<1x32xf32> to vector<16x32xf32>
    %32 = arith.addf %30, %31 : vector<16x32xf32>
    %33 = arith.truncf %8 : vector<16x32xf32> to vector<16x32xbf16>
    %cst_23 = arith.constant dense<0.000000e+00> : vector<16x32xf32>
    %34 = tpu.matmul %33, %19, %cst_23 {dimension_numbers = #tpu.dot_dimension_numbers<[1], [0], [0], [1], [0, 0, 1, 1], [], []>} : vector<16x32xbf16>, vector<32x32xbf16>, vector<16x32xf32> -> vector<16x32xf32>
    %35 = vector.broadcast %20 : vector<1x32xf32> to vector<16x32xf32>
    %36 = arith.addf %34, %35 : vector<16x32xf32>
    %37 = vector.shape_cast %28 : vector<8x32xf32> to vector<8x4x8xf32>
    %38 = tpu.transpose %37, [1, 0, 2] : vector<8x4x8xf32> -> vector<4x8x8xf32>
    %39 = arith.truncf %38 : vector<4x8x8xf32> to vector<4x8x8xbf16>
    %40 = vector.shape_cast %32 : vector<16x32xf32> to vector<16x4x8xf32>
    %41 = tpu.transpose %40, [1, 0, 2] : vector<16x4x8xf32> -> vector<4x16x8xf32>
    %42 = arith.truncf %41 : vector<4x16x8xf32> to vector<4x16x8xbf16>
    %43 = vector.shape_cast %36 : vector<16x32xf32> to vector<16x4x8xf32>
    %44 = tpu.transpose %43, [1, 0, 2] : vector<16x4x8xf32> -> vector<4x16x8xf32>
    %45 = arith.truncf %44 : vector<4x16x8xf32> to vector<4x16x8xbf16>
    %cst_24 = arith.constant dense<0.000000e+00> : vector<4x8x16xf32>
    %46 = tpu.matmul %39, %42, %cst_24 {dimension_numbers = #tpu.dot_dimension_numbers<[2], [2], [1], [1], [0, 0, 0, 1, 1, 1], [0], [0]>} : vector<4x8x8xbf16>, vector<4x16x8xbf16>, vector<4x8x16xf32> -> vector<4x8x16xf32>
    %cst_25 = arith.constant dense<0xFF800000> : vector<4x8xf32>
    %47 = vector.multi_reduction <maximumf>, %46, %cst_25 [2] : vector<4x8x16xf32> to vector<4x8xf32>
    %48 = vector.shape_cast %47 : vector<4x8xf32> to vector<4x8x1xf32>
    %49 = vector.broadcast %48 : vector<4x8x1xf32> to vector<4x8x16xf32>
    %50 = arith.subf %46, %49 : vector<4x8x16xf32>
    %51 = math.exp %50 : vector<4x8x16xf32>
    %cst_26 = arith.constant dense<0.000000e+00> : vector<4x8xf32>
    %52 = vector.multi_reduction <add>, %51, %cst_26 [2] : vector<4x8x16xf32> to vector<4x8xf32>
    %53 = vector.shape_cast %52 : vector<4x8xf32> to vector<4x8x1xf32>
    %54 = tpu.reciprocal %53 {approx = true} : vector<4x8x1xf32> -> vector<4x8x1xf32>
    %55 = vector.broadcast %54 : vector<4x8x1xf32> to vector<4x8x16xf32>
    %56 = arith.mulf %51, %55 : vector<4x8x16xf32>
    %57 = arith.truncf %56 : vector<4x8x16xf32> to vector<4x8x16xbf16>
    %cst_27 = arith.constant dense<0.000000e+00> : vector<4x8x8xf32>
    %58 = tpu.matmul %57, %45, %cst_27 {dimension_numbers = #tpu.dot_dimension_numbers<[2], [1], [1], [2], [0, 0, 0, 1, 1, 2], [0], [0]>} : vector<4x8x16xbf16>, vector<4x16x8xbf16>, vector<4x8x8xf32> -> vector<4x8x8xf32>
    %59 = tpu.transpose %58, [1, 0, 2] : vector<4x8x8xf32> -> vector<8x4x8xf32>
    %60 = vector.shape_cast %59 : vector<8x4x8xf32> to vector<8x32xf32>
    %61 = arith.truncf %60 : vector<8x32xf32> to vector<8x32xbf16>
    %cst_28 = arith.constant dense<0.000000e+00> : vector<8x32xf32>
    %62 = tpu.matmul %61, %21, %cst_28 {dimension_numbers = #tpu.dot_dimension_numbers<[1], [0], [0], [1], [0, 0, 1, 1], [], []>} : vector<8x32xbf16>, vector<32x32xbf16>, vector<8x32xf32> -> vector<8x32xf32>
    %63 = vector.broadcast %22 : vector<1x32xf32> to vector<8x32xf32>
    %64 = arith.addf %62, %63 : vector<8x32xf32>
    %65 = arith.addf %6, %64 : vector<8x32xf32>
    %66 = vector.extract_strided_slice %3 {offsets = [4, 0], sizes = [1, 32], strides = [1, 1]} : vector<18x32xf32> to vector<1x32xf32>
    %67 = vector.extract_strided_slice %3 {offsets = [5, 0], sizes = [1, 32], strides = [1, 1]} : vector<18x32xf32> to vector<1x32xf32>
    %cst_29 = arith.constant dense<0.000000e+00> : vector<8xf32>
    %68 = vector.multi_reduction <add>, %65, %cst_29 [1] : vector<8x32xf32> to vector<8xf32>
    %69 = vector.shape_cast %68 : vector<8xf32> to vector<8x1xf32>
    %cst_30 = arith.constant 3.200000e+01 : f32
    %70 = vector.broadcast %cst_30 : f32 to vector<8x1xf32>
    %71 = arith.divf %69, %70 : vector<8x1xf32>
    %72 = vector.broadcast %71 : vector<8x1xf32> to vector<8x32xf32>
    %73 = arith.subf %65, %72 : vector<8x32xf32>
    %74 = arith.mulf %73, %73 : vector<8x32xf32>
    %cst_31 = arith.constant dense<0.000000e+00> : vector<8xf32>
    %75 = vector.multi_reduction <add>, %74, %cst_31 [1] : vector<8x32xf32> to vector<8xf32>
    %76 = vector.shape_cast %75 : vector<8xf32> to vector<8x1xf32>
    %cst_32 = arith.constant 3.200000e+01 : f32
    %77 = vector.broadcast %cst_32 : f32 to vector<8x1xf32>
    %78 = arith.divf %76, %77 : vector<8x1xf32>
    %79 = vector.broadcast %71 : vector<8x1xf32> to vector<8x32xf32>
    %80 = arith.subf %65, %79 : vector<8x32xf32>
    %cst_33 = arith.constant 9.99999974E-6 : f32
    %81 = vector.broadcast %cst_33 : f32 to vector<8x1xf32>
    %82 = arith.addf %78, %81 : vector<8x1xf32>
    %83 = math.rsqrt %82 : vector<8x1xf32>
    %84 = vector.broadcast %83 : vector<8x1xf32> to vector<8x32xf32>
    %85 = arith.mulf %80, %84 : vector<8x32xf32>
    %86 = vector.broadcast %66 : vector<1x32xf32> to vector<8x32xf32>
    %87 = arith.mulf %85, %86 : vector<8x32xf32>
    %88 = vector.broadcast %67 : vector<1x32xf32> to vector<8x32xf32>
    %89 = arith.addf %87, %88 : vector<8x32xf32>
    %90 = vector.extract_strided_slice %1 {offsets = [0, 0], sizes = [32, 64], strides = [1, 1]} : vector<32x128xbf16> to vector<32x64xbf16>
    %91 = vector.extract_strided_slice %4 {offsets = [0, 0], sizes = [1, 64], strides = [1, 1]} : vector<2x64xf32> to vector<1x64xf32>
    %92 = arith.truncf %89 : vector<8x32xf32> to vector<8x32xbf16>
    %cst_34 = arith.constant dense<0.000000e+00> : vector<8x64xf32>
    %93 = tpu.matmul %92, %90, %cst_34 {dimension_numbers = #tpu.dot_dimension_numbers<[1], [0], [0], [1], [0, 0, 1, 1], [], []>} : vector<8x32xbf16>, vector<32x64xbf16>, vector<8x64xf32> -> vector<8x64xf32>
    %94 = vector.broadcast %91 : vector<1x64xf32> to vector<8x64xf32>
    %95 = arith.addf %93, %94 : vector<8x64xf32>
    %cst_35 = arith.constant 0.000000e+00 : f32
    %96 = vector.broadcast %cst_35 : f32 to vector<8x64xf32>
    %97 = arith.maximumf %95, %96 : vector<8x64xf32>
    %98 = vector.extract_strided_slice %2 {offsets = [0, 0], sizes = [64, 32], strides = [1, 1]} : vector<64x64xbf16> to vector<64x32xbf16>
    %99 = vector.extract_strided_slice %3 {offsets = [6, 0], sizes = [1, 32], strides = [1, 1]} : vector<18x32xf32> to vector<1x32xf32>
    %100 = arith.truncf %97 : vector<8x64xf32> to vector<8x64xbf16>
    %cst_36 = arith.constant dense<0.000000e+00> : vector<8x32xf32>
    %101 = tpu.matmul %100, %98, %cst_36 {dimension_numbers = #tpu.dot_dimension_numbers<[1], [0], [0], [1], [0, 0, 1, 1], [], []>} : vector<8x64xbf16>, vector<64x32xbf16>, vector<8x32xf32> -> vector<8x32xf32>
    %102 = vector.broadcast %99 : vector<1x32xf32> to vector<8x32xf32>
    %103 = arith.addf %101, %102 : vector<8x32xf32>
    %104 = arith.addf %89, %103 : vector<8x32xf32>
    %105 = vector.extract_strided_slice %3 {offsets = [7, 0], sizes = [1, 32], strides = [1, 1]} : vector<18x32xf32> to vector<1x32xf32>
    %106 = vector.extract_strided_slice %3 {offsets = [8, 0], sizes = [1, 32], strides = [1, 1]} : vector<18x32xf32> to vector<1x32xf32>
    %cst_37 = arith.constant dense<0.000000e+00> : vector<8xf32>
    %107 = vector.multi_reduction <add>, %104, %cst_37 [1] : vector<8x32xf32> to vector<8xf32>
    %108 = vector.shape_cast %107 : vector<8xf32> to vector<8x1xf32>
    %cst_38 = arith.constant 3.200000e+01 : f32
    %109 = vector.broadcast %cst_38 : f32 to vector<8x1xf32>
    %110 = arith.divf %108, %109 : vector<8x1xf32>
    %111 = vector.broadcast %110 : vector<8x1xf32> to vector<8x32xf32>
    %112 = arith.subf %104, %111 : vector<8x32xf32>
    %113 = arith.mulf %112, %112 : vector<8x32xf32>
    %cst_39 = arith.constant dense<0.000000e+00> : vector<8xf32>
    %114 = vector.multi_reduction <add>, %113, %cst_39 [1] : vector<8x32xf32> to vector<8xf32>
    %115 = vector.shape_cast %114 : vector<8xf32> to vector<8x1xf32>
    %cst_40 = arith.constant 3.200000e+01 : f32
    %116 = vector.broadcast %cst_40 : f32 to vector<8x1xf32>
    %117 = arith.divf %115, %116 : vector<8x1xf32>
    %118 = vector.broadcast %110 : vector<8x1xf32> to vector<8x32xf32>
    %119 = arith.subf %104, %118 : vector<8x32xf32>
    %cst_41 = arith.constant 9.99999974E-6 : f32
    %120 = vector.broadcast %cst_41 : f32 to vector<8x1xf32>
    %121 = arith.addf %117, %120 : vector<8x1xf32>
    %122 = math.rsqrt %121 : vector<8x1xf32>
    %123 = vector.broadcast %122 : vector<8x1xf32> to vector<8x32xf32>
    %124 = arith.mulf %119, %123 : vector<8x32xf32>
    %125 = vector.broadcast %105 : vector<1x32xf32> to vector<8x32xf32>
    %126 = arith.mulf %124, %125 : vector<8x32xf32>
    %127 = vector.broadcast %106 : vector<1x32xf32> to vector<8x32xf32>
    %128 = arith.addf %126, %127 : vector<8x32xf32>
    %129 = arith.addf %128, %10 : vector<8x32xf32>
    %130 = vector.extract_strided_slice %0 {offsets = [0, 128], sizes = [32, 32], strides = [1, 1]} : vector<32x256xbf16> to vector<32x32xbf16>
    %131 = vector.extract_strided_slice %3 {offsets = [9, 0], sizes = [1, 32], strides = [1, 1]} : vector<18x32xf32> to vector<1x32xf32>
    %132 = vector.extract_strided_slice %0 {offsets = [0, 160], sizes = [32, 32], strides = [1, 1]} : vector<32x256xbf16> to vector<32x32xbf16>
    %133 = vector.extract_strided_slice %3 {offsets = [10, 0], sizes = [1, 32], strides = [1, 1]} : vector<18x32xf32> to vector<1x32xf32>
    %134 = vector.extract_strided_slice %0 {offsets = [0, 192], sizes = [32, 32], strides = [1, 1]} : vector<32x256xbf16> to vector<32x32xbf16>
    %135 = vector.extract_strided_slice %3 {offsets = [11, 0], sizes = [1, 32], strides = [1, 1]} : vector<18x32xf32> to vector<1x32xf32>
    %136 = vector.extract_strided_slice %0 {offsets = [0, 224], sizes = [32, 32], strides = [1, 1]} : vector<32x256xbf16> to vector<32x32xbf16>
    %137 = vector.extract_strided_slice %3 {offsets = [12, 0], sizes = [1, 32], strides = [1, 1]} : vector<18x32xf32> to vector<1x32xf32>
    %138 = arith.truncf %14 : vector<16x32xf32> to vector<16x32xbf16>
    %cst_42 = arith.constant dense<0.000000e+00> : vector<16x32xf32>
    %139 = tpu.matmul %138, %130, %cst_42 {dimension_numbers = #tpu.dot_dimension_numbers<[1], [0], [0], [1], [0, 0, 1, 1], [], []>} : vector<16x32xbf16>, vector<32x32xbf16>, vector<16x32xf32> -> vector<16x32xf32>
    %140 = vector.broadcast %131 : vector<1x32xf32> to vector<16x32xf32>
    %141 = arith.addf %139, %140 : vector<16x32xf32>
    %cst_43 = arith.constant 0.353553385 : f32
    %142 = vector.broadcast %cst_43 : f32 to vector<16x32xf32>
    %143 = arith.mulf %141, %142 : vector<16x32xf32>
    %144 = arith.truncf %129 : vector<8x32xf32> to vector<8x32xbf16>
    %cst_44 = arith.constant dense<0.000000e+00> : vector<8x32xf32>
    %145 = tpu.matmul %144, %132, %cst_44 {dimension_numbers = #tpu.dot_dimension_numbers<[1], [0], [0], [1], [0, 0, 1, 1], [], []>} : vector<8x32xbf16>, vector<32x32xbf16>, vector<8x32xf32> -> vector<8x32xf32>
    %146 = vector.broadcast %133 : vector<1x32xf32> to vector<8x32xf32>
    %147 = arith.addf %145, %146 : vector<8x32xf32>
    %148 = arith.truncf %128 : vector<8x32xf32> to vector<8x32xbf16>
    %cst_45 = arith.constant dense<0.000000e+00> : vector<8x32xf32>
    %149 = tpu.matmul %148, %134, %cst_45 {dimension_numbers = #tpu.dot_dimension_numbers<[1], [0], [0], [1], [0, 0, 1, 1], [], []>} : vector<8x32xbf16>, vector<32x32xbf16>, vector<8x32xf32> -> vector<8x32xf32>
    %150 = vector.broadcast %135 : vector<1x32xf32> to vector<8x32xf32>
    %151 = arith.addf %149, %150 : vector<8x32xf32>
    %152 = vector.shape_cast %143 : vector<16x32xf32> to vector<16x4x8xf32>
    %153 = tpu.transpose %152, [1, 0, 2] : vector<16x4x8xf32> -> vector<4x16x8xf32>
    %154 = arith.truncf %153 : vector<4x16x8xf32> to vector<4x16x8xbf16>
    %155 = vector.shape_cast %147 : vector<8x32xf32> to vector<8x4x8xf32>
    %156 = tpu.transpose %155, [1, 0, 2] : vector<8x4x8xf32> -> vector<4x8x8xf32>
    %157 = arith.truncf %156 : vector<4x8x8xf32> to vector<4x8x8xbf16>
    %158 = vector.shape_cast %151 : vector<8x32xf32> to vector<8x4x8xf32>
    %159 = tpu.transpose %158, [1, 0, 2] : vector<8x4x8xf32> -> vector<4x8x8xf32>
    %160 = arith.truncf %159 : vector<4x8x8xf32> to vector<4x8x8xbf16>
    %cst_46 = arith.constant dense<0.000000e+00> : vector<4x16x8xf32>
    %161 = tpu.matmul %154, %157, %cst_46 {dimension_numbers = #tpu.dot_dimension_numbers<[2], [2], [1], [1], [0, 0, 0, 1, 1, 1], [0], [0]>} : vector<4x16x8xbf16>, vector<4x8x8xbf16>, vector<4x16x8xf32> -> vector<4x16x8xf32>
    %cst_47 = arith.constant dense<0xFF800000> : vector<4x16xf32>
    %162 = vector.multi_reduction <maximumf>, %161, %cst_47 [2] : vector<4x16x8xf32> to vector<4x16xf32>
    %163 = vector.shape_cast %162 : vector<4x16xf32> to vector<4x16x1xf32>
    %164 = vector.broadcast %163 : vector<4x16x1xf32> to vector<4x16x8xf32>
    %165 = arith.subf %161, %164 : vector<4x16x8xf32>
    %166 = math.exp %165 : vector<4x16x8xf32>
    %cst_48 = arith.constant dense<0.000000e+00> : vector<4x16xf32>
    %167 = vector.multi_reduction <add>, %166, %cst_48 [2] : vector<4x16x8xf32> to vector<4x16xf32>
    %168 = vector.shape_cast %167 : vector<4x16xf32> to vector<4x16x1xf32>
    %169 = tpu.reciprocal %168 {approx = true} : vector<4x16x1xf32> -> vector<4x16x1xf32>
    %170 = vector.broadcast %169 : vector<4x16x1xf32> to vector<4x16x8xf32>
    %171 = arith.mulf %166, %170 : vector<4x16x8xf32>
    %172 = arith.truncf %171 : vector<4x16x8xf32> to vector<4x16x8xbf16>
    %cst_49 = arith.constant dense<0.000000e+00> : vector<4x16x8xf32>
    %173 = tpu.matmul %172, %160, %cst_49 {dimension_numbers = #tpu.dot_dimension_numbers<[2], [1], [1], [2], [0, 0, 0, 1, 1, 2], [0], [0]>} : vector<4x16x8xbf16>, vector<4x8x8xbf16>, vector<4x16x8xf32> -> vector<4x16x8xf32>
    %174 = tpu.transpose %173, [1, 0, 2] : vector<4x16x8xf32> -> vector<16x4x8xf32>
    %175 = vector.shape_cast %174 : vector<16x4x8xf32> to vector<16x32xf32>
    %176 = arith.truncf %175 : vector<16x32xf32> to vector<16x32xbf16>
    %cst_50 = arith.constant dense<0.000000e+00> : vector<16x32xf32>
    %177 = tpu.matmul %176, %136, %cst_50 {dimension_numbers = #tpu.dot_dimension_numbers<[1], [0], [0], [1], [0, 0, 1, 1], [], []>} : vector<16x32xbf16>, vector<32x32xbf16>, vector<16x32xf32> -> vector<16x32xf32>
    %178 = vector.broadcast %137 : vector<1x32xf32> to vector<16x32xf32>
    %179 = arith.addf %177, %178 : vector<16x32xf32>
    %180 = arith.addf %8, %179 : vector<16x32xf32>
    %181 = vector.extract_strided_slice %3 {offsets = [13, 0], sizes = [1, 32], strides = [1, 1]} : vector<18x32xf32> to vector<1x32xf32>
    %182 = vector.extract_strided_slice %3 {offsets = [14, 0], sizes = [1, 32], strides = [1, 1]} : vector<18x32xf32> to vector<1x32xf32>
    %cst_51 = arith.constant dense<0.000000e+00> : vector<16xf32>
    %183 = vector.multi_reduction <add>, %180, %cst_51 [1] : vector<16x32xf32> to vector<16xf32>
    %184 = vector.shape_cast %183 : vector<16xf32> to vector<16x1xf32>
    %cst_52 = arith.constant 3.200000e+01 : f32
    %185 = vector.broadcast %cst_52 : f32 to vector<16x1xf32>
    %186 = arith.divf %184, %185 : vector<16x1xf32>
    %187 = vector.broadcast %186 : vector<16x1xf32> to vector<16x32xf32>
    %188 = arith.subf %180, %187 : vector<16x32xf32>
    %189 = arith.mulf %188, %188 : vector<16x32xf32>
    %cst_53 = arith.constant dense<0.000000e+00> : vector<16xf32>
    %190 = vector.multi_reduction <add>, %189, %cst_53 [1] : vector<16x32xf32> to vector<16xf32>
    %191 = vector.shape_cast %190 : vector<16xf32> to vector<16x1xf32>
    %cst_54 = arith.constant 3.200000e+01 : f32
    %192 = vector.broadcast %cst_54 : f32 to vector<16x1xf32>
    %193 = arith.divf %191, %192 : vector<16x1xf32>
    %194 = vector.broadcast %186 : vector<16x1xf32> to vector<16x32xf32>
    %195 = arith.subf %180, %194 : vector<16x32xf32>
    %cst_55 = arith.constant 9.99999974E-6 : f32
    %196 = vector.broadcast %cst_55 : f32 to vector<16x1xf32>
    %197 = arith.addf %193, %196 : vector<16x1xf32>
    %198 = math.rsqrt %197 : vector<16x1xf32>
    %199 = vector.broadcast %198 : vector<16x1xf32> to vector<16x32xf32>
    %200 = arith.mulf %195, %199 : vector<16x32xf32>
    %201 = vector.broadcast %181 : vector<1x32xf32> to vector<16x32xf32>
    %202 = arith.mulf %200, %201 : vector<16x32xf32>
    %203 = vector.broadcast %182 : vector<1x32xf32> to vector<16x32xf32>
    %204 = arith.addf %202, %203 : vector<16x32xf32>
    %205 = vector.extract_strided_slice %1 {offsets = [0, 64], sizes = [32, 64], strides = [1, 1]} : vector<32x128xbf16> to vector<32x64xbf16>
    %206 = vector.extract_strided_slice %4 {offsets = [1, 0], sizes = [1, 64], strides = [1, 1]} : vector<2x64xf32> to vector<1x64xf32>
    %207 = arith.truncf %204 : vector<16x32xf32> to vector<16x32xbf16>
    %cst_56 = arith.constant dense<0.000000e+00> : vector<16x64xf32>
    %208 = tpu.matmul %207, %205, %cst_56 {dimension_numbers = #tpu.dot_dimension_numbers<[1], [0], [0], [1], [0, 0, 1, 1], [], []>} : vector<16x32xbf16>, vector<32x64xbf16>, vector<16x64xf32> -> vector<16x64xf32>
    %209 = vector.broadcast %206 : vector<1x64xf32> to vector<16x64xf32>
    %210 = arith.addf %208, %209 : vector<16x64xf32>
    %cst_57 = arith.constant 0.000000e+00 : f32
    %211 = vector.broadcast %cst_57 : f32 to vector<16x64xf32>
    %212 = arith.maximumf %210, %211 : vector<16x64xf32>
    %213 = vector.extract_strided_slice %2 {offsets = [0, 32], sizes = [64, 32], strides = [1, 1]} : vector<64x64xbf16> to vector<64x32xbf16>
    %214 = vector.extract_strided_slice %3 {offsets = [15, 0], sizes = [1, 32], strides = [1, 1]} : vector<18x32xf32> to vector<1x32xf32>
    %215 = arith.truncf %212 : vector<16x64xf32> to vector<16x64xbf16>
    %cst_58 = arith.constant dense<0.000000e+00> : vector<16x32xf32>
    %216 = tpu.matmul %215, %213, %cst_58 {dimension_numbers = #tpu.dot_dimension_numbers<[1], [0], [0], [1], [0, 0, 1, 1], [], []>} : vector<16x64xbf16>, vector<64x32xbf16>, vector<16x32xf32> -> vector<16x32xf32>
    %217 = vector.broadcast %214 : vector<1x32xf32> to vector<16x32xf32>
    %218 = arith.addf %216, %217 : vector<16x32xf32>
    %219 = arith.addf %204, %218 : vector<16x32xf32>
    %220 = vector.extract_strided_slice %3 {offsets = [16, 0], sizes = [1, 32], strides = [1, 1]} : vector<18x32xf32> to vector<1x32xf32>
    %221 = vector.extract_strided_slice %3 {offsets = [17, 0], sizes = [1, 32], strides = [1, 1]} : vector<18x32xf32> to vector<1x32xf32>
    %cst_59 = arith.constant dense<0.000000e+00> : vector<16xf32>
    %222 = vector.multi_reduction <add>, %219, %cst_59 [1] : vector<16x32xf32> to vector<16xf32>
    %223 = vector.shape_cast %222 : vector<16xf32> to vector<16x1xf32>
    %cst_60 = arith.constant 3.200000e+01 : f32
    %224 = vector.broadcast %cst_60 : f32 to vector<16x1xf32>
    %225 = arith.divf %223, %224 : vector<16x1xf32>
    %226 = vector.broadcast %225 : vector<16x1xf32> to vector<16x32xf32>
    %227 = arith.subf %219, %226 : vector<16x32xf32>
    %228 = arith.mulf %227, %227 : vector<16x32xf32>
    %cst_61 = arith.constant dense<0.000000e+00> : vector<16xf32>
    %229 = vector.multi_reduction <add>, %228, %cst_61 [1] : vector<16x32xf32> to vector<16xf32>
    %230 = vector.shape_cast %229 : vector<16xf32> to vector<16x1xf32>
    %cst_62 = arith.constant 3.200000e+01 : f32
    %231 = vector.broadcast %cst_62 : f32 to vector<16x1xf32>
    %232 = arith.divf %230, %231 : vector<16x1xf32>
    %233 = vector.broadcast %225 : vector<16x1xf32> to vector<16x32xf32>
    %234 = arith.subf %219, %233 : vector<16x32xf32>
    %cst_63 = arith.constant 9.99999974E-6 : f32
    %235 = vector.broadcast %cst_63 : f32 to vector<16x1xf32>
    %236 = arith.addf %232, %235 : vector<16x1xf32>
    %237 = math.rsqrt %236 : vector<16x1xf32>
    %238 = vector.broadcast %237 : vector<16x1xf32> to vector<16x32xf32>
    %239 = arith.mulf %234, %238 : vector<16x32xf32>
    %240 = vector.broadcast %220 : vector<1x32xf32> to vector<16x32xf32>
    %241 = arith.mulf %239, %240 : vector<16x32xf32>
    %242 = vector.broadcast %221 : vector<1x32xf32> to vector<16x32xf32>
    %243 = arith.addf %241, %242 : vector<16x32xf32>
    %c0_64 = arith.constant 0 : index
    %c0_65 = arith.constant 0 : index
    %c0_66 = arith.constant 0 : index
    %244 = vector.load %arg10[%c0_64, %c0_65, %c0_66] : memref<1x8x32xf32, #tpu.memory_space<vmem>>, vector<1x8x32xf32>
    %245 = vector.shape_cast %244 : vector<1x8x32xf32> to vector<8x32xf32>
    %246 = vector.shape_cast %128 : vector<8x32xf32> to vector<1x8x32xf32>
    tpu.vector_store %arg10[%c0_64, %c0_65, %c0_66], %246 {strides = array<i32>} : memref<1x8x32xf32, #tpu.memory_space<vmem>>, vector<1x8x32xf32>,
    %c0_67 = arith.constant 0 : index
    %c0_68 = arith.constant 0 : index
    %c0_69 = arith.constant 0 : index
    %247 = vector.load %arg11[%c0_67, %c0_68, %c0_69] : memref<1x16x32xf32, #tpu.memory_space<vmem>>, vector<1x16x32xf32>
    %248 = vector.shape_cast %247 : vector<1x16x32xf32> to vector<16x32xf32>
    %249 = vector.shape_cast %243 : vector<16x32xf32> to vector<1x16x32xf32>
    tpu.vector_store %arg11[%c0_67, %c0_68, %c0_69], %249 {strides = array<i32>} : memref<1x16x32xf32, #tpu.memory_space<vmem>>, vector<1x16x32xf32>,
    return
  }
  func.func @transform_0(%arg0: i32) -> (i32, i32, i32) {
    %c0_i32 = arith.constant 0 : i32
    %c0_i32_0 = arith.constant 0 : i32
    %c0_i32_1 = arith.constant 0 : i32
    return %arg0, %c0_i32, %c0_i32_0 : i32, i32, i32
  }
  func.func @transform_1(%arg0: i32) -> (i32, i32, i32) {
    %c0_i32 = arith.constant 0 : i32
    %c0_i32_0 = arith.constant 0 : i32
    %c0_i32_1 = arith.constant 0 : i32
    return %arg0, %c0_i32, %c0_i32_0 : i32, i32, i32
  }
  func.func @transform_2(%arg0: i32) -> (i32, i32, i32) {
    %c0_i32 = arith.constant 0 : i32
    %c0_i32_0 = arith.constant 0 : i32
    %c0_i32_1 = arith.constant 0 : i32
    return %arg0, %c0_i32, %c0_i32_0 : i32, i32, i32
  }
  func.func @transform_3(%arg0: i32) -> (i32, i32, i32) {
    %c0_i32 = arith.constant 0 : i32
    %c0_i32_0 = arith.constant 0 : i32
    %c0_i32_1 = arith.constant 0 : i32
    return %arg0, %c0_i32, %c0_i32_0 : i32, i32, i32
  }
  func.func @transform_4(%arg0: i32) -> (i32, i32) {
    %c0_i32 = arith.constant 0 : i32
    %c0_i32_0 = arith.constant 0 : i32
    %c0_i32_1 = arith.constant 0 : i32
    return %c0_i32, %c0_i32_0 : i32, i32
  }
  func.func @transform_5(%arg0: i32) -> (i32, i32) {
    %c0_i32 = arith.constant 0 : i32
    %c0_i32_0 = arith.constant 0 : i32
    %c0_i32_1 = arith.constant 0 : i32
    return %c0_i32, %c0_i32_0 : i32, i32
  }
  func.func @transform_6(%arg0: i32) -> (i32, i32) {
    %c0_i32 = arith.constant 0 : i32
    %c0_i32_0 = arith.constant 0 : i32
    %c0_i32_1 = arith.constant 0 : i32
    return %c0_i32, %c0_i32_0 : i32, i32
  }
  func.func @transform_7(%arg0: i32) -> (i32, i32) {
    %c0_i32 = arith.constant 0 : i32
    %c0_i32_0 = arith.constant 0 : i32
    %c0_i32_1 = arith.constant 0 : i32
    return %c0_i32, %c0_i32_0 : i32, i32
  }
  func.func @transform_8(%arg0: i32) -> (i32, i32) {
    %c0_i32 = arith.constant 0 : i32
    %c0_i32_0 = arith.constant 0 : i32
    %c0_i32_1 = arith.constant 0 : i32
    return %c0_i32, %c0_i32_0 : i32, i32
  }
  func.func @transform_9(%arg0: i32) -> (i32, i32, i32) {
    %c0_i32 = arith.constant 0 : i32
    %c0_i32_0 = arith.constant 0 : i32
    %c0_i32_1 = arith.constant 0 : i32
    return %arg0, %c0_i32, %c0_i32_0 : i32, i32, i32
  }
  func.func @transform_10(%arg0: i32) -> (i32, i32, i32) {
    %c0_i32 = arith.constant 0 : i32
    %c0_i32_0 = arith.constant 0 : i32
    %c0_i32_1 = arith.constant 0 : i32
    return %arg0, %c0_i32, %c0_i32_0 : i32, i32, i32
  }
}

</mosaic_0001>

<llo_original>
// kernel: tpu_custom_call.1
$region0: #{tpu_custom_call.1}
  #allocation0 [shape = 'u32[]', space=smem, size = 0x4, offset = 0x4, fixed_abs, tag = 'smem constant byte address 0x4 - core index']
  #allocation1 [shape = 'u32[144,128]{1,0:T(1,128)}', space=vmem, size = 0x12000, scoped, tag = 'internal scratch']
  %s0 = inlined_call_operand.hbm [shape: f32[2,8,32], index: 0, kind: input, shape index: {}]
  %s1 = inlined_call_operand.hbm [shape: f32[2,16,32], index: 1, kind: input, shape index: {}]
  %s2 = inlined_call_operand.hbm [shape: f32[2,8,32], index: 2, kind: input, shape index: {}]
  %s3 = inlined_call_operand.hbm [shape: f32[2,16,32], index: 3, kind: input, shape index: {}]
  %s4 = inlined_call_operand.hbm [shape: bf16[32,256], index: 4, kind: input, shape index: {}]
  %s5 = inlined_call_operand.hbm [shape: bf16[32,128], index: 5, kind: input, shape index: {}]
  %s6 = inlined_call_operand.hbm [shape: bf16[64,64], index: 6, kind: input, shape index: {}]
  %s7 = inlined_call_operand.vmem [shape: f32[18,32], index: 7, kind: input, shape index: {}]
  %s8 = inlined_call_operand.vmem [shape: f32[2,64], index: 8, kind: input, shape index: {}]
  %s9 = inlined_call_operand.hbm [shape: f32[2,8,32], index: 9, kind: output, shape index: {0}]
  %s10 = inlined_call_operand.hbm [shape: f32[2,16,32], index: 10, kind: output, shape index: {1}]
  %11 = xla_tuple %s9, %s10
  %s12 = sld [smem:[#allocation0]]
  $region105: #{tpu_custom_call.1} parent=0
    _
  %s14 = ssub.s32 1, %s12
  %s15 = scalar_select 0, %s14, %s12
  $region1: #{tpu_custom_call.1} parent=0
    #allocation2 [shape = 'u8[8192]{0}', space=vmem, size = 0x2000, scoped, tag = 'input window, operand 0']
    #allocation3 [shape = 's32[2]{0}', space=sflag, size = 0x8, scoped, tag = 'scoped memory for tpu_custom_call.1']
    #allocation4 [shape = 's32[2]{0}', space=sflag, size = 0x8, scoped, tag = 'scoped memory for tpu_custom_call.1']
    #allocation5 [shape = 'u8[16384]{0}', space=vmem, size = 0x4000, scoped, tag = 'input window, operand 1']
    #allocation6 [shape = 's32[2]{0}', space=sflag, size = 0x8, scoped, tag = 'scoped memory for tpu_custom_call.1']
    #allocation7 [shape = 'u8[8192]{0}', space=vmem, size = 0x2000, scoped, tag = 'input window, operand 2']
    #allocation8 [shape = 'u8[16384]{0}', space=vmem, size = 0x4000, scoped, tag = 'input window, operand 3']
    #allocation9 [shape = 's32[2]{0}', space=sflag, size = 0x8, scoped, tag = 'scoped memory for tpu_custom_call.1']
    #allocation10 [shape = 'u8[16384]{0}', space=vmem, size = 0x4000, scoped, tag = 'input window, operand 4, single buffered']
    #allocation11 [shape = 'u8[8192]{0}', space=vmem, size = 0x2000, scoped, tag = 'input window, operand 5, single buffered']
    #allocation12 [shape = 's32[1]{0}', space=sflag, size = 0x4, scoped, tag = 'scoped memory for tpu_custom_call.1']
    #allocation13 [shape = 'u8[16384]{0}', space=vmem, size = 0x4000, scoped, tag = 'input window, operand 6, single buffered']
    #allocation14 [shape = 'u8[8192]{0}', space=vmem, size = 0x2000, scoped, tag = 'output window, operand 0']
    #allocation15 [shape = 'u8[16384]{0}', space=vmem, size = 0x4000, scoped, tag = 'output window, operand 1']
    #allocation16 [shape = 's32[2]{0}', space=sflag, size = 0x8, scoped, tag = 'scoped memory for tpu_custom_call.1']
    %16 = vsyncpa [#allocation3], 0
    %s17 = scalar_lea.sflag [#allocation3], 1
    %18 = vsyncpa %s17, 0
    %19 = vsyncpa [#allocation6], 0
    %s20 = scalar_lea.sflag [#allocation6], 1
    %21 = vsyncpa %s20, 0
    %22 = vsyncpa [#allocation9], 0
    %s23 = scalar_lea.sflag [#allocation9], 1
    %24 = vsyncpa %s23, 0
    %25 = vsyncpa [#allocation12], 0
    %26 = vsyncpa [#allocation4], 0
    %s27 = scalar_lea.sflag [#allocation4], 1
    %28 = vsyncpa %s27, 0
    %29 = vsyncpa [#allocation16], 0
    %s30 = scalar_lea.sflag [#allocation16], 1
    %31 = vsyncpa %s30, 0
    loop: start=0, step=1, limit=4
    $region2: #{tpu_custom_call.1} parent=1 // loop_pre_header
      _
    $region3: #{tpu_custom_call.1} parent=1 // loop_header
      %s33 = sphi 0, %s37
      %p34 = scmp.ge.s32.totalorder %s33, 4
      %s43 = sphi 0, %s45
      %s46 = sphi 0, %s43
      %s47 = sphi 0, %s46
      %s63 = sphi 0, %s47
      %s69 = sphi 0, %s71
      %s72 = sphi 0, %s69
      %s73 = sphi 0, %s72
      %s89 = sphi 0, %s73
      %s95 = sphi 0, %s97
      %s98 = sphi 0, %s95
      %s99 = sphi 0, %s98
      %s115 = sphi 0, %s99
      %s121 = sphi 0, %s123
      %s124 = sphi 0, %s121
      %s125 = sphi 0, %s124
      %s141 = sphi 0, %s125
      %s145 = sphi 0, %s145
      %s147 = sphi 0, %s145
      %s148 = sphi 0, %s147
      %s162 = sphi 0, %s148
      %s166 = sphi 0, %s166
      %s168 = sphi 0, %s166
      %s169 = sphi 0, %s168
      %s183 = sphi 0, %s169
      %s187 = sphi 0, %s187
      %s189 = sphi 0, %s187
      %s190 = sphi 0, %s189
      %s204 = sphi 0, %s190
      %s208 = sphi 0, %s208
      %s210 = sphi 0, %s208
      %s211 = sphi 0, %s210
      %s225 = sphi 0, %s211
      %s229 = sphi 0, %s229
      %s231 = sphi 0, %s229
      %s232 = sphi 0, %s231
      %s246 = sphi 0, %s232
      %s252 = sphi 0, %s254
      %s255 = sphi 0, %s252
      %s256 = sphi 0, %s255
      %s272 = sphi 0, %s256
      %s278 = sphi 0, %s280
      %s281 = sphi 0, %s278
      %s282 = sphi 0, %s281
      %s298 = sphi 0, %s282
    $region4: #{tpu_custom_call.1} parent=1 // loop_header_branch
      %36 = sbr.rel (%p34) target = $region8
    $region5: #{tpu_custom_call.1} parent=1 // loop_body
      %s38 = ssub.s32 %s33, 1
      %s39 = ssub.s32 %s33, 2
      %s40 = sadd.s32 %s33, 1
      %s41 = ssub.s32 %s33, %s40
      %p42 = scmp.eq.s32.totalorder %s41, 0
      %s44 = sadd.s32 %s43, 1
      %s45 = scalar_select %p42, %s43, %s44
      %p48 = pneg %p42
      %p49 = scmp.eq.s32.totalorder %s33, 1
      %p50 = por %p48, %p49
      %p51 = scmp.ne.s32.totalorder %s43, %s46
      %p52 = scmp.eq.s32.totalorder %s33, 0
      %p53 = por %p51, %p52
      %p54 = scmp.ne.s32.totalorder %s43, %s46
      %p55 = scmp.eq.s32.totalorder %s38, 1
      %p56 = por %p54, %p55
      %p57 = scmp.ne.s32.totalorder %s46, %s47
      %p58 = scmp.eq.s32.totalorder %s38, 0
      %p59 = por %p57, %p58
      %p60 = scmp.ne.s32.totalorder %s46, %s47
      %p61 = scmp.eq.s32.totalorder %s39, 1
      %p62 = por %p60, %p61
      %p64 = scmp.ne.s32.totalorder %s47, %s63
      %p65 = scmp.eq.s32.totalorder %s39, 0
      %p66 = por %p64, %p65
      %s67 = ssub.s32 %s33, %s40
      %p68 = scmp.eq.s32.totalorder %s67, 0
      %s70 = sadd.s32 %s69, 1
      %s71 = scalar_select %p68, %s69, %s70
      %p74 = pneg %p68
      %p75 = scmp.eq.s32.totalorder %s33, 1
      %p76 = por %p74, %p75
      %p77 = scmp.ne.s32.totalorder %s69, %s72
      %p78 = scmp.eq.s32.totalorder %s33, 0
      %p79 = por %p77, %p78
      %p80 = scmp.ne.s32.totalorder %s69, %s72
      %p81 = scmp.eq.s32.totalorder %s38, 1
      %p82 = por %p80, %p81
      %p83 = scmp.ne.s32.totalorder %s72, %s73
      %p84 = scmp.eq.s32.totalorder %s38, 0
      %p85 = por %p83, %p84
      %p86 = scmp.ne.s32.totalorder %s72, %s73
      %p87 = scmp.eq.s32.totalorder %s39, 1
      %p88 = por %p86, %p87
      %p90 = scmp.ne.s32.totalorder %s73, %s89
      %p91 = scmp.eq.s32.totalorder %s39, 0
      %p92 = por %p90, %p91
      %s93 = ssub.s32 %s33, %s40
      %p94 = scmp.eq.s32.totalorder %s93, 0
      %s96 = sadd.s32 %s95, 1
      %s97 = scalar_select %p94, %s95, %s96
      %p100 = pneg %p94
      %p101 = scmp.eq.s32.totalorder %s33, 1
      %p102 = por %p100, %p101
      %p103 = scmp.ne.s32.totalorder %s95, %s98
      %p104 = scmp.eq.s32.totalorder %s33, 0
      %p105 = por %p103, %p104
      %p106 = scmp.ne.s32.totalorder %s95, %s98
      %p107 = scmp.eq.s32.totalorder %s38, 1
      %p108 = por %p106, %p107
      %p109 = scmp.ne.s32.totalorder %s98, %s99
      %p110 = scmp.eq.s32.totalorder %s38, 0
      %p111 = por %p109, %p110
      %p112 = scmp.ne.s32.totalorder %s98, %s99
      %p113 = scmp.eq.s32.totalorder %s39, 1
      %p114 = por %p112, %p113
      %p116 = scmp.ne.s32.totalorder %s99, %s115
      %p117 = scmp.eq.s32.totalorder %s39, 0
      %p118 = por %p116, %p117
      %s119 = ssub.s32 %s33, %s40
      %p120 = scmp.eq.s32.totalorder %s119, 0
      %s122 = sadd.s32 %s121, 1
      %s123 = scalar_select %p120, %s121, %s122
      %p126 = pneg %p120
      %p127 = scmp.eq.s32.totalorder %s33, 1
      %p128 = por %p126, %p127
      %p129 = scmp.ne.s32.totalorder %s121, %s124
      %p130 = scmp.eq.s32.totalorder %s33, 0
      %p131 = por %p129, %p130
      %p132 = scmp.ne.s32.totalorder %s121, %s124
      %p133 = scmp.eq.s32.totalorder %s38, 1
      %p134 = por %p132, %p133
      %p135 = scmp.ne.s32.totalorder %s124, %s125
      %p136 = scmp.eq.s32.totalorder %s38, 0
      %p137 = por %p135, %p136
      %p138 = scmp.ne.s32.totalorder %s124, %s125
      %p139 = scmp.eq.s32.totalorder %s39, 1
      %p140 = por %p138, %p139
      %p142 = scmp.ne.s32.totalorder %s125, %s141
      %p143 = scmp.eq.s32.totalorder %s39, 0
      %p144 = por %p142, %p143
      %s146 = sadd.s32 %s145, 1
      %p149 = scmp.eq.s32.totalorder %s33, 1
      %p150 = scmp.ne.s32.totalorder %s145, %s147
      %p151 = scmp.eq.s32.totalorder %s33, 0
      %p152 = por %p150, %p151
      %p153 = scmp.ne.s32.totalorder %s145, %s147
      %p154 = scmp.eq.s32.totalorder %s38, 1
      %p155 = por %p153, %p154
      %p156 = scmp.ne.s32.totalorder %s147, %s148
      %p157 = scmp.eq.s32.totalorder %s38, 0
      %p158 = por %p156, %p157
      %p159 = scmp.ne.s32.totalorder %s147, %s148
      %p160 = scmp.eq.s32.totalorder %s39, 1
      %p161 = por %p159, %p160
      %p163 = scmp.ne.s32.totalorder %s148, %s162
      %p164 = scmp.eq.s32.totalorder %s39, 0
      %p165 = por %p163, %p164
      %s167 = sadd.s32 %s166, 1
      %p170 = scmp.eq.s32.totalorder %s33, 1
      %p171 = scmp.ne.s32.totalorder %s166, %s168
      %p172 = scmp.eq.s32.totalorder %s33, 0
      %p173 = por %p171, %p172
      %p174 = scmp.ne.s32.totalorder %s166, %s168
      %p175 = scmp.eq.s32.totalorder %s38, 1
      %p176 = por %p174, %p175
      %p177 = scmp.ne.s32.totalorder %s168, %s169
      %p178 = scmp.eq.s32.totalorder %s38, 0
      %p179 = por %p177, %p178
      %p180 = scmp.ne.s32.totalorder %s168, %s169
      %p181 = scmp.eq.s32.totalorder %s39, 1
      %p182 = por %p180, %p181
      %p184 = scmp.ne.s32.totalorder %s169, %s183
      %p185 = scmp.eq.s32.totalorder %s39, 0
      %p186 = por %p184, %p185
      %s188 = sadd.s32 %s187, 1
      %p191 = scmp.eq.s32.totalorder %s33, 1
      %p192 = scmp.ne.s32.totalorder %s187, %s189
      %p193 = scmp.eq.s32.totalorder %s33, 0
      %p194 = por %p192, %p193
      %p195 = scmp.ne.s32.totalorder %s187, %s189
      %p196 = scmp.eq.s32.totalorder %s38, 1
      %p197 = por %p195, %p196
      %p198 = scmp.ne.s32.totalorder %s189, %s190
      %p199 = scmp.eq.s32.totalorder %s38, 0
      %p200 = por %p198, %p199
      %p201 = scmp.ne.s32.totalorder %s189, %s190
      %p202 = scmp.eq.s32.totalorder %s39, 1
      %p203 = por %p201, %p202
      %p205 = scmp.ne.s32.totalorder %s190, %s204
      %p206 = scmp.eq.s32.totalorder %s39, 0
      %p207 = por %p205, %p206
      %s209 = sadd.s32 %s208, 1
      %p212 = scmp.eq.s32.totalorder %s33, 1
      %p213 = scmp.ne.s32.totalorder %s208, %s210
      %p214 = scmp.eq.s32.totalorder %s33, 0
      %p215 = por %p213, %p214
      %p216 = scmp.ne.s32.totalorder %s208, %s210
      %p217 = scmp.eq.s32.totalorder %s38, 1
      %p218 = por %p216, %p217
      %p219 = scmp.ne.s32.totalorder %s210, %s211
      %p220 = scmp.eq.s32.totalorder %s38, 0
      %p221 = por %p219, %p220
      %p222 = scmp.ne.s32.totalorder %s210, %s211
      %p223 = scmp.eq.s32.totalorder %s39, 1
      %p224 = por %p222, %p223
      %p226 = scmp.ne.s32.totalorder %s211, %s225
      %p227 = scmp.eq.s32.totalorder %s39, 0
      %p228 = por %p226, %p227
      %s230 = sadd.s32 %s229, 1
      %p233 = scmp.eq.s32.totalorder %s33, 1
      %p234 = scmp.ne.s32.totalorder %s229, %s231
      %p235 = scmp.eq.s32.totalorder %s33, 0
      %p236 = por %p234, %p235
      %p237 = scmp.ne.s32.totalorder %s229, %s231
      %p238 = scmp.eq.s32.totalorder %s38, 1
      %p239 = por %p237, %p238
      %p240 = scmp.ne.s32.totalorder %s231, %s232
      %p241 = scmp.eq.s32.totalorder %s38, 0
      %p242 = por %p240, %p241
      %p243 = scmp.ne.s32.totalorder %s231, %s232
      %p244 = scmp.eq.s32.totalorder %s39, 1
      %p245 = por %p243, %p244
      %p247 = scmp.ne.s32.totalorder %s232, %s246
      %p248 = scmp.eq.s32.totalorder %s39, 0
      %p249 = por %p247, %p248
      %s250 = ssub.s32 %s33, %s40
      %p251 = scmp.eq.s32.totalorder %s250, 0
      %s253 = sadd.s32 %s252, 1
      %s254 = scalar_select %p251, %s252, %s253
      %p257 = pneg %p251
      %p258 = scmp.eq.s32.totalorder %s33, 1
      %p259 = por %p257, %p258
      %p260 = scmp.ne.s32.totalorder %s252, %s255
      %p261 = scmp.eq.s32.totalorder %s33, 0
      %p262 = por %p260, %p261
      %p263 = scmp.ne.s32.totalorder %s252, %s255
      %p264 = scmp.eq.s32.totalorder %s38, 1
      %p265 = por %p263, %p264
      %p266 = scmp.ne.s32.totalorder %s255, %s256
      %p267 = scmp.eq.s32.totalorder %s38, 0
      %p268 = por %p266, %p267
      %p269 = scmp.ne.s32.totalorder %s255, %s256
      %p270 = scmp.eq.s32.totalorder %s39, 1
      %p271 = por %p269, %p270
      %p273 = scmp.ne.s32.totalorder %s256, %s272
      %p274 = scmp.eq.s32.totalorder %s39, 0
      %p275 = por %p273, %p274
      %s276 = ssub.s32 %s33, %s40
      %p277 = scmp.eq.s32.totalorder %s276, 0
      %s279 = sadd.s32 %s278, 1
      %s280 = scalar_select %p277, %s278, %s279
      %p283 = pneg %p277
      %p284 = scmp.eq.s32.totalorder %s33, 1
      %p285 = por %p283, %p284
      %p286 = scmp.ne.s32.totalorder %s278, %s281
      %p287 = scmp.eq.s32.totalorder %s33, 0
      %p288 = por %p286, %p287
      %p289 = scmp.ne.s32.totalorder %s278, %s281
      %p290 = scmp.eq.s32.totalorder %s38, 1
      %p291 = por %p289, %p290
      %p292 = scmp.ne.s32.totalorder %s281, %s282
      %p293 = scmp.eq.s32.totalorder %s38, 0
      %p294 = por %p292, %p293
      %p295 = scmp.ne.s32.totalorder %s281, %s282
      %p296 = scmp.eq.s32.totalorder %s39, 1
      %p297 = por %p295, %p296
      %p299 = scmp.ne.s32.totalorder %s282, %s298
      %p300 = scmp.eq.s32.totalorder %s39, 0
      %p301 = por %p299, %p300
      %p302 = scmp.le.s32.totalorder 1, %s33
      %p303 = scmp.lt.s32.totalorder %s33, 3
      %p304 = pnand %p302, %p303
      %p305 = pneg %p304
      // Predicated region
      $region9: #{tpu_custom_call.1} parent=5 // pred_check
        _
      $region10: #{tpu_custom_call.1} parent=5 // pred_check_branch
        %307 = sbr.rel (%p304) target = $region12
      $region11: #{tpu_custom_call.1} parent=5 // pred_region
        %s308 = ssub.s32 %s33, 1
        // Predicated region
        $region13: #{tpu_custom_call.1} parent=11 // pred_check
          %p309 = pneg %p158
        $region14: #{tpu_custom_call.1} parent=11 // pred_check_branch
          %311 = sbr.rel (%p309) target = $region16
        $region15: #{tpu_custom_call.1} parent=11 // pred_region
          %s313 = ssub.s32 512, 512
          %314 = vsyncadd [#allocation9], %s313
          %s315 = sshll.u32 [#allocation10], 4
          %s316 = int_to_ptr.vmem [resolvable:$true] %s315
          %321 = dma.hbm_to_vmem [thread:$0]  %s4, 512, %s316, [#allocation9], 128, 128, 8
        $region16: #{tpu_custom_call.1} parent=11 // pred_fallthru
          _
        // Predicated region
        $region17: #{tpu_custom_call.1} parent=11 // pred_check
          %p322 = pneg %p179
        $region18: #{tpu_custom_call.1} parent=11 // pred_check_branch
          %324 = sbr.rel (%p322) target = $region20
        $region19: #{tpu_custom_call.1} parent=11 // pred_region
          %s326 = ssub.s32 256, 256
          %327 = vsyncadd [#allocation12], %s326
          %s328 = sshll.u32 [#allocation11], 4
          %s329 = int_to_ptr.vmem [resolvable:$true] %s328
          %334 = dma.hbm_to_vmem [thread:$0]  %s5, 256, %s329, [#allocation12], 64, 64, 4
        $region20: #{tpu_custom_call.1} parent=11 // pred_fallthru
          _
        // Predicated region
        $region21: #{tpu_custom_call.1} parent=11 // pred_check
          %p335 = pneg %p200
        $region22: #{tpu_custom_call.1} parent=11 // pred_check_branch
          %337 = sbr.rel (%p335) target = $region24
        $region23: #{tpu_custom_call.1} parent=11 // pred_region
          %s339 = ssub.s32 512, 512
          %340 = vsyncadd [#allocation12], %s339
          %s341 = sshll.u32 [#allocation13], 4
          %s342 = int_to_ptr.vmem [resolvable:$true] %s341
          %347 = dma.hbm_to_vmem [thread:$0]  %s6, 512, %s342, [#allocation12], 64, 64, 4
        $region24: #{tpu_custom_call.1} parent=11 // pred_fallthru
          _
        // Predicated region
        $region25: #{tpu_custom_call.1} parent=11 // pred_check
          %p348 = pneg %p221
        $region26: #{tpu_custom_call.1} parent=11 // pred_check_branch
          %350 = sbr.rel (%p348) target = $region28
        $region27: #{tpu_custom_call.1} parent=11 // pred_region
          _
        $region28: #{tpu_custom_call.1} parent=11 // pred_fallthru
          _
        // Predicated region
        $region29: #{tpu_custom_call.1} parent=11 // pred_check
          %p351 = pneg %p242
        $region30: #{tpu_custom_call.1} parent=11 // pred_check_branch
          %353 = sbr.rel (%p351) target = $region32
        $region31: #{tpu_custom_call.1} parent=11 // pred_region
          _
        $region32: #{tpu_custom_call.1} parent=11 // pred_fallthru
          _
      $region12: #{tpu_custom_call.1} parent=5 // pred_fallthru
        _
      %p354 = scmp.lt.s32.totalorder %s33, 2
      // Predicated region
      $region33: #{tpu_custom_call.1} parent=5 // pred_check
        %p355 = pneg %p354
      $region34: #{tpu_custom_call.1} parent=5 // pred_check_branch
        %357 = sbr.rel (%p355) target = $region36
      $region35: #{tpu_custom_call.1} parent=5 // pred_region
        // Predicated region
        $region37: #{tpu_custom_call.1} parent=35 // pred_check
          %p358 = pneg %p53
        $region38: #{tpu_custom_call.1} parent=35 // pred_check_branch
          %360 = sbr.rel (%p358) target = $region40
        $region39: #{tpu_custom_call.1} parent=35 // pred_region
          %s361 = sand.u32 %s43, 1
          %s362 = scalar_lea.sflag [#allocation3], %s361
          %s363 = sand.u32 %s43, 1
          %s364 = smul.addr %s363, 8
          %s365 = scalar_lea.vmem [#allocation2], %s364
          %s367 = ssub.s32 128, 128
          %368 = vsyncadd %s362, %s367
          %s369 = smul.addr %s33, 128
          %s370 = scalar_lea.hbm %s0, %s369
          %s372 = sshll.u32 %s365, 4
          %s373 = int_to_ptr.vmem [resolvable:$true] %s372
          %375 = dma.hbm_to_vmem [thread:$0]  %s370, 128, %s373, %s362
        $region40: #{tpu_custom_call.1} parent=35 // pred_fallthru
          _
        // Predicated region
        $region41: #{tpu_custom_call.1} parent=35 // pred_check
          %p376 = pneg %p79
        $region42: #{tpu_custom_call.1} parent=35 // pred_check_branch
          %378 = sbr.rel (%p376) target = $region44
        $region43: #{tpu_custom_call.1} parent=35 // pred_region
          %s379 = sand.u32 %s33, 1
          %s380 = scalar_lea.sflag [#allocation6], %s379
          %s381 = sand.u32 %s69, 1
          %s382 = smul.addr %s381, 16
          %s383 = scalar_lea.vmem [#allocation5], %s382
          %s385 = ssub.s32 256, 256
          %386 = vsyncadd %s380, %s385
          %s387 = smul.addr %s33, 2
          %s388 = smul.addr %s387, 128
          %s389 = scalar_lea.hbm %s1, %s388
          %s390 = sshll.u32 %s383, 4
          %s391 = int_to_ptr.vmem [resolvable:$true] %s390
          %396 = dma.hbm_to_vmem [thread:$0]  %s389, 256, %s391, %s380, 128, 128, 8
        $region44: #{tpu_custom_call.1} parent=35 // pred_fallthru
          _
        // Predicated region
        $region45: #{tpu_custom_call.1} parent=35 // pred_check
          %p397 = pneg %p105
        $region46: #{tpu_custom_call.1} parent=35 // pred_check_branch
          %399 = sbr.rel (%p397) target = $region48
        $region47: #{tpu_custom_call.1} parent=35 // pred_region
          %s400 = sand.u32 %s33, 1
          %s401 = scalar_lea.sflag [#allocation6], %s400
          %s402 = sand.u32 %s95, 1
          %s403 = smul.addr %s402, 8
          %s404 = scalar_lea.vmem [#allocation7], %s403
          %s406 = ssub.s32 128, 128
          %407 = vsyncadd %s401, %s406
          %s408 = smul.addr %s33, 128
          %s409 = scalar_lea.hbm %s2, %s408
          %s411 = sshll.u32 %s404, 4
          %s412 = int_to_ptr.vmem [resolvable:$true] %s411
          %414 = dma.hbm_to_vmem [thread:$0]  %s409, 128, %s412, %s401
        $region48: #{tpu_custom_call.1} parent=35 // pred_fallthru
          _
        // Predicated region
        $region49: #{tpu_custom_call.1} parent=35 // pred_check
          %p415 = pneg %p131
        $region50: #{tpu_custom_call.1} parent=35 // pred_check_branch
          %417 = sbr.rel (%p415) target = $region52
        $region51: #{tpu_custom_call.1} parent=35 // pred_region
          %s418 = sand.u32 %s33, 1
          %s419 = scalar_lea.sflag [#allocation9], %s418
          %s420 = sand.u32 %s121, 1
          %s421 = smul.addr %s420, 16
          %s422 = scalar_lea.vmem [#allocation8], %s421
          %s424 = ssub.s32 256, 256
          %425 = vsyncadd %s419, %s424
          %s426 = smul.addr %s33, 2
          %s427 = smul.addr %s426, 128
          %s428 = scalar_lea.hbm %s3, %s427
          %s429 = sshll.u32 %s422, 4
          %s430 = int_to_ptr.vmem [resolvable:$true] %s429
          %435 = dma.hbm_to_vmem [thread:$0]  %s428, 256, %s430, %s419, 128, 128, 8
        $region52: #{tpu_custom_call.1} parent=35 // pred_fallthru
          _
      $region36: #{tpu_custom_call.1} parent=5 // pred_fallthru
        _
      %p436 = scmp.le.s32.totalorder 1, %s33
      %p437 = scmp.lt.s32.totalorder %s33, 3
      %p438 = pnand %p436, %p437
      %p439 = pneg %p438
      // Predicated region
      $region53: #{tpu_custom_call.1} parent=5 // pred_check
        _
      $region54: #{tpu_custom_call.1} parent=5 // pred_check_branch
        %441 = sbr.rel (%p438) target = $region56
      $region55: #{tpu_custom_call.1} parent=5 // pred_region
        %s442 = ssub.s32 %s33, 1
        %s443 = sand.u32 %s46, 1
        %s444 = scalar_lea.sflag [#allocation3], %s443
        %s445 = sand.u32 %s46, 1
        %s446 = smul.addr %s445, 8
        %s447 = scalar_lea.vmem [#allocation2], %s446
        // Predicated region
        $region57: #{tpu_custom_call.1} parent=55 // pred_check
          %p448 = pneg %p59
        $region58: #{tpu_custom_call.1} parent=55 // pred_check_branch
          %450 = sbr.rel (%p448) target = $region60
        $region59: #{tpu_custom_call.1} parent=55 // pred_region
          %451 = dma.done %s444, 128
        $region60: #{tpu_custom_call.1} parent=55 // pred_fallthru
          _
        %s452 = sand.u32 %s38, 1
        %s453 = scalar_lea.sflag [#allocation6], %s452
        %s454 = sand.u32 %s72, 1
        %s455 = smul.addr %s454, 16
        %s456 = scalar_lea.vmem [#allocation5], %s455
        // Predicated region
        $region61: #{tpu_custom_call.1} parent=55 // pred_check
          %p457 = pneg %p85
        $region62: #{tpu_custom_call.1} parent=55 // pred_check_branch
          %459 = sbr.rel (%p457) target = $region64
        $region63: #{tpu_custom_call.1} parent=55 // pred_region
          %460 = dma.done %s453, 256
        $region64: #{tpu_custom_call.1} parent=55 // pred_fallthru
          _
        %s461 = sand.u32 %s38, 1
        %s462 = scalar_lea.sflag [#allocation6], %s461
        %s463 = sand.u32 %s98, 1
        %s464 = smul.addr %s463, 8
        %s465 = scalar_lea.vmem [#allocation7], %s464
        // Predicated region
        $region65: #{tpu_custom_call.1} parent=55 // pred_check
          %p466 = pneg %p111
        $region66: #{tpu_custom_call.1} parent=55 // pred_check_branch
          %468 = sbr.rel (%p466) target = $region68
        $region67: #{tpu_custom_call.1} parent=55 // pred_region
          %469 = dma.done %s462, 128
        $region68: #{tpu_custom_call.1} parent=55 // pred_fallthru
          _
        %s470 = sand.u32 %s38, 1
        %s471 = scalar_lea.sflag [#allocation9], %s470
        %s472 = sand.u32 %s124, 1
        %s473 = smul.addr %s472, 16
        %s474 = scalar_lea.vmem [#allocation8], %s473
        // Predicated region
        $region69: #{tpu_custom_call.1} parent=55 // pred_check
          %p475 = pneg %p137
        $region70: #{tpu_custom_call.1} parent=55 // pred_check_branch
          %477 = sbr.rel (%p475) target = $region72
        $region71: #{tpu_custom_call.1} parent=55 // pred_region
          %478 = dma.done %s471, 256
        $region72: #{tpu_custom_call.1} parent=55 // pred_fallthru
          _
        // Predicated region
        $region73: #{tpu_custom_call.1} parent=55 // pred_check
          %p479 = pneg %p158
        $region74: #{tpu_custom_call.1} parent=55 // pred_check_branch
          %481 = sbr.rel (%p479) target = $region76
        $region75: #{tpu_custom_call.1} parent=55 // pred_region
          %482 = dma.done [#allocation9], 512
        $region76: #{tpu_custom_call.1} parent=55 // pred_fallthru
          _
        // Predicated region
        $region77: #{tpu_custom_call.1} parent=55 // pred_check
          %p483 = pneg %p179
        $region78: #{tpu_custom_call.1} parent=55 // pred_check_branch
          %485 = sbr.rel (%p483) target = $region80
        $region79: #{tpu_custom_call.1} parent=55 // pred_region
          %486 = dma.done [#allocation12], 256
        $region80: #{tpu_custom_call.1} parent=55 // pred_fallthru
          _
        // Predicated region
        $region81: #{tpu_custom_call.1} parent=55 // pred_check
          %p487 = pneg %p200
        $region82: #{tpu_custom_call.1} parent=55 // pred_check_branch
          %489 = sbr.rel (%p487) target = $region84
        $region83: #{tpu_custom_call.1} parent=55 // pred_region
          %490 = dma.done [#allocation12], 512
        $region84: #{tpu_custom_call.1} parent=55 // pred_fallthru
          _
        %s491 = sand.u32 %s46, 1
        %s492 = scalar_lea.sflag [#allocation3], %s491
        %s493 = sand.u32 %s46, 1
        %s494 = smul.addr %s493, 8
        %s495 = scalar_lea.vmem [#allocation2], %s494
        %p496 = pneg %p59
        %p497 = pneg %p56
        %s498 = sand.u32 %s38, 1
        %s499 = scalar_lea.sflag [#allocation6], %s498
        %s500 = sand.u32 %s72, 1
        %s501 = smul.addr %s500, 16
        %s502 = scalar_lea.vmem [#allocation5], %s501
        %p503 = pneg %p85
        %p504 = pneg %p82
        %s505 = sand.u32 %s38, 1
        %s506 = scalar_lea.sflag [#allocation6], %s505
        %s507 = sand.u32 %s98, 1
        %s508 = smul.addr %s507, 8
        %s509 = scalar_lea.vmem [#allocation7], %s508
        %p510 = pneg %p111
        %p511 = pneg %p108
        %s512 = sand.u32 %s38, 1
        %s513 = scalar_lea.sflag [#allocation9], %s512
        %s514 = sand.u32 %s124, 1
        %s515 = smul.addr %s514, 16
        %s516 = scalar_lea.vmem [#allocation8], %s515
        %p517 = pneg %p137
        %p518 = pneg %p134
        %p519 = pneg %p158
        %p520 = pneg %p155
        %p521 = pneg %p179
        %p522 = pneg %p176
        %p523 = pneg %p200
        %p524 = pneg %p197
        %p525 = pneg %p221
        %p526 = pneg %p218
        %p527 = pneg %p242
        %p528 = pneg %p239
        %p529 = pneg %p268
        %p530 = pneg %p265
        %s531 = sand.u32 %s255, 1
        %s532 = scalar_lea.sflag [#allocation4], %s531
        %s533 = sand.u32 %s255, 1
        %s534 = smul.addr %s533, 8
        %s535 = scalar_lea.vmem [#allocation14], %s534
        %p536 = pneg %p294
        %p537 = pneg %p291
        %s538 = sand.u32 %s281, 1
        %s539 = scalar_lea.sflag [#allocation16], %s538
        %s540 = sand.u32 %s281, 1
        %s541 = smul.addr %s540, 16
        %s542 = scalar_lea.vmem [#allocation15], %s541
        %v544 = vld [vmem:[#allocation10] sm:$0xff]
        %v545 = vld [vmem:[#allocation10 + $0x8] sm:$0xff]
        %v546 = vld [vmem:[#allocation10 + $0x10] sm:$0xff]
        %v547 = vld [vmem:[#allocation10 + $0x18] sm:$0xff]
        %v548 = vld [vmem:[#allocation11] sm:$0xf]
        %v549 = vld [vmem:[#allocation11 + $0x4] sm:$0xf]
        %v550 = vld [vmem:[#allocation11 + $0x8] sm:$0xf]
        %v551 = vld [vmem:[#allocation11 + $0xc] sm:$0xf]
        %v552 = vld [vmem:[#allocation13] sm:$0xf]
        %v553 = vld [vmem:[#allocation13 + $0x4] sm:$0xf]
        %v554 = vld [vmem:[#allocation13 + $0x8] sm:$0xf]
        %v555 = vld [vmem:[#allocation13 + $0xc] sm:$0xf]
        %v556 = vld [vmem:[#allocation13 + $0x10] sm:$0xf]
        %v557 = vld [vmem:[#allocation13 + $0x14] sm:$0xf]
        %v558 = vld [vmem:[#allocation13 + $0x18] sm:$0xf]
        %v559 = vld [vmem:[#allocation13 + $0x1c] sm:$0xf]
        %v560 = vld [vmem:[%s7] sm:$0xff]
        %v561 = vld [vmem:[%s7 + $0x8] sm:$0xff]
        %v562 = vld [vmem:[%s7 + $0x10] sm:$0x3]
        %v563 = vld [vmem:[%s8] sm:$0x3]
        %v564 = vld [vmem:[%s447] sm:$0xff]
        %v565 = vld [vmem:[%s456] sm:$0xff]
        %v566 = vld [vmem:[%s456 + $0x8] sm:$0xff]
        %v567 = vld [vmem:[%s465] sm:$0xff]
        %v568 = vld [vmem:[%s474] sm:$0xff]
        %v569 = vld [vmem:[%s474 + $0x8] sm:$0xff]
        %v570 = vadd.f32 %v564, %v567
        %v571 = vadd.f32 %v565, %v568
        %v572 = vadd.f32 %v566, %v569
        %v573 = vpack.c.bf16 %v570, %v570
        %v574 = vlaneseq
        %v575 = vshrl.u32 %v574, 7
        %v576 = vsub.s32 0, %v575
        %v577 = vrot.slane %v560, %v576
        %v582 = vunpack.c.l.b16 %v544
        %v583 = vunpack.c.l.b16 %v545
        %v584 = vunpack.c.l.b16 %v546
        %v585 = vunpack.c.l.b16 %v547
        %v586 = vpack.c.b16 %v583, %v582
        %v587 = vpack.c.b16 %v585, %v584
        %vm590 = vcmask 261120
        %v592 = vsel %vm590, %v573, 0
        %594 = vmatprep.subr.bf16.mxu0 0
        %595 = vmatpush1.bf16.msra.mxu0 %v586
        %596 = vmatprep.subr.bf16.mxu0 0
        %597 = vmatpush1.bf16.msra.mxu0 %v587
        %598 = vmatprep.subr.bf16.mxu0 0
        %599 = vmatpush1.bf16.msra.mxu0 0
        %600 = vmatprep.subr.bf16.mxu0 0
        %601 = vmatpush1.bf16.msra.mxu0 0
        %602 = vmatprep.subr.bf16.mxu0 0
        %603 = vmatpush1.bf16.msra.mxu0 0
        %604 = vmatprep.subr.bf16.mxu0 0
        %605 = vmatpush1.bf16.msra.mxu0 0
        %606 = vmatprep.subr.bf16.mxu0 0
        %607 = vmatpush1.bf16.msra.mxu0 0
        %608 = vmatprep.subr.bf16.mxu0 0
        %609 = vmatpush1.bf16.msra.mxu0 0
        %610 = vmatprep.subr.bf16.mxu0 0
        %611 = vmatpush1.bf16.msra.mxu0 0
        %612 = vmatprep.subr.bf16.mxu0 0
        %613 = vmatpush1.bf16.msra.mxu0 0
        %614 = vmatprep.subr.bf16.mxu0 0
        %615 = vmatpush1.bf16.msra.mxu0 0
        %616 = vmatprep.subr.bf16.mxu0 0
        %617 = vmatpush1.bf16.msra.mxu0 0
        %618 = vmatprep.subr.bf16.mxu0 0
        %619 = vmatpush1.bf16.msra.mxu0 0
        %620 = vmatprep.subr.bf16.mxu0 0
        %621 = vmatpush1.bf16.msra.mxu0 0
        %622 = vmatprep.subr.bf16.mxu0 0
        %623 = vmatpush1.bf16.msra.mxu0 0
        %624 = vmatprep.subr.bf16.mxu0 0
        %625 = vmatpush1.bf16.msra.mxu0 0
        %626 = vmatprep.mubr.bf16.mxu0 0
        %627 = vmatmul.mubr.bf16.gmra.mrb[0].mxu0 %v592
        %v628 = vpop.f32.mrb[0].mxu0
        %v629 = vadd.f32 %v577, %v628
        %v630 = vpop.f32.mrb[0].mxu0
        %v631 = vpop.f32.mrb[0].mxu0
        %v632 = vpop.f32.mrb[0].mxu0
        %633 = vdwg.mxu0
        %v634 = vmul.f32 %v629, 0.35355338
        %v635 = vpack.c.bf16 %v572, %v571
        %v636 = vlaneseq
        %v637 = vshrl.u32 %v636, 7
        %v638 = vsub.s32 1, %v637
        %v639 = vrot.slane %v560, %v638
        %640 = vrot.lane.b32.xlu0 %v586, 96
        %v641 = vpop.permute.xlu0 %640
        %642 = vrot.lane.b32.xlu0 %v587, 96
        %v643 = vpop.permute.xlu0 %642
        %v647 = vsel %vm590, %v635, 0
        %649 = vmatprep.subr.bf16.mxu0 0
        %650 = vmatpush1.bf16.msra.mxu0 %v641
        %651 = vmatprep.subr.bf16.mxu0 0
        %652 = vmatpush1.bf16.msra.mxu0 %v643
        %653 = vmatprep.subr.bf16.mxu0 0
        %654 = vmatpush1.bf16.msra.mxu0 0
        %655 = vmatprep.subr.bf16.mxu0 0
        %656 = vmatpush1.bf16.msra.mxu0 0
        %657 = vmatprep.subr.bf16.mxu0 0
        %658 = vmatpush1.bf16.msra.mxu0 0
        %659 = vmatprep.subr.bf16.mxu0 0
        %660 = vmatpush1.bf16.msra.mxu0 0
        %661 = vmatprep.subr.bf16.mxu0 0
        %662 = vmatpush1.bf16.msra.mxu0 0
        %663 = vmatprep.subr.bf16.mxu0 0
        %664 = vmatpush1.bf16.msra.mxu0 0
        %665 = vmatprep.subr.bf16.mxu0 0
        %666 = vmatpush1.bf16.msra.mxu0 0
        %667 = vmatprep.subr.bf16.mxu0 0
        %668 = vmatpush1.bf16.msra.mxu0 0
        %669 = vmatprep.subr.bf16.mxu0 0
        %670 = vmatpush1.bf16.msra.mxu0 0
        %671 = vmatprep.subr.bf16.mxu0 0
        %672 = vmatpush1.bf16.msra.mxu0 0
        %673 = vmatprep.subr.bf16.mxu0 0
        %674 = vmatpush1.bf16.msra.mxu0 0
        %675 = vmatprep.subr.bf16.mxu0 0
        %676 = vmatpush1.bf16.msra.mxu0 0
        %677 = vmatprep.subr.bf16.mxu0 0
        %678 = vmatpush1.bf16.msra.mxu0 0
        %679 = vmatprep.subr.bf16.mxu0 0
        %680 = vmatpush1.bf16.msra.mxu0 0
        %681 = vmatprep.mubr.bf16.mxu0 0
        %682 = vmatmul.mubr.bf16.gmra.mrb[0].mxu0 %v647
        %v683 = vpop.f32.mrb[0].mxu0
        %v684 = vadd.f32 %v639, %v683
        %v685 = vpop.f32.mrb[0].mxu0
        %v686 = vpop.f32.mrb[0].mxu0
        %v687 = vadd.f32 %v639, %v686
        %v688 = vpop.f32.mrb[0].mxu0
        %689 = vdwg.mxu0
        %v690 = vpack.c.bf16 %v566, %v565
        %v691 = vlaneseq
        %v692 = vshrl.u32 %v691, 7
        %v693 = vsub.s32 2, %v692
        %v694 = vrot.slane %v560, %v693
        %695 = vrot.lane.b32.xlu0 %v586, 64
        %v696 = vpop.permute.xlu0 %695
        %697 = vrot.lane.b32.xlu0 %v587, 64
        %v698 = vpop.permute.xlu0 %697
        %v702 = vsel %vm590, %v690, 0
        %704 = vmatprep.subr.bf16.mxu0 0
        %705 = vmatpush1.bf16.msra.mxu0 %v696
        %706 = vmatprep.subr.bf16.mxu0 0
        %707 = vmatpush1.bf16.msra.mxu0 %v698
        %708 = vmatprep.subr.bf16.mxu0 0
        %709 = vmatpush1.bf16.msra.mxu0 0
        %710 = vmatprep.subr.bf16.mxu0 0
        %711 = vmatpush1.bf16.msra.mxu0 0
        %712 = vmatprep.subr.bf16.mxu0 0
        %713 = vmatpush1.bf16.msra.mxu0 0
        %714 = vmatprep.subr.bf16.mxu0 0
        %715 = vmatpush1.bf16.msra.mxu0 0
        %716 = vmatprep.subr.bf16.mxu0 0
        %717 = vmatpush1.bf16.msra.mxu0 0
        %718 = vmatprep.subr.bf16.mxu0 0
        %719 = vmatpush1.bf16.msra.mxu0 0
        %720 = vmatprep.subr.bf16.mxu0 0
        %721 = vmatpush1.bf16.msra.mxu0 0
        %722 = vmatprep.subr.bf16.mxu0 0
        %723 = vmatpush1.bf16.msra.mxu0 0
        %724 = vmatprep.subr.bf16.mxu0 0
        %725 = vmatpush1.bf16.msra.mxu0 0
        %726 = vmatprep.subr.bf16.mxu0 0
        %727 = vmatpush1.bf16.msra.mxu0 0
        %728 = vmatprep.subr.bf16.mxu0 0
        %729 = vmatpush1.bf16.msra.mxu0 0
        %730 = vmatprep.subr.bf16.mxu0 0
        %731 = vmatpush1.bf16.msra.mxu0 0
        %732 = vmatprep.subr.bf16.mxu0 0
        %733 = vmatpush1.bf16.msra.mxu0 0
        %734 = vmatprep.subr.bf16.mxu0 0
        %735 = vmatpush1.bf16.msra.mxu0 0
        %736 = vmatprep.mubr.bf16.mxu0 0
        %737 = vmatmul.mubr.bf16.gmra.mrb[0].mxu0 %v702
        %v738 = vpop.f32.mrb[0].mxu0
        %v739 = vadd.f32 %v694, %v738
        %v740 = vpop.f32.mrb[0].mxu0
        %v741 = vpop.f32.mrb[0].mxu0
        %v742 = vadd.f32 %v694, %v741
        %v743 = vpop.f32.mrb[0].mxu0
        %744 = vdwg.mxu0
        %746 = vrot.lane.b32.xlu0 %v634, 120
        %v747 = vpop.permute.xlu0 %746
        %749 = vrot.lane.b32.xlu0 %v634, 112
        %v750 = vpop.permute.xlu0 %749
        %752 = vrot.lane.b32.xlu0 %v634, 104
        %v753 = vpop.permute.xlu0 %752
        %v755 = vcombine.low %v634, %v750
        %v756 = vcombine.high %v634, %v750
        %v758 = vunpack.c.l.s4 1983009808
        %v759 = vunpack.c.0.s8 %v758
        %v760 = vlaneseq
        %v761 = vshrl.u32 %v760, 7
        %v762 = vsub.s32 %v759, %v761
        %v763 = vrot.slane %v755, %v762
        %v765 = vunpack.c.l.s4 1983009808
        %v766 = vunpack.c.0.s8 %v765
        %v767 = vlaneseq
        %v768 = vshrl.u32 %v767, 7
        %v769 = vsub.s32 %v766, %v768
        %v770 = vrot.slane %v756, %v769
        %v771 = vcombine.low %v747, %v753
        %v772 = vcombine.high %v747, %v753
        %v774 = vunpack.c.l.s4 1983009808
        %v775 = vunpack.c.0.s8 %v774
        %v776 = vlaneseq
        %v777 = vshrl.u32 %v776, 7
        %v778 = vsub.s32 %v775, %v777
        %v779 = vrot.slane %v771, %v778
        %v781 = vunpack.c.l.s4 1983009808
        %v782 = vunpack.c.0.s8 %v781
        %v783 = vlaneseq
        %v784 = vshrl.u32 %v783, 7
        %v785 = vsub.s32 %v782, %v784
        %v786 = vrot.slane %v772, %v785
        %v787 = vcombine.low %v763, %v779
        %v788 = vcombine.high %v763, %v779
        %v790 = vunpack.c.l.s4 1934713408
        %v791 = vunpack.c.0.s8 %v790
        %v792 = vlaneseq
        %v793 = vshrl.u32 %v792, 7
        %v794 = vsub.s32 %v791, %v793
        %v795 = vrot.slane %v787, %v794
        %v797 = vunpack.c.l.s4 1934713408
        %v798 = vunpack.c.0.s8 %v797
        %v799 = vlaneseq
        %v800 = vshrl.u32 %v799, 7
        %v801 = vsub.s32 %v798, %v800
        %v802 = vrot.slane %v788, %v801
        %v803 = vcombine.low %v770, %v786
        %v804 = vcombine.high %v770, %v786
        %v806 = vunpack.c.l.s4 1934713408
        %v807 = vunpack.c.0.s8 %v806
        %v808 = vlaneseq
        %v809 = vshrl.u32 %v808, 7
        %v810 = vsub.s32 %v807, %v809
        %v811 = vrot.slane %v803, %v810
        %v813 = vunpack.c.l.s4 1934713408
        %v814 = vunpack.c.0.s8 %v813
        %v815 = vlaneseq
        %v816 = vshrl.u32 %v815, 7
        %v817 = vsub.s32 %v814, %v816
        %v818 = vrot.slane %v804, %v817
        %v819 = vcombine.high %v795, 0.0
        %v820 = vcombine.high %v802, 0.0
        %v821 = vcombine.high %v811, 0.0
        %v822 = vcombine.high %v818, 0.0
        %v823 = vcombine.low %v795, %v802
        %v825 = vunpack.c.l.s4 1983009808
        %v826 = vunpack.c.0.s8 %v825
        %v827 = vlaneseq
        %v828 = vshrl.u32 %v827, 7
        %v829 = vsub.s32 %v826, %v828
        %v830 = vrot.slane %v823, %v829
        %v831 = vcombine.low %v819, %v820
        %v833 = vunpack.c.l.s4 1983009808
        %v834 = vunpack.c.0.s8 %v833
        %v835 = vlaneseq
        %v836 = vshrl.u32 %v835, 7
        %v837 = vsub.s32 %v834, %v836
        %v838 = vrot.slane %v831, %v837
        %v839 = vcombine.low %v811, %v818
        %v841 = vunpack.c.l.s4 1983009808
        %v842 = vunpack.c.0.s8 %v841
        %v843 = vlaneseq
        %v844 = vshrl.u32 %v843, 7
        %v845 = vsub.s32 %v842, %v844
        %v846 = vrot.slane %v839, %v845
        %v847 = vcombine.low %v821, %v822
        %v849 = vunpack.c.l.s4 1983009808
        %v850 = vunpack.c.0.s8 %v849
        %v851 = vlaneseq
        %v852 = vshrl.u32 %v851, 7
        %v853 = vsub.s32 %v850, %v852
        %v854 = vrot.slane %v847, %v853
        %v855 = vcombine.low %v830, %v838
        %v856 = vcombine.high %v830, %v838
        %v858 = vunpack.c.l.s4 1934713408
        %v859 = vunpack.c.0.s8 %v858
        %v860 = vlaneseq
        %v861 = vshrl.u32 %v860, 7
        %v862 = vsub.s32 %v859, %v861
        %v863 = vrot.slane %v855, %v862
        %v865 = vunpack.c.l.s4 1934713408
        %v866 = vunpack.c.0.s8 %v865
        %v867 = vlaneseq
        %v868 = vshrl.u32 %v867, 7
        %v869 = vsub.s32 %v866, %v868
        %v870 = vrot.slane %v856, %v869
        %v871 = vcombine.low %v846, %v854
        %v872 = vcombine.high %v846, %v854
        %v874 = vunpack.c.l.s4 1934713408
        %v875 = vunpack.c.0.s8 %v874
        %v876 = vlaneseq
        %v877 = vshrl.u32 %v876, 7
        %v878 = vsub.s32 %v875, %v877
        %v879 = vrot.slane %v871, %v878
        %v881 = vunpack.c.l.s4 1934713408
        %v882 = vunpack.c.0.s8 %v881
        %v883 = vlaneseq
        %v884 = vshrl.u32 %v883, 7
        %v885 = vsub.s32 %v882, %v884
        %v886 = vrot.slane %v872, %v885
        %v887 = vcombine.low %v863, %v879
        %v888 = vcombine.high %v863, %v879
        %v889 = vcombine.low %v870, %v886
        %v890 = vcombine.high %v870, %v886
        %v891 = vpack.c.bf16 %v887, %v887
        %v892 = vpack.c.bf16 %v888, %v888
        %v893 = vpack.c.bf16 %v889, %v889
        %v894 = vpack.c.bf16 %v890, %v890
        %897 = vrot.lane.b32.xlu0 %v684, 120
        %v898 = vpop.permute.xlu0 %897
        %899 = vrot.lane.b32.xlu0 %v687, 120
        %v900 = vpop.permute.xlu0 %899
        %903 = vrot.lane.b32.xlu0 %v684, 112
        %v904 = vpop.permute.xlu0 %903
        %905 = vrot.lane.b32.xlu0 %v687, 112
        %v906 = vpop.permute.xlu0 %905
        %909 = vrot.lane.b32.xlu0 %v684, 104
        %v910 = vpop.permute.xlu0 %909
        %911 = vrot.lane.b32.xlu0 %v687, 104
        %v912 = vpop.permute.xlu0 %911
        %v915 = vcombine.low %v684, %v904
        %v916 = vcombine.high %v684, %v904
        %v918 = vunpack.c.l.s4 1983009808
        %v919 = vunpack.c.0.s8 %v918
        %v920 = vlaneseq
        %v921 = vshrl.u32 %v920, 7
        %v922 = vsub.s32 %v919, %v921
        %v923 = vrot.slane %v915, %v922
        %v925 = vunpack.c.l.s4 1983009808
        %v926 = vunpack.c.0.s8 %v925
        %v927 = vlaneseq
        %v928 = vshrl.u32 %v927, 7
        %v929 = vsub.s32 %v926, %v928
        %v930 = vrot.slane %v916, %v929
        %v931 = vcombine.low %v898, %v910
        %v932 = vcombine.high %v898, %v910
        %v934 = vunpack.c.l.s4 1983009808
        %v935 = vunpack.c.0.s8 %v934
        %v936 = vlaneseq
        %v937 = vshrl.u32 %v936, 7
        %v938 = vsub.s32 %v935, %v937
        %v939 = vrot.slane %v931, %v938
        %v941 = vunpack.c.l.s4 1983009808
        %v942 = vunpack.c.0.s8 %v941
        %v943 = vlaneseq
        %v944 = vshrl.u32 %v943, 7
        %v945 = vsub.s32 %v942, %v944
        %v946 = vrot.slane %v932, %v945
        %v947 = vcombine.low %v923, %v939
        %v948 = vcombine.high %v923, %v939
        %v950 = vunpack.c.l.s4 1934713408
        %v951 = vunpack.c.0.s8 %v950
        %v952 = vlaneseq
        %v953 = vshrl.u32 %v952, 7
        %v954 = vsub.s32 %v951, %v953
        %v955 = vrot.slane %v947, %v954
        %v957 = vunpack.c.l.s4 1934713408
        %v958 = vunpack.c.0.s8 %v957
        %v959 = vlaneseq
        %v960 = vshrl.u32 %v959, 7
        %v961 = vsub.s32 %v958, %v960
        %v962 = vrot.slane %v948, %v961
        %v963 = vcombine.low %v930, %v946
        %v964 = vcombine.high %v930, %v946
        %v966 = vunpack.c.l.s4 1934713408
        %v967 = vunpack.c.0.s8 %v966
        %v968 = vlaneseq
        %v969 = vshrl.u32 %v968, 7
        %v970 = vsub.s32 %v967, %v969
        %v971 = vrot.slane %v963, %v970
        %v973 = vunpack.c.l.s4 1934713408
        %v974 = vunpack.c.0.s8 %v973
        %v975 = vlaneseq
        %v976 = vshrl.u32 %v975, 7
        %v977 = vsub.s32 %v974, %v976
        %v978 = vrot.slane %v964, %v977
        %v979 = vcombine.high %v955, 0.0
        %v980 = vcombine.high %v962, 0.0
        %v981 = vcombine.high %v971, 0.0
        %v982 = vcombine.high %v978, 0.0
        %v983 = vcombine.low %v687, %v906
        %v984 = vcombine.high %v687, %v906
        %v986 = vunpack.c.l.s4 1983009808
        %v987 = vunpack.c.0.s8 %v986
        %v988 = vlaneseq
        %v989 = vshrl.u32 %v988, 7
        %v990 = vsub.s32 %v987, %v989
        %v991 = vrot.slane %v983, %v990
        %v993 = vunpack.c.l.s4 1983009808
        %v994 = vunpack.c.0.s8 %v993
        %v995 = vlaneseq
        %v996 = vshrl.u32 %v995, 7
        %v997 = vsub.s32 %v994, %v996
        %v998 = vrot.slane %v984, %v997
        %v999 = vcombine.low %v900, %v912
        %v1000 = vcombine.high %v900, %v912
        %v1002 = vunpack.c.l.s4 1983009808
        %v1003 = vunpack.c.0.s8 %v1002
        %v1004 = vlaneseq
        %v1005 = vshrl.u32 %v1004, 7
        %v1006 = vsub.s32 %v1003, %v1005
        %v1007 = vrot.slane %v999, %v1006
        %v1009 = vunpack.c.l.s4 1983009808
        %v1010 = vunpack.c.0.s8 %v1009
        %v1011 = vlaneseq
        %v1012 = vshrl.u32 %v1011, 7
        %v1013 = vsub.s32 %v1010, %v1012
        %v1014 = vrot.slane %v1000, %v1013
        %v1015 = vcombine.low %v991, %v1007
        %v1016 = vcombine.high %v991, %v1007
        %v1018 = vunpack.c.l.s4 1934713408
        %v1019 = vunpack.c.0.s8 %v1018
        %v1020 = vlaneseq
        %v1021 = vshrl.u32 %v1020, 7
        %v1022 = vsub.s32 %v1019, %v1021
        %v1023 = vrot.slane %v1015, %v1022
        %v1025 = vunpack.c.l.s4 1934713408
        %v1026 = vunpack.c.0.s8 %v1025
        %v1027 = vlaneseq
        %v1028 = vshrl.u32 %v1027, 7
        %v1029 = vsub.s32 %v1026, %v1028
        %v1030 = vrot.slane %v1016, %v1029
        %v1031 = vcombine.low %v998, %v1014
        %v1032 = vcombine.high %v998, %v1014
        %v1034 = vunpack.c.l.s4 1934713408
        %v1035 = vunpack.c.0.s8 %v1034
        %v1036 = vlaneseq
        %v1037 = vshrl.u32 %v1036, 7
        %v1038 = vsub.s32 %v1035, %v1037
        %v1039 = vrot.slane %v1031, %v1038
        %v1041 = vunpack.c.l.s4 1934713408
        %v1042 = vunpack.c.0.s8 %v1041
        %v1043 = vlaneseq
        %v1044 = vshrl.u32 %v1043, 7
        %v1045 = vsub.s32 %v1042, %v1044
        %v1046 = vrot.slane %v1032, %v1045
        %v1047 = vcombine.high %v1023, 0.0
        %v1048 = vcombine.high %v1030, 0.0
        %v1049 = vcombine.high %v1039, 0.0
        %v1050 = vcombine.high %v1046, 0.0
        %v1051 = vcombine.low %v955, %v962
        %v1053 = vunpack.c.l.s4 1983009808
        %v1054 = vunpack.c.0.s8 %v1053
        %v1055 = vlaneseq
        %v1056 = vshrl.u32 %v1055, 7
        %v1057 = vsub.s32 %v1054, %v1056
        %v1058 = vrot.slane %v1051, %v1057
        %v1059 = vcombine.low %v979, %v980
        %v1061 = vunpack.c.l.s4 1983009808
        %v1062 = vunpack.c.0.s8 %v1061
        %v1063 = vlaneseq
        %v1064 = vshrl.u32 %v1063, 7
        %v1065 = vsub.s32 %v1062, %v1064
        %v1066 = vrot.slane %v1059, %v1065
        %v1067 = vcombine.low %v971, %v978
        %v1069 = vunpack.c.l.s4 1983009808
        %v1070 = vunpack.c.0.s8 %v1069
        %v1071 = vlaneseq
        %v1072 = vshrl.u32 %v1071, 7
        %v1073 = vsub.s32 %v1070, %v1072
        %v1074 = vrot.slane %v1067, %v1073
        %v1075 = vcombine.low %v981, %v982
        %v1077 = vunpack.c.l.s4 1983009808
        %v1078 = vunpack.c.0.s8 %v1077
        %v1079 = vlaneseq
        %v1080 = vshrl.u32 %v1079, 7
        %v1081 = vsub.s32 %v1078, %v1080
        %v1082 = vrot.slane %v1075, %v1081
        %v1083 = vcombine.low %v1058, %v1066
        %v1084 = vcombine.high %v1058, %v1066
        %v1086 = vunpack.c.l.s4 1934713408
        %v1087 = vunpack.c.0.s8 %v1086
        %v1088 = vlaneseq
        %v1089 = vshrl.u32 %v1088, 7
        %v1090 = vsub.s32 %v1087, %v1089
        %v1091 = vrot.slane %v1083, %v1090
        %v1093 = vunpack.c.l.s4 1934713408
        %v1094 = vunpack.c.0.s8 %v1093
        %v1095 = vlaneseq
        %v1096 = vshrl.u32 %v1095, 7
        %v1097 = vsub.s32 %v1094, %v1096
        %v1098 = vrot.slane %v1084, %v1097
        %v1099 = vcombine.low %v1074, %v1082
        %v1100 = vcombine.high %v1074, %v1082
        %v1102 = vunpack.c.l.s4 1934713408
        %v1103 = vunpack.c.0.s8 %v1102
        %v1104 = vlaneseq
        %v1105 = vshrl.u32 %v1104, 7
        %v1106 = vsub.s32 %v1103, %v1105
        %v1107 = vrot.slane %v1099, %v1106
        %v1109 = vunpack.c.l.s4 1934713408
        %v1110 = vunpack.c.0.s8 %v1109
        %v1111 = vlaneseq
        %v1112 = vshrl.u32 %v1111, 7
        %v1113 = vsub.s32 %v1110, %v1112
        %v1114 = vrot.slane %v1100, %v1113
        %v1115 = vcombine.low %v1091, %v1107
        %v1116 = vcombine.high %v1091, %v1107
        %v1117 = vcombine.low %v1098, %v1114
        %v1118 = vcombine.high %v1098, %v1114
        %v1119 = vcombine.low %v1023, %v1030
        %v1121 = vunpack.c.l.s4 1983009808
        %v1122 = vunpack.c.0.s8 %v1121
        %v1123 = vlaneseq
        %v1124 = vshrl.u32 %v1123, 7
        %v1125 = vsub.s32 %v1122, %v1124
        %v1126 = vrot.slane %v1119, %v1125
        %v1127 = vcombine.low %v1047, %v1048
        %v1129 = vunpack.c.l.s4 1983009808
        %v1130 = vunpack.c.0.s8 %v1129
        %v1131 = vlaneseq
        %v1132 = vshrl.u32 %v1131, 7
        %v1133 = vsub.s32 %v1130, %v1132
        %v1134 = vrot.slane %v1127, %v1133
        %v1135 = vcombine.low %v1039, %v1046
        %v1137 = vunpack.c.l.s4 1983009808
        %v1138 = vunpack.c.0.s8 %v1137
        %v1139 = vlaneseq
        %v1140 = vshrl.u32 %v1139, 7
        %v1141 = vsub.s32 %v1138, %v1140
        %v1142 = vrot.slane %v1135, %v1141
        %v1143 = vcombine.low %v1049, %v1050
        %v1145 = vunpack.c.l.s4 1983009808
        %v1146 = vunpack.c.0.s8 %v1145
        %v1147 = vlaneseq
        %v1148 = vshrl.u32 %v1147, 7
        %v1149 = vsub.s32 %v1146, %v1148
        %v1150 = vrot.slane %v1143, %v1149
        %v1151 = vcombine.low %v1126, %v1134
        %v1152 = vcombine.high %v1126, %v1134
        %v1154 = vunpack.c.l.s4 1934713408
        %v1155 = vunpack.c.0.s8 %v1154
        %v1156 = vlaneseq
        %v1157 = vshrl.u32 %v1156, 7
        %v1158 = vsub.s32 %v1155, %v1157
        %v1159 = vrot.slane %v1151, %v1158
        %v1161 = vunpack.c.l.s4 1934713408
        %v1162 = vunpack.c.0.s8 %v1161
        %v1163 = vlaneseq
        %v1164 = vshrl.u32 %v1163, 7
        %v1165 = vsub.s32 %v1162, %v1164
        %v1166 = vrot.slane %v1152, %v1165
        %v1167 = vcombine.low %v1142, %v1150
        %v1168 = vcombine.high %v1142, %v1150
        %v1170 = vunpack.c.l.s4 1934713408
        %v1171 = vunpack.c.0.s8 %v1170
        %v1172 = vlaneseq
        %v1173 = vshrl.u32 %v1172, 7
        %v1174 = vsub.s32 %v1171, %v1173
        %v1175 = vrot.slane %v1167, %v1174
        %v1177 = vunpack.c.l.s4 1934713408
        %v1178 = vunpack.c.0.s8 %v1177
        %v1179 = vlaneseq
        %v1180 = vshrl.u32 %v1179, 7
        %v1181 = vsub.s32 %v1178, %v1180
        %v1182 = vrot.slane %v1168, %v1181
        %v1183 = vcombine.low %v1159, %v1175
        %v1184 = vcombine.high %v1159, %v1175
        %v1185 = vcombine.low %v1166, %v1182
        %v1186 = vcombine.high %v1166, %v1182
        %v1187 = vpack.c.bf16 %v1183, %v1115
        %v1188 = vpack.c.bf16 %v1184, %v1116
        %v1189 = vpack.c.bf16 %v1185, %v1117
        %v1190 = vpack.c.bf16 %v1186, %v1118
        %1193 = vrot.lane.b32.xlu0 %v739, 120
        %v1194 = vpop.permute.xlu0 %1193
        %1195 = vrot.lane.b32.xlu0 %v742, 120
        %v1196 = vpop.permute.xlu0 %1195
        %1199 = vrot.lane.b32.xlu0 %v739, 112
        %v1200 = vpop.permute.xlu0 %1199
        %1201 = vrot.lane.b32.xlu0 %v742, 112
        %v1202 = vpop.permute.xlu0 %1201
        %1205 = vrot.lane.b32.xlu0 %v739, 104
        %v1206 = vpop.permute.xlu0 %1205
        %1207 = vrot.lane.b32.xlu0 %v742, 104
        %v1208 = vpop.permute.xlu0 %1207
        %v1211 = vcombine.low %v739, %v1200
        %v1212 = vcombine.high %v739, %v1200
        %v1214 = vunpack.c.l.s4 1983009808
        %v1215 = vunpack.c.0.s8 %v1214
        %v1216 = vlaneseq
        %v1217 = vshrl.u32 %v1216, 7
        %v1218 = vsub.s32 %v1215, %v1217
        %v1219 = vrot.slane %v1211, %v1218
        %v1221 = vunpack.c.l.s4 1983009808
        %v1222 = vunpack.c.0.s8 %v1221
        %v1223 = vlaneseq
        %v1224 = vshrl.u32 %v1223, 7
        %v1225 = vsub.s32 %v1222, %v1224
        %v1226 = vrot.slane %v1212, %v1225
        %v1227 = vcombine.low %v1194, %v1206
        %v1228 = vcombine.high %v1194, %v1206
        %v1230 = vunpack.c.l.s4 1983009808
        %v1231 = vunpack.c.0.s8 %v1230
        %v1232 = vlaneseq
        %v1233 = vshrl.u32 %v1232, 7
        %v1234 = vsub.s32 %v1231, %v1233
        %v1235 = vrot.slane %v1227, %v1234
        %v1237 = vunpack.c.l.s4 1983009808
        %v1238 = vunpack.c.0.s8 %v1237
        %v1239 = vlaneseq
        %v1240 = vshrl.u32 %v1239, 7
        %v1241 = vsub.s32 %v1238, %v1240
        %v1242 = vrot.slane %v1228, %v1241
        %v1243 = vcombine.low %v1219, %v1235
        %v1244 = vcombine.high %v1219, %v1235
        %v1246 = vunpack.c.l.s4 1934713408
        %v1247 = vunpack.c.0.s8 %v1246
        %v1248 = vlaneseq
        %v1249 = vshrl.u32 %v1248, 7
        %v1250 = vsub.s32 %v1247, %v1249
        %v1251 = vrot.slane %v1243, %v1250
        %v1253 = vunpack.c.l.s4 1934713408
        %v1254 = vunpack.c.0.s8 %v1253
        %v1255 = vlaneseq
        %v1256 = vshrl.u32 %v1255, 7
        %v1257 = vsub.s32 %v1254, %v1256
        %v1258 = vrot.slane %v1244, %v1257
        %v1259 = vcombine.low %v1226, %v1242
        %v1260 = vcombine.high %v1226, %v1242
        %v1262 = vunpack.c.l.s4 1934713408
        %v1263 = vunpack.c.0.s8 %v1262
        %v1264 = vlaneseq
        %v1265 = vshrl.u32 %v1264, 7
        %v1266 = vsub.s32 %v1263, %v1265
        %v1267 = vrot.slane %v1259, %v1266
        %v1269 = vunpack.c.l.s4 1934713408
        %v1270 = vunpack.c.0.s8 %v1269
        %v1271 = vlaneseq
        %v1272 = vshrl.u32 %v1271, 7
        %v1273 = vsub.s32 %v1270, %v1272
        %v1274 = vrot.slane %v1260, %v1273
        %v1275 = vcombine.high %v1251, 0.0
        %v1276 = vcombine.high %v1258, 0.0
        %v1277 = vcombine.high %v1267, 0.0
        %v1278 = vcombine.high %v1274, 0.0
        %v1279 = vcombine.low %v742, %v1202
        %v1280 = vcombine.high %v742, %v1202
        %v1282 = vunpack.c.l.s4 1983009808
        %v1283 = vunpack.c.0.s8 %v1282
        %v1284 = vlaneseq
        %v1285 = vshrl.u32 %v1284, 7
        %v1286 = vsub.s32 %v1283, %v1285
        %v1287 = vrot.slane %v1279, %v1286
        %v1289 = vunpack.c.l.s4 1983009808
        %v1290 = vunpack.c.0.s8 %v1289
        %v1291 = vlaneseq
        %v1292 = vshrl.u32 %v1291, 7
        %v1293 = vsub.s32 %v1290, %v1292
        %v1294 = vrot.slane %v1280, %v1293
        %v1295 = vcombine.low %v1196, %v1208
        %v1296 = vcombine.high %v1196, %v1208
        %v1298 = vunpack.c.l.s4 1983009808
        %v1299 = vunpack.c.0.s8 %v1298
        %v1300 = vlaneseq
        %v1301 = vshrl.u32 %v1300, 7
        %v1302 = vsub.s32 %v1299, %v1301
        %v1303 = vrot.slane %v1295, %v1302
        %v1305 = vunpack.c.l.s4 1983009808
        %v1306 = vunpack.c.0.s8 %v1305
        %v1307 = vlaneseq
        %v1308 = vshrl.u32 %v1307, 7
        %v1309 = vsub.s32 %v1306, %v1308
        %v1310 = vrot.slane %v1296, %v1309
        %v1311 = vcombine.low %v1287, %v1303
        %v1312 = vcombine.high %v1287, %v1303
        %v1314 = vunpack.c.l.s4 1934713408
        %v1315 = vunpack.c.0.s8 %v1314
        %v1316 = vlaneseq
        %v1317 = vshrl.u32 %v1316, 7
        %v1318 = vsub.s32 %v1315, %v1317
        %v1319 = vrot.slane %v1311, %v1318
        %v1321 = vunpack.c.l.s4 1934713408
        %v1322 = vunpack.c.0.s8 %v1321
        %v1323 = vlaneseq
        %v1324 = vshrl.u32 %v1323, 7
        %v1325 = vsub.s32 %v1322, %v1324
        %v1326 = vrot.slane %v1312, %v1325
        %v1327 = vcombine.low %v1294, %v1310
        %v1328 = vcombine.high %v1294, %v1310
        %v1330 = vunpack.c.l.s4 1934713408
        %v1331 = vunpack.c.0.s8 %v1330
        %v1332 = vlaneseq
        %v1333 = vshrl.u32 %v1332, 7
        %v1334 = vsub.s32 %v1331, %v1333
        %v1335 = vrot.slane %v1327, %v1334
        %v1337 = vunpack.c.l.s4 1934713408
        %v1338 = vunpack.c.0.s8 %v1337
        %v1339 = vlaneseq
        %v1340 = vshrl.u32 %v1339, 7
        %v1341 = vsub.s32 %v1338, %v1340
        %v1342 = vrot.slane %v1328, %v1341
        %v1343 = vcombine.high %v1319, 0.0
        %v1344 = vcombine.high %v1326, 0.0
        %v1345 = vcombine.high %v1335, 0.0
        %v1346 = vcombine.high %v1342, 0.0
        %v1347 = vcombine.low %v1251, %v1258
        %v1349 = vunpack.c.l.s4 1983009808
        %v1350 = vunpack.c.0.s8 %v1349
        %v1351 = vlaneseq
        %v1352 = vshrl.u32 %v1351, 7
        %v1353 = vsub.s32 %v1350, %v1352
        %v1354 = vrot.slane %v1347, %v1353
        %v1355 = vcombine.low %v1275, %v1276
        %v1357 = vunpack.c.l.s4 1983009808
        %v1358 = vunpack.c.0.s8 %v1357
        %v1359 = vlaneseq
        %v1360 = vshrl.u32 %v1359, 7
        %v1361 = vsub.s32 %v1358, %v1360
        %v1362 = vrot.slane %v1355, %v1361
        %v1363 = vcombine.low %v1267, %v1274
        %v1365 = vunpack.c.l.s4 1983009808
        %v1366 = vunpack.c.0.s8 %v1365
        %v1367 = vlaneseq
        %v1368 = vshrl.u32 %v1367, 7
        %v1369 = vsub.s32 %v1366, %v1368
        %v1370 = vrot.slane %v1363, %v1369
        %v1371 = vcombine.low %v1277, %v1278
        %v1373 = vunpack.c.l.s4 1983009808
        %v1374 = vunpack.c.0.s8 %v1373
        %v1375 = vlaneseq
        %v1376 = vshrl.u32 %v1375, 7
        %v1377 = vsub.s32 %v1374, %v1376
        %v1378 = vrot.slane %v1371, %v1377
        %v1379 = vcombine.low %v1354, %v1362
        %v1380 = vcombine.high %v1354, %v1362
        %v1382 = vunpack.c.l.s4 1934713408
        %v1383 = vunpack.c.0.s8 %v1382
        %v1384 = vlaneseq
        %v1385 = vshrl.u32 %v1384, 7
        %v1386 = vsub.s32 %v1383, %v1385
        %v1387 = vrot.slane %v1379, %v1386
        %v1389 = vunpack.c.l.s4 1934713408
        %v1390 = vunpack.c.0.s8 %v1389
        %v1391 = vlaneseq
        %v1392 = vshrl.u32 %v1391, 7
        %v1393 = vsub.s32 %v1390, %v1392
        %v1394 = vrot.slane %v1380, %v1393
        %v1395 = vcombine.low %v1370, %v1378
        %v1396 = vcombine.high %v1370, %v1378
        %v1398 = vunpack.c.l.s4 1934713408
        %v1399 = vunpack.c.0.s8 %v1398
        %v1400 = vlaneseq
        %v1401 = vshrl.u32 %v1400, 7
        %v1402 = vsub.s32 %v1399, %v1401
        %v1403 = vrot.slane %v1395, %v1402
        %v1405 = vunpack.c.l.s4 1934713408
        %v1406 = vunpack.c.0.s8 %v1405
        %v1407 = vlaneseq
        %v1408 = vshrl.u32 %v1407, 7
        %v1409 = vsub.s32 %v1406, %v1408
        %v1410 = vrot.slane %v1396, %v1409
        %v1411 = vcombine.low %v1387, %v1403
        %v1412 = vcombine.high %v1387, %v1403
        %v1413 = vcombine.low %v1394, %v1410
        %v1414 = vcombine.high %v1394, %v1410
        %v1415 = vcombine.low %v1319, %v1326
        %v1417 = vunpack.c.l.s4 1983009808
        %v1418 = vunpack.c.0.s8 %v1417
        %v1419 = vlaneseq
        %v1420 = vshrl.u32 %v1419, 7
        %v1421 = vsub.s32 %v1418, %v1420
        %v1422 = vrot.slane %v1415, %v1421
        %v1423 = vcombine.low %v1343, %v1344
        %v1425 = vunpack.c.l.s4 1983009808
        %v1426 = vunpack.c.0.s8 %v1425
        %v1427 = vlaneseq
        %v1428 = vshrl.u32 %v1427, 7
        %v1429 = vsub.s32 %v1426, %v1428
        %v1430 = vrot.slane %v1423, %v1429
        %v1431 = vcombine.low %v1335, %v1342
        %v1433 = vunpack.c.l.s4 1983009808
        %v1434 = vunpack.c.0.s8 %v1433
        %v1435 = vlaneseq
        %v1436 = vshrl.u32 %v1435, 7
        %v1437 = vsub.s32 %v1434, %v1436
        %v1438 = vrot.slane %v1431, %v1437
        %v1439 = vcombine.low %v1345, %v1346
        %v1441 = vunpack.c.l.s4 1983009808
        %v1442 = vunpack.c.0.s8 %v1441
        %v1443 = vlaneseq
        %v1444 = vshrl.u32 %v1443, 7
        %v1445 = vsub.s32 %v1442, %v1444
        %v1446 = vrot.slane %v1439, %v1445
        %v1447 = vcombine.low %v1422, %v1430
        %v1448 = vcombine.high %v1422, %v1430
        %v1450 = vunpack.c.l.s4 1934713408
        %v1451 = vunpack.c.0.s8 %v1450
        %v1452 = vlaneseq
        %v1453 = vshrl.u32 %v1452, 7
        %v1454 = vsub.s32 %v1451, %v1453
        %v1455 = vrot.slane %v1447, %v1454
        %v1457 = vunpack.c.l.s4 1934713408
        %v1458 = vunpack.c.0.s8 %v1457
        %v1459 = vlaneseq
        %v1460 = vshrl.u32 %v1459, 7
        %v1461 = vsub.s32 %v1458, %v1460
        %v1462 = vrot.slane %v1448, %v1461
        %v1463 = vcombine.low %v1438, %v1446
        %v1464 = vcombine.high %v1438, %v1446
        %v1466 = vunpack.c.l.s4 1934713408
        %v1467 = vunpack.c.0.s8 %v1466
        %v1468 = vlaneseq
        %v1469 = vshrl.u32 %v1468, 7
        %v1470 = vsub.s32 %v1467, %v1469
        %v1471 = vrot.slane %v1463, %v1470
        %v1473 = vunpack.c.l.s4 1934713408
        %v1474 = vunpack.c.0.s8 %v1473
        %v1475 = vlaneseq
        %v1476 = vshrl.u32 %v1475, 7
        %v1477 = vsub.s32 %v1474, %v1476
        %v1478 = vrot.slane %v1464, %v1477
        %v1479 = vcombine.low %v1455, %v1471
        %v1480 = vcombine.high %v1455, %v1471
        %v1481 = vcombine.low %v1462, %v1478
        %v1482 = vcombine.high %v1462, %v1478
        %v1483 = vpack.c.bf16 %v1479, %v1411
        %v1484 = vpack.c.bf16 %v1480, %v1412
        %v1485 = vpack.c.bf16 %v1481, %v1413
        %v1486 = vpack.c.bf16 %v1482, %v1414
        %vm1487 = vcmask 64512
        %v1489 = vsel %vm1487, %v891, 0
        %v1492 = vsel %vm1487, %v1187, 0
        %1494 = vmatprep.subr.bf16.mxu0 0
        %1495 = vmatpush1.bf16.xpose.msra.mxu0 %v1492
        %1496 = vmatprep.subr.bf16.mxu0 0
        %1497 = vmatpush1.bf16.xpose.msra.mxu0 0
        %1498 = vmatprep.subr.bf16.mxu0 0
        %1499 = vmatpush1.bf16.xpose.msra.mxu0 0
        %1500 = vmatprep.subr.bf16.mxu0 0
        %1501 = vmatpush1.bf16.xpose.msra.mxu0 0
        %1502 = vmatprep.subr.bf16.mxu0 0
        %1503 = vmatpush1.bf16.xpose.msra.mxu0 0
        %1504 = vmatprep.subr.bf16.mxu0 0
        %1505 = vmatpush1.bf16.xpose.msra.mxu0 0
        %1506 = vmatprep.subr.bf16.mxu0 0
        %1507 = vmatpush1.bf16.xpose.msra.mxu0 0
        %1508 = vmatprep.subr.bf16.mxu0 0
        %1509 = vmatpush1.bf16.xpose.msra.mxu0 0
        %1510 = vmatprep.subr.bf16.mxu0 0
        %1511 = vmatpush1.bf16.xpose.msra.mxu0 0
        %1512 = vmatprep.subr.bf16.mxu0 0
        %1513 = vmatpush1.bf16.xpose.msra.mxu0 0
        %1514 = vmatprep.subr.bf16.mxu0 0
        %1515 = vmatpush1.bf16.xpose.msra.mxu0 0
        %1516 = vmatprep.subr.bf16.mxu0 0
        %1517 = vmatpush1.bf16.xpose.msra.mxu0 0
        %1518 = vmatprep.subr.bf16.mxu0 0
        %1519 = vmatpush1.bf16.xpose.msra.mxu0 0
        %1520 = vmatprep.subr.bf16.mxu0 0
        %1521 = vmatpush1.bf16.xpose.msra.mxu0 0
        %1522 = vmatprep.subr.bf16.mxu0 0
        %1523 = vmatpush1.bf16.xpose.msra.mxu0 0
        %1524 = vmatprep.subr.bf16.mxu0 0
        %1525 = vmatpush1.bf16.xpose.msra.mxu0 0
        %1526 = vmatprep.mubr.bf16.mxu0 0
        %1527 = vmatmul.mubr.bf16.gmra.mrb[0].mxu0 %v1489
        %v1528 = vpop.f32.mrb[0].mxu0
        %v1529 = vadd.f32 0.0, %v1528
        %v1530 = vpop.f32.mrb[0].mxu0
        %v1531 = vpop.f32.mrb[0].mxu0
        %v1532 = vpop.f32.mrb[0].mxu0
        %1533 = vdwg.mxu0
        %v1535 = vsel %vm1487, %v892, 0
        %v1538 = vsel %vm1487, %v1188, 0
        %1540 = vmatprep.subr.bf16.mxu0 0
        %1541 = vmatpush1.bf16.xpose.msra.mxu0 %v1538
        %1542 = vmatprep.subr.bf16.mxu0 0
        %1543 = vmatpush1.bf16.xpose.msra.mxu0 0
        %1544 = vmatprep.subr.bf16.mxu0 0
        %1545 = vmatpush1.bf16.xpose.msra.mxu0 0
        %1546 = vmatprep.subr.bf16.mxu0 0
        %1547 = vmatpush1.bf16.xpose.msra.mxu0 0
        %1548 = vmatprep.subr.bf16.mxu0 0
        %1549 = vmatpush1.bf16.xpose.msra.mxu0 0
        %1550 = vmatprep.subr.bf16.mxu0 0
        %1551 = vmatpush1.bf16.xpose.msra.mxu0 0
        %1552 = vmatprep.subr.bf16.mxu0 0
        %1553 = vmatpush1.bf16.xpose.msra.mxu0 0
        %1554 = vmatprep.subr.bf16.mxu0 0
        %1555 = vmatpush1.bf16.xpose.msra.mxu0 0
        %1556 = vmatprep.subr.bf16.mxu0 0
        %1557 = vmatpush1.bf16.xpose.msra.mxu0 0
        %1558 = vmatprep.subr.bf16.mxu0 0
        %1559 = vmatpush1.bf16.xpose.msra.mxu0 0
        %1560 = vmatprep.subr.bf16.mxu0 0
        %1561 = vmatpush1.bf16.xpose.msra.mxu0 0
        %1562 = vmatprep.subr.bf16.mxu0 0
        %1563 = vmatpush1.bf16.xpose.msra.mxu0 0
        %1564 = vmatprep.subr.bf16.mxu0 0
        %1565 = vmatpush1.bf16.xpose.msra.mxu0 0
        %1566 = vmatprep.subr.bf16.mxu0 0
        %1567 = vmatpush1.bf16.xpose.msra.mxu0 0
        %1568 = vmatprep.subr.bf16.mxu0 0
        %1569 = vmatpush1.bf16.xpose.msra.mxu0 0
        %1570 = vmatprep.subr.bf16.mxu0 0
        %1571 = vmatpush1.bf16.xpose.msra.mxu0 0
        %1572 = vmatprep.mubr.bf16.mxu0 0
        %1573 = vmatmul.mubr.bf16.gmra.mrb[0].mxu0 %v1535
        %v1574 = vpop.f32.mrb[0].mxu0
        %v1575 = vadd.f32 0.0, %v1574
        %v1576 = vpop.f32.mrb[0].mxu0
        %v1577 = vpop.f32.mrb[0].mxu0
        %v1578 = vpop.f32.mrb[0].mxu0
        %1579 = vdwg.mxu0
        %v1581 = vsel %vm1487, %v893, 0
        %v1584 = vsel %vm1487, %v1189, 0
        %1586 = vmatprep.subr.bf16.mxu0 0
        %1587 = vmatpush1.bf16.xpose.msra.mxu0 %v1584
        %1588 = vmatprep.subr.bf16.mxu0 0
        %1589 = vmatpush1.bf16.xpose.msra.mxu0 0
        %1590 = vmatprep.subr.bf16.mxu0 0
        %1591 = vmatpush1.bf16.xpose.msra.mxu0 0
        %1592 = vmatprep.subr.bf16.mxu0 0
        %1593 = vmatpush1.bf16.xpose.msra.mxu0 0
        %1594 = vmatprep.subr.bf16.mxu0 0
        %1595 = vmatpush1.bf16.xpose.msra.mxu0 0
        %1596 = vmatprep.subr.bf16.mxu0 0
        %1597 = vmatpush1.bf16.xpose.msra.mxu0 0
        %1598 = vmatprep.subr.bf16.mxu0 0
        %1599 = vmatpush1.bf16.xpose.msra.mxu0 0
        %1600 = vmatprep.subr.bf16.mxu0 0
        %1601 = vmatpush1.bf16.xpose.msra.mxu0 0
        %1602 = vmatprep.subr.bf16.mxu0 0
        %1603 = vmatpush1.bf16.xpose.msra.mxu0 0
        %1604 = vmatprep.subr.bf16.mxu0 0
        %1605 = vmatpush1.bf16.xpose.msra.mxu0 0
        %1606 = vmatprep.subr.bf16.mxu0 0
        %1607 = vmatpush1.bf16.xpose.msra.mxu0 0
        %1608 = vmatprep.subr.bf16.mxu0 0
        %1609 = vmatpush1.bf16.xpose.msra.mxu0 0
        %1610 = vmatprep.subr.bf16.mxu0 0
        %1611 = vmatpush1.bf16.xpose.msra.mxu0 0
        %1612 = vmatprep.subr.bf16.mxu0 0
        %1613 = vmatpush1.bf16.xpose.msra.mxu0 0
        %1614 = vmatprep.subr.bf16.mxu0 0
        %1615 = vmatpush1.bf16.xpose.msra.mxu0 0
        %1616 = vmatprep.subr.bf16.mxu0 0
        %1617 = vmatpush1.bf16.xpose.msra.mxu0 0
        %1618 = vmatprep.mubr.bf16.mxu0 0
        %1619 = vmatmul.mubr.bf16.gmra.mrb[0].mxu0 %v1581
        %v1620 = vpop.f32.mrb[0].mxu0
        %v1621 = vadd.f32 0.0, %v1620
        %v1622 = vpop.f32.mrb[0].mxu0
        %v1623 = vpop.f32.mrb[0].mxu0
        %v1624 = vpop.f32.mrb[0].mxu0
        %1625 = vdwg.mxu0
        %v1627 = vsel %vm1487, %v894, 0
        %v1630 = vsel %vm1487, %v1190, 0
        %1632 = vmatprep.subr.bf16.mxu0 0
        %1633 = vmatpush1.bf16.xpose.msra.mxu0 %v1630
        %1634 = vmatprep.subr.bf16.mxu0 0
        %1635 = vmatpush1.bf16.xpose.msra.mxu0 0
        %1636 = vmatprep.subr.bf16.mxu0 0
        %1637 = vmatpush1.bf16.xpose.msra.mxu0 0
        %1638 = vmatprep.subr.bf16.mxu0 0
        %1639 = vmatpush1.bf16.xpose.msra.mxu0 0
        %1640 = vmatprep.subr.bf16.mxu0 0
        %1641 = vmatpush1.bf16.xpose.msra.mxu0 0
        %1642 = vmatprep.subr.bf16.mxu0 0
        %1643 = vmatpush1.bf16.xpose.msra.mxu0 0
        %1644 = vmatprep.subr.bf16.mxu0 0
        %1645 = vmatpush1.bf16.xpose.msra.mxu0 0
        %1646 = vmatprep.subr.bf16.mxu0 0
        %1647 = vmatpush1.bf16.xpose.msra.mxu0 0
        %1648 = vmatprep.subr.bf16.mxu0 0
        %1649 = vmatpush1.bf16.xpose.msra.mxu0 0
        %1650 = vmatprep.subr.bf16.mxu0 0
        %1651 = vmatpush1.bf16.xpose.msra.mxu0 0
        %1652 = vmatprep.subr.bf16.mxu0 0
        %1653 = vmatpush1.bf16.xpose.msra.mxu0 0
        %1654 = vmatprep.subr.bf16.mxu0 0
        %1655 = vmatpush1.bf16.xpose.msra.mxu0 0
        %1656 = vmatprep.subr.bf16.mxu0 0
        %1657 = vmatpush1.bf16.xpose.msra.mxu0 0
        %1658 = vmatprep.subr.bf16.mxu0 0
        %1659 = vmatpush1.bf16.xpose.msra.mxu0 0
        %1660 = vmatprep.subr.bf16.mxu0 0
        %1661 = vmatpush1.bf16.xpose.msra.mxu0 0
        %1662 = vmatprep.subr.bf16.mxu0 0
        %1663 = vmatpush1.bf16.xpose.msra.mxu0 0
        %1664 = vmatprep.mubr.bf16.mxu0 0
        %1665 = vmatmul.mubr.bf16.gmra.mrb[0].mxu0 %v1627
        %v1666 = vpop.f32.mrb[0].mxu0
        %v1667 = vadd.f32 0.0, %v1666
        %v1668 = vpop.f32.mrb[0].mxu0
        %v1669 = vpop.f32.mrb[0].mxu0
        %v1670 = vpop.f32.mrb[0].mxu0
        %1671 = vdwg.mxu0
        %vm1672 = vcmask 130048
        %v1673 = vsel %vm1672, %v1529, -inf
        %1674 = vmax.xlane.f32.xlu0 %v1673
        %v1675 = vpop.xlane.xlu0 %1674
        %v1676 = vsel %vm1672, %v1575, -inf
        %1677 = vmax.xlane.f32.xlu0 %v1676
        %v1678 = vpop.xlane.xlu0 %1677
        %v1679 = vsel %vm1672, %v1621, -inf
        %1680 = vmax.xlane.f32.xlu0 %v1679
        %v1681 = vpop.xlane.xlu0 %1680
        %v1682 = vsel %vm1672, %v1667, -inf
        %1683 = vmax.xlane.f32.xlu0 %v1682
        %v1684 = vpop.xlane.xlu0 %1683
        %v1685 = vsub.f32 %v1529, %v1675
        %v1686 = vsub.f32 %v1575, %v1678
        %v1687 = vsub.f32 %v1621, %v1681
        %v1688 = vsub.f32 %v1667, %v1684
        %v1689 = vmul.f32 %v1685, 1.442695
        %v1690 = vpow.pop %v1689
        %v1691 = vmul.f32 %v1686, 1.442695
        %v1692 = vpow.pop %v1691
        %v1693 = vmul.f32 %v1687, 1.442695
        %v1694 = vpow.pop %v1693
        %v1695 = vmul.f32 %v1688, 1.442695
        %v1696 = vpow.pop %v1695
        %v1697 = vsel %vm1672, %v1690, 0.0
        %1698 = vadd.xlane.f32.xlu0 %v1697
        %v1699 = vpop.xlane.xlu0 %1698
        %v1700 = vsel %vm1672, %v1692, 0.0
        %1701 = vadd.xlane.f32.xlu0 %v1700
        %v1702 = vpop.xlane.xlu0 %1701
        %v1703 = vsel %vm1672, %v1694, 0.0
        %1704 = vadd.xlane.f32.xlu0 %v1703
        %v1705 = vpop.xlane.xlu0 %1704
        %v1706 = vsel %vm1672, %v1696, 0.0
        %1707 = vadd.xlane.f32.xlu0 %v1706
        %v1708 = vpop.xlane.xlu0 %1707
        %v1709 = vrcp.pop %v1699
        %v1710 = vrcp.pop %v1702
        %v1711 = vrcp.pop %v1705
        %v1712 = vrcp.pop %v1708
        %v1713 = vmul.f32 %v1690, %v1709
        %v1714 = vmul.f32 %v1692, %v1710
        %v1715 = vmul.f32 %v1694, %v1711
        %v1716 = vmul.f32 %v1696, %v1712
        %v1717 = vpack.c.bf16 %v1713, %v1713
        %v1718 = vpack.c.bf16 %v1714, %v1714
        %v1719 = vpack.c.bf16 %v1715, %v1715
        %v1720 = vpack.c.bf16 %v1716, %v1716
        %v1722 = vsel %vm1672, %v1717, 0
        %1724 = vmatprep.subr.bf16.mxu0 0
        %1725 = vmatpush1.bf16.msra.mxu0 %v1483
        %1726 = vmatprep.subr.bf16.mxu0 0
        %1727 = vmatpush1.bf16.msra.mxu0 0
        %1728 = vmatprep.subr.bf16.mxu0 0
        %1729 = vmatpush1.bf16.msra.mxu0 0
        %1730 = vmatprep.subr.bf16.mxu0 0
        %1731 = vmatpush1.bf16.msra.mxu0 0
        %1732 = vmatprep.subr.bf16.mxu0 0
        %1733 = vmatpush1.bf16.msra.mxu0 0
        %1734 = vmatprep.subr.bf16.mxu0 0
        %1735 = vmatpush1.bf16.msra.mxu0 0
        %1736 = vmatprep.subr.bf16.mxu0 0
        %1737 = vmatpush1.bf16.msra.mxu0 0
        %1738 = vmatprep.subr.bf16.mxu0 0
        %1739 = vmatpush1.bf16.msra.mxu0 0
        %1740 = vmatprep.subr.bf16.mxu0 0
        %1741 = vmatpush1.bf16.msra.mxu0 0
        %1742 = vmatprep.subr.bf16.mxu0 0
        %1743 = vmatpush1.bf16.msra.mxu0 0
        %1744 = vmatprep.subr.bf16.mxu0 0
        %1745 = vmatpush1.bf16.msra.mxu0 0
        %1746 = vmatprep.subr.bf16.mxu0 0
        %1747 = vmatpush1.bf16.msra.mxu0 0
        %1748 = vmatprep.subr.bf16.mxu0 0
        %1749 = vmatpush1.bf16.msra.mxu0 0
        %1750 = vmatprep.subr.bf16.mxu0 0
        %1751 = vmatpush1.bf16.msra.mxu0 0
        %1752 = vmatprep.subr.bf16.mxu0 0
        %1753 = vmatpush1.bf16.msra.mxu0 0
        %1754 = vmatprep.subr.bf16.mxu0 0
        %1755 = vmatpush1.bf16.msra.mxu0 0
        %1756 = vmatprep.mubr.bf16.mxu0 0
        %1757 = vmatmul.mubr.bf16.gmra.mrb[0].mxu0 %v1722
        %v1758 = vpop.f32.mrb[0].mxu0
        %v1759 = vadd.f32 0.0, %v1758
        %v1760 = vpop.f32.mrb[0].mxu0
        %v1761 = vpop.f32.mrb[0].mxu0
        %v1762 = vpop.f32.mrb[0].mxu0
        %1763 = vdwg.mxu0
        %v1765 = vsel %vm1672, %v1718, 0
        %1767 = vmatprep.subr.bf16.mxu0 0
        %1768 = vmatpush1.bf16.msra.mxu0 %v1484
        %1769 = vmatprep.subr.bf16.mxu0 0
        %1770 = vmatpush1.bf16.msra.mxu0 0
        %1771 = vmatprep.subr.bf16.mxu0 0
        %1772 = vmatpush1.bf16.msra.mxu0 0
        %1773 = vmatprep.subr.bf16.mxu0 0
        %1774 = vmatpush1.bf16.msra.mxu0 0
        %1775 = vmatprep.subr.bf16.mxu0 0
        %1776 = vmatpush1.bf16.msra.mxu0 0
        %1777 = vmatprep.subr.bf16.mxu0 0
        %1778 = vmatpush1.bf16.msra.mxu0 0
        %1779 = vmatprep.subr.bf16.mxu0 0
        %1780 = vmatpush1.bf16.msra.mxu0 0
        %1781 = vmatprep.subr.bf16.mxu0 0
        %1782 = vmatpush1.bf16.msra.mxu0 0
        %1783 = vmatprep.subr.bf16.mxu0 0
        %1784 = vmatpush1.bf16.msra.mxu0 0
        %1785 = vmatprep.subr.bf16.mxu0 0
        %1786 = vmatpush1.bf16.msra.mxu0 0
        %1787 = vmatprep.subr.bf16.mxu0 0
        %1788 = vmatpush1.bf16.msra.mxu0 0
        %1789 = vmatprep.subr.bf16.mxu0 0
        %1790 = vmatpush1.bf16.msra.mxu0 0
        %1791 = vmatprep.subr.bf16.mxu0 0
        %1792 = vmatpush1.bf16.msra.mxu0 0
        %1793 = vmatprep.subr.bf16.mxu0 0
        %1794 = vmatpush1.bf16.msra.mxu0 0
        %1795 = vmatprep.subr.bf16.mxu0 0
        %1796 = vmatpush1.bf16.msra.mxu0 0
        %1797 = vmatprep.subr.bf16.mxu0 0
        %1798 = vmatpush1.bf16.msra.mxu0 0
        %1799 = vmatprep.mubr.bf16.mxu0 0
        %1800 = vmatmul.mubr.bf16.gmra.mrb[0].mxu0 %v1765
        %v1801 = vpop.f32.mrb[0].mxu0
        %v1802 = vadd.f32 0.0, %v1801
        %v1803 = vpop.f32.mrb[0].mxu0
        %v1804 = vpop.f32.mrb[0].mxu0
        %v1805 = vpop.f32.mrb[0].mxu0
        %1806 = vdwg.mxu0
        %v1808 = vsel %vm1672, %v1719, 0
        %1810 = vmatprep.subr.bf16.mxu0 0
        %1811 = vmatpush1.bf16.msra.mxu0 %v1485
        %1812 = vmatprep.subr.bf16.mxu0 0
        %1813 = vmatpush1.bf16.msra.mxu0 0
        %1814 = vmatprep.subr.bf16.mxu0 0
        %1815 = vmatpush1.bf16.msra.mxu0 0
        %1816 = vmatprep.subr.bf16.mxu0 0
        %1817 = vmatpush1.bf16.msra.mxu0 0
        %1818 = vmatprep.subr.bf16.mxu0 0
        %1819 = vmatpush1.bf16.msra.mxu0 0
        %1820 = vmatprep.subr.bf16.mxu0 0
        %1821 = vmatpush1.bf16.msra.mxu0 0
        %1822 = vmatprep.subr.bf16.mxu0 0
        %1823 = vmatpush1.bf16.msra.mxu0 0
        %1824 = vmatprep.subr.bf16.mxu0 0
        %1825 = vmatpush1.bf16.msra.mxu0 0
        %1826 = vmatprep.subr.bf16.mxu0 0
        %1827 = vmatpush1.bf16.msra.mxu0 0
        %1828 = vmatprep.subr.bf16.mxu0 0
        %1829 = vmatpush1.bf16.msra.mxu0 0
        %1830 = vmatprep.subr.bf16.mxu0 0
        %1831 = vmatpush1.bf16.msra.mxu0 0
        %1832 = vmatprep.subr.bf16.mxu0 0
        %1833 = vmatpush1.bf16.msra.mxu0 0
        %1834 = vmatprep.subr.bf16.mxu0 0
        %1835 = vmatpush1.bf16.msra.mxu0 0
        %1836 = vmatprep.subr.bf16.mxu0 0
        %1837 = vmatpush1.bf16.msra.mxu0 0
        %1838 = vmatprep.subr.bf16.mxu0 0
        %1839 = vmatpush1.bf16.msra.mxu0 0
        %1840 = vmatprep.subr.bf16.mxu0 0
        %1841 = vmatpush1.bf16.msra.mxu0 0
        %1842 = vmatprep.mubr.bf16.mxu0 0
        %1843 = vmatmul.mubr.bf16.gmra.mrb[0].mxu0 %v1808
        %v1844 = vpop.f32.mrb[0].mxu0
        %v1845 = vadd.f32 0.0, %v1844
        %v1846 = vpop.f32.mrb[0].mxu0
        %v1847 = vpop.f32.mrb[0].mxu0
        %v1848 = vpop.f32.mrb[0].mxu0
        %1849 = vdwg.mxu0
        %v1851 = vsel %vm1672, %v1720, 0
        %1853 = vmatprep.subr.bf16.mxu0 0
        %1854 = vmatpush1.bf16.msra.mxu0 %v1486
        %1855 = vmatprep.subr.bf16.mxu0 0
        %1856 = vmatpush1.bf16.msra.mxu0 0
        %1857 = vmatprep.subr.bf16.mxu0 0
        %1858 = vmatpush1.bf16.msra.mxu0 0
        %1859 = vmatprep.subr.bf16.mxu0 0
        %1860 = vmatpush1.bf16.msra.mxu0 0
        %1861 = vmatprep.subr.bf16.mxu0 0
        %1862 = vmatpush1.bf16.msra.mxu0 0
        %1863 = vmatprep.subr.bf16.mxu0 0
        %1864 = vmatpush1.bf16.msra.mxu0 0
        %1865 = vmatprep.subr.bf16.mxu0 0
        %1866 = vmatpush1.bf16.msra.mxu0 0
        %1867 = vmatprep.subr.bf16.mxu0 0
        %1868 = vmatpush1.bf16.msra.mxu0 0
        %1869 = vmatprep.subr.bf16.mxu0 0
        %1870 = vmatpush1.bf16.msra.mxu0 0
        %1871 = vmatprep.subr.bf16.mxu0 0
        %1872 = vmatpush1.bf16.msra.mxu0 0
        %1873 = vmatprep.subr.bf16.mxu0 0
        %1874 = vmatpush1.bf16.msra.mxu0 0
        %1875 = vmatprep.subr.bf16.mxu0 0
        %1876 = vmatpush1.bf16.msra.mxu0 0
        %1877 = vmatprep.subr.bf16.mxu0 0
        %1878 = vmatpush1.bf16.msra.mxu0 0
        %1879 = vmatprep.subr.bf16.mxu0 0
        %1880 = vmatpush1.bf16.msra.mxu0 0
        %1881 = vmatprep.subr.bf16.mxu0 0
        %1882 = vmatpush1.bf16.msra.mxu0 0
        %1883 = vmatprep.subr.bf16.mxu0 0
        %1884 = vmatpush1.bf16.msra.mxu0 0
        %1885 = vmatprep.mubr.bf16.mxu0 0
        %1886 = vmatmul.mubr.bf16.gmra.mrb[0].mxu0 %v1851
        %v1887 = vpop.f32.mrb[0].mxu0
        %v1888 = vadd.f32 0.0, %v1887
        %v1889 = vpop.f32.mrb[0].mxu0
        %v1890 = vpop.f32.mrb[0].mxu0
        %v1891 = vpop.f32.mrb[0].mxu0
        %1892 = vdwg.mxu0
        %v1893 = vcombine.low %v1759, %v1845
        %v1894 = vcombine.high %v1759, %v1845
        %v1896 = vunpack.c.l.s4 1983009808
        %v1897 = vunpack.c.0.s8 %v1896
        %v1898 = vlaneseq
        %v1899 = vshrl.u32 %v1898, 7
        %v1900 = vsub.s32 %v1897, %v1899
        %v1901 = vrot.slane %v1893, %v1900
        %v1903 = vunpack.c.l.s4 1983009808
        %v1904 = vunpack.c.0.s8 %v1903
        %v1905 = vlaneseq
        %v1906 = vshrl.u32 %v1905, 7
        %v1907 = vsub.s32 %v1904, %v1906
        %v1908 = vrot.slane %v1894, %v1907
        %v1909 = vcombine.low %v1802, %v1888
        %v1910 = vcombine.high %v1802, %v1888
        %v1912 = vunpack.c.l.s4 1983009808
        %v1913 = vunpack.c.0.s8 %v1912
        %v1914 = vlaneseq
        %v1915 = vshrl.u32 %v1914, 7
        %v1916 = vsub.s32 %v1913, %v1915
        %v1917 = vrot.slane %v1909, %v1916
        %v1919 = vunpack.c.l.s4 1983009808
        %v1920 = vunpack.c.0.s8 %v1919
        %v1921 = vlaneseq
        %v1922 = vshrl.u32 %v1921, 7
        %v1923 = vsub.s32 %v1920, %v1922
        %v1924 = vrot.slane %v1910, %v1923
        %v1925 = vcombine.low %v1901, %v1917
        %v1926 = vcombine.high %v1901, %v1917
        %v1928 = vunpack.c.l.s4 1934713408
        %v1929 = vunpack.c.0.s8 %v1928
        %v1930 = vlaneseq
        %v1931 = vshrl.u32 %v1930, 7
        %v1932 = vsub.s32 %v1929, %v1931
        %v1933 = vrot.slane %v1925, %v1932
        %v1935 = vunpack.c.l.s4 1934713408
        %v1936 = vunpack.c.0.s8 %v1935
        %v1937 = vlaneseq
        %v1938 = vshrl.u32 %v1937, 7
        %v1939 = vsub.s32 %v1936, %v1938
        %v1940 = vrot.slane %v1926, %v1939
        %v1941 = vcombine.low %v1908, %v1924
        %v1942 = vcombine.high %v1908, %v1924
        %v1944 = vunpack.c.l.s4 1934713408
        %v1945 = vunpack.c.0.s8 %v1944
        %v1946 = vlaneseq
        %v1947 = vshrl.u32 %v1946, 7
        %v1948 = vsub.s32 %v1945, %v1947
        %v1949 = vrot.slane %v1941, %v1948
        %v1951 = vunpack.c.l.s4 1934713408
        %v1952 = vunpack.c.0.s8 %v1951
        %v1953 = vlaneseq
        %v1954 = vshrl.u32 %v1953, 7
        %v1955 = vsub.s32 %v1952, %v1954
        %v1956 = vrot.slane %v1942, %v1955
        %v1957 = vcombine.high %v1933, 0.0
        %v1958 = vcombine.high %v1940, 0.0
        %v1959 = vcombine.high %v1949, 0.0
        %v1960 = vcombine.high %v1956, 0.0
        %v1961 = vcombine.low %v1933, %v1940
        %v1963 = vunpack.c.l.s4 1983009808
        %v1964 = vunpack.c.0.s8 %v1963
        %v1965 = vlaneseq
        %v1966 = vshrl.u32 %v1965, 7
        %v1967 = vsub.s32 %v1964, %v1966
        %v1968 = vrot.slane %v1961, %v1967
        %v1969 = vcombine.low %v1957, %v1958
        %v1971 = vunpack.c.l.s4 1983009808
        %v1972 = vunpack.c.0.s8 %v1971
        %v1973 = vlaneseq
        %v1974 = vshrl.u32 %v1973, 7
        %v1975 = vsub.s32 %v1972, %v1974
        %v1976 = vrot.slane %v1969, %v1975
        %v1977 = vcombine.low %v1949, %v1956
        %v1979 = vunpack.c.l.s4 1983009808
        %v1980 = vunpack.c.0.s8 %v1979
        %v1981 = vlaneseq
        %v1982 = vshrl.u32 %v1981, 7
        %v1983 = vsub.s32 %v1980, %v1982
        %v1984 = vrot.slane %v1977, %v1983
        %v1985 = vcombine.low %v1959, %v1960
        %v1987 = vunpack.c.l.s4 1983009808
        %v1988 = vunpack.c.0.s8 %v1987
        %v1989 = vlaneseq
        %v1990 = vshrl.u32 %v1989, 7
        %v1991 = vsub.s32 %v1988, %v1990
        %v1992 = vrot.slane %v1985, %v1991
        %v1993 = vcombine.low %v1968, %v1976
        %v1994 = vcombine.high %v1968, %v1976
        %v1996 = vunpack.c.l.s4 1934713408
        %v1997 = vunpack.c.0.s8 %v1996
        %v1998 = vlaneseq
        %v1999 = vshrl.u32 %v1998, 7
        %v2000 = vsub.s32 %v1997, %v1999
        %v2001 = vrot.slane %v1993, %v2000
        %v2003 = vunpack.c.l.s4 1934713408
        %v2004 = vunpack.c.0.s8 %v2003
        %v2005 = vlaneseq
        %v2006 = vshrl.u32 %v2005, 7
        %v2007 = vsub.s32 %v2004, %v2006
        %v2008 = vrot.slane %v1994, %v2007
        %v2009 = vcombine.low %v1984, %v1992
        %v2010 = vcombine.high %v1984, %v1992
        %v2012 = vunpack.c.l.s4 1934713408
        %v2013 = vunpack.c.0.s8 %v2012
        %v2014 = vlaneseq
        %v2015 = vshrl.u32 %v2014, 7
        %v2016 = vsub.s32 %v2013, %v2015
        %v2017 = vrot.slane %v2009, %v2016
        %v2019 = vunpack.c.l.s4 1934713408
        %v2020 = vunpack.c.0.s8 %v2019
        %v2021 = vlaneseq
        %v2022 = vshrl.u32 %v2021, 7
        %v2023 = vsub.s32 %v2020, %v2022
        %v2024 = vrot.slane %v2010, %v2023
        %v2025 = vcombine.low %v2001, %v2017
        %v2026 = vcombine.high %v2001, %v2017
        %v2027 = vcombine.low %v2008, %v2024
        %v2028 = vcombine.high %v2008, %v2024
        %2030 = vrot.lane.b32.xlu0 %v2026, 8
        %v2031 = vpop.permute.xlu0 %2030
        %2034 = vrot.lane.b32.xlu0 %v2027, 16
        %v2035 = vpop.permute.xlu0 %2034
        %2038 = vrot.lane.b32.xlu0 %v2028, 24
        %v2039 = vpop.permute.xlu0 %2038
        %v2041 = vsel %vm1487, %v2025, %v2031
        %v2042 = vsel %vm1672, %v2041, %v2035
        %vm2043 = vcmask 195584
        %v2044 = vsel %vm2043, %v2042, %v2039
        %v2045 = vpack.c.bf16 %v2044, %v2044
        %v2046 = vlaneseq
        %v2047 = vshrl.u32 %v2046, 7
        %v2048 = vsub.s32 3, %v2047
        %v2049 = vrot.slane %v560, %v2048
        %2050 = vrot.lane.b32.xlu0 %v586, 32
        %v2051 = vpop.permute.xlu0 %2050
        %2052 = vrot.lane.b32.xlu0 %v587, 32
        %v2053 = vpop.permute.xlu0 %2052
        %v2057 = vsel %vm590, %v2045, 0
        %2059 = vmatprep.subr.bf16.mxu0 0
        %2060 = vmatpush1.bf16.msra.mxu0 %v2051
        %2061 = vmatprep.subr.bf16.mxu0 0
        %2062 = vmatpush1.bf16.msra.mxu0 %v2053
        %2063 = vmatprep.subr.bf16.mxu0 0
        %2064 = vmatpush1.bf16.msra.mxu0 0
        %2065 = vmatprep.subr.bf16.mxu0 0
        %2066 = vmatpush1.bf16.msra.mxu0 0
        %2067 = vmatprep.subr.bf16.mxu0 0
        %2068 = vmatpush1.bf16.msra.mxu0 0
        %2069 = vmatprep.subr.bf16.mxu0 0
        %2070 = vmatpush1.bf16.msra.mxu0 0
        %2071 = vmatprep.subr.bf16.mxu0 0
        %2072 = vmatpush1.bf16.msra.mxu0 0
        %2073 = vmatprep.subr.bf16.mxu0 0
        %2074 = vmatpush1.bf16.msra.mxu0 0
        %2075 = vmatprep.subr.bf16.mxu0 0
        %2076 = vmatpush1.bf16.msra.mxu0 0
        %2077 = vmatprep.subr.bf16.mxu0 0
        %2078 = vmatpush1.bf16.msra.mxu0 0
        %2079 = vmatprep.subr.bf16.mxu0 0
        %2080 = vmatpush1.bf16.msra.mxu0 0
        %2081 = vmatprep.subr.bf16.mxu0 0
        %2082 = vmatpush1.bf16.msra.mxu0 0
        %2083 = vmatprep.subr.bf16.mxu0 0
        %2084 = vmatpush1.bf16.msra.mxu0 0
        %2085 = vmatprep.subr.bf16.mxu0 0
        %2086 = vmatpush1.bf16.msra.mxu0 0
        %2087 = vmatprep.subr.bf16.mxu0 0
        %2088 = vmatpush1.bf16.msra.mxu0 0
        %2089 = vmatprep.subr.bf16.mxu0 0
        %2090 = vmatpush1.bf16.msra.mxu0 0
        %2091 = vmatprep.mubr.bf16.mxu0 0
        %2092 = vmatmul.mubr.bf16.gmra.mrb[0].mxu0 %v2057
        %v2093 = vpop.f32.mrb[0].mxu0
        %v2094 = vadd.f32 %v2049, %v2093
        %v2095 = vpop.f32.mrb[0].mxu0
        %v2096 = vpop.f32.mrb[0].mxu0
        %v2097 = vpop.f32.mrb[0].mxu0
        %2098 = vdwg.mxu0
        %v2099 = vadd.f32 %v564, %v2094
        %v2100 = vsel %vm590, %v2099, 0.0
        %2101 = vadd.xlane.f32.xlu0 %v2100
        %v2102 = vpop.xlane.xlu0 %2101
        %v2103 = vrcp.pop 32.0
        %v2104 = vmul.f32 %v2102, %v2103
        %v2105 = vsub.f32 %v2099, %v2104
        %v2106 = vmul.f32 %v2105, %v2105
        %v2107 = vsel %vm590, %v2106, 0.0
        %2108 = vadd.xlane.f32.xlu0 %v2107
        %v2109 = vpop.xlane.xlu0 %2108
        %v2110 = vmul.f32 %v2109, %v2103
        %v2111 = vadd.f32 %v2110, 1e-05
        %v2112 = vrsqrt.pop %v2111
        %v2113 = vmul.f32 %v2105, %v2112
        %v2114 = vlaneseq
        %v2115 = vshrl.u32 %v2114, 7
        %v2116 = vsub.s32 4, %v2115
        %v2117 = vrot.slane %v560, %v2116
        %v2118 = vmul.f32 %v2113, %v2117
        %v2119 = vlaneseq
        %v2120 = vshrl.u32 %v2119, 7
        %v2121 = vsub.s32 5, %v2120
        %v2122 = vrot.slane %v560, %v2121
        %v2123 = vadd.f32 %v2118, %v2122
        %v2124 = vpack.c.bf16 %v2123, %v2123
        %v2125 = vlaneseq
        %v2126 = vshrl.u32 %v2125, 7
        %v2127 = vsub.s32 0, %v2126
        %v2128 = vrot.slane %v563, %v2127
        %v2133 = vunpack.c.l.b16 %v548
        %v2134 = vunpack.c.l.b16 %v549
        %v2135 = vunpack.c.l.b16 %v550
        %v2136 = vunpack.c.l.b16 %v551
        %v2137 = vpack.c.b16 %v2134, %v2133
        %v2138 = vpack.c.b16 %v2136, %v2135
        %v2142 = vsel %vm590, %v2124, 0
        %2144 = vmatprep.subr.bf16.mxu0 0
        %2145 = vmatpush1.bf16.msra.mxu0 %v2137
        %2146 = vmatprep.subr.bf16.mxu0 0
        %2147 = vmatpush1.bf16.msra.mxu0 %v2138
        %2148 = vmatprep.subr.bf16.mxu0 0
        %2149 = vmatpush1.bf16.msra.mxu0 0
        %2150 = vmatprep.subr.bf16.mxu0 0
        %2151 = vmatpush1.bf16.msra.mxu0 0
        %2152 = vmatprep.subr.bf16.mxu0 0
        %2153 = vmatpush1.bf16.msra.mxu0 0
        %2154 = vmatprep.subr.bf16.mxu0 0
        %2155 = vmatpush1.bf16.msra.mxu0 0
        %2156 = vmatprep.subr.bf16.mxu0 0
        %2157 = vmatpush1.bf16.msra.mxu0 0
        %2158 = vmatprep.subr.bf16.mxu0 0
        %2159 = vmatpush1.bf16.msra.mxu0 0
        %2160 = vmatprep.subr.bf16.mxu0 0
        %2161 = vmatpush1.bf16.msra.mxu0 0
        %2162 = vmatprep.subr.bf16.mxu0 0
        %2163 = vmatpush1.bf16.msra.mxu0 0
        %2164 = vmatprep.subr.bf16.mxu0 0
        %2165 = vmatpush1.bf16.msra.mxu0 0
        %2166 = vmatprep.subr.bf16.mxu0 0
        %2167 = vmatpush1.bf16.msra.mxu0 0
        %2168 = vmatprep.subr.bf16.mxu0 0
        %2169 = vmatpush1.bf16.msra.mxu0 0
        %2170 = vmatprep.subr.bf16.mxu0 0
        %2171 = vmatpush1.bf16.msra.mxu0 0
        %2172 = vmatprep.subr.bf16.mxu0 0
        %2173 = vmatpush1.bf16.msra.mxu0 0
        %2174 = vmatprep.subr.bf16.mxu0 0
        %2175 = vmatpush1.bf16.msra.mxu0 0
        %2176 = vmatprep.mubr.bf16.mxu0 0
        %2177 = vmatmul.mubr.bf16.gmra.mrb[0].mxu0 %v2142
        %v2178 = vpop.f32.mrb[0].mxu0
        %v2179 = vadd.f32 %v2128, %v2178
        %v2180 = vpop.f32.mrb[0].mxu0
        %v2181 = vpop.f32.mrb[0].mxu0
        %v2182 = vpop.f32.mrb[0].mxu0
        %2183 = vdwg.mxu0
        %v2184 = vmax.f32 %v2179, 0.0
        %v2185 = vpack.c.bf16 %v2184, %v2184
        %v2186 = vlaneseq
        %v2187 = vshrl.u32 %v2186, 7
        %v2188 = vsub.s32 6, %v2187
        %v2189 = vrot.slane %v560, %v2188
        %v2198 = vunpack.c.l.b16 %v552
        %v2199 = vunpack.c.l.b16 %v553
        %v2200 = vunpack.c.l.b16 %v554
        %v2201 = vunpack.c.l.b16 %v555
        %v2202 = vunpack.c.l.b16 %v556
        %v2203 = vunpack.c.l.b16 %v557
        %v2204 = vunpack.c.l.b16 %v558
        %v2205 = vunpack.c.l.b16 %v559
        %v2206 = vpack.c.b16 %v2199, %v2198
        %v2207 = vpack.c.b16 %v2201, %v2200
        %v2208 = vpack.c.b16 %v2203, %v2202
        %v2209 = vpack.c.b16 %v2205, %v2204
        %vm2214 = vcmask 523264
        %v2216 = vsel %vm2214, %v2185, 0
        %2218 = vmatprep.subr.bf16.mxu0 0
        %2219 = vmatpush1.bf16.msra.mxu0 %v2206
        %2220 = vmatprep.subr.bf16.mxu0 0
        %2221 = vmatpush1.bf16.msra.mxu0 %v2207
        %2222 = vmatprep.subr.bf16.mxu0 0
        %2223 = vmatpush1.bf16.msra.mxu0 %v2208
        %2224 = vmatprep.subr.bf16.mxu0 0
        %2225 = vmatpush1.bf16.msra.mxu0 %v2209
        %2226 = vmatprep.subr.bf16.mxu0 0
        %2227 = vmatpush1.bf16.msra.mxu0 0
        %2228 = vmatprep.subr.bf16.mxu0 0
        %2229 = vmatpush1.bf16.msra.mxu0 0
        %2230 = vmatprep.subr.bf16.mxu0 0
        %2231 = vmatpush1.bf16.msra.mxu0 0
        %2232 = vmatprep.subr.bf16.mxu0 0
        %2233 = vmatpush1.bf16.msra.mxu0 0
        %2234 = vmatprep.subr.bf16.mxu0 0
        %2235 = vmatpush1.bf16.msra.mxu0 0
        %2236 = vmatprep.subr.bf16.mxu0 0
        %2237 = vmatpush1.bf16.msra.mxu0 0
        %2238 = vmatprep.subr.bf16.mxu0 0
        %2239 = vmatpush1.bf16.msra.mxu0 0
        %2240 = vmatprep.subr.bf16.mxu0 0
        %2241 = vmatpush1.bf16.msra.mxu0 0
        %2242 = vmatprep.subr.bf16.mxu0 0
        %2243 = vmatpush1.bf16.msra.mxu0 0
        %2244 = vmatprep.subr.bf16.mxu0 0
        %2245 = vmatpush1.bf16.msra.mxu0 0
        %2246 = vmatprep.subr.bf16.mxu0 0
        %2247 = vmatpush1.bf16.msra.mxu0 0
        %2248 = vmatprep.subr.bf16.mxu0 0
        %2249 = vmatpush1.bf16.msra.mxu0 0
        %2250 = vmatprep.mubr.bf16.mxu0 0
        %2251 = vmatmul.mubr.bf16.gmra.mrb[0].mxu0 %v2216
        %v2252 = vpop.f32.mrb[0].mxu0
        %v2253 = vadd.f32 %v2189, %v2252
        %v2254 = vpop.f32.mrb[0].mxu0
        %v2255 = vpop.f32.mrb[0].mxu0
        %v2256 = vpop.f32.mrb[0].mxu0
        %2257 = vdwg.mxu0
        %v2258 = vadd.f32 %v2123, %v2253
        %v2259 = vsel %vm590, %v2258, 0.0
        %2260 = vadd.xlane.f32.xlu0 %v2259
        %v2261 = vpop.xlane.xlu0 %2260
        %v2262 = vmul.f32 %v2261, %v2103
        %v2263 = vsub.f32 %v2258, %v2262
        %v2264 = vmul.f32 %v2263, %v2263
        %v2265 = vsel %vm590, %v2264, 0.0
        %2266 = vadd.xlane.f32.xlu0 %v2265
        %v2267 = vpop.xlane.xlu0 %2266
        %v2268 = vmul.f32 %v2267, %v2103
        %v2269 = vadd.f32 %v2268, 1e-05
        %v2270 = vrsqrt.pop %v2269
        %v2271 = vmul.f32 %v2263, %v2270
        %v2272 = vlaneseq
        %v2273 = vshrl.u32 %v2272, 7
        %v2274 = vsub.s32 7, %v2273
        %v2275 = vrot.slane %v560, %v2274
        %v2276 = vmul.f32 %v2271, %v2275
        %v2277 = vlaneseq
        %v2278 = vshrl.u32 %v2277, 7
        %v2279 = vsub.s32 0, %v2278
        %v2280 = vrot.slane %v561, %v2279
        %v2281 = vadd.f32 %v2276, %v2280
        %v2282 = vadd.f32 %v2281, %v567
        %v2283 = vlaneseq
        %v2284 = vshrl.u32 %v2283, 7
        %v2285 = vsub.s32 1, %v2284
        %v2286 = vrot.slane %v561, %v2285
        %v2287 = vunpack.c.h.b16 %v544
        %v2288 = vunpack.c.h.b16 %v545
        %v2289 = vunpack.c.h.b16 %v546
        %v2290 = vunpack.c.h.b16 %v547
        %v2291 = vpack.c.b16 %v2288, %v2287
        %v2292 = vpack.c.b16 %v2290, %v2289
        %2295 = vmatprep.subr.bf16.mxu0 0
        %2296 = vmatpush1.bf16.msra.mxu0 %v2291
        %2297 = vmatprep.subr.bf16.mxu0 0
        %2298 = vmatpush1.bf16.msra.mxu0 %v2292
        %2299 = vmatprep.subr.bf16.mxu0 0
        %2300 = vmatpush1.bf16.msra.mxu0 0
        %2301 = vmatprep.subr.bf16.mxu0 0
        %2302 = vmatpush1.bf16.msra.mxu0 0
        %2303 = vmatprep.subr.bf16.mxu0 0
        %2304 = vmatpush1.bf16.msra.mxu0 0
        %2305 = vmatprep.subr.bf16.mxu0 0
        %2306 = vmatpush1.bf16.msra.mxu0 0
        %2307 = vmatprep.subr.bf16.mxu0 0
        %2308 = vmatpush1.bf16.msra.mxu0 0
        %2309 = vmatprep.subr.bf16.mxu0 0
        %2310 = vmatpush1.bf16.msra.mxu0 0
        %2311 = vmatprep.subr.bf16.mxu0 0
        %2312 = vmatpush1.bf16.msra.mxu0 0
        %2313 = vmatprep.subr.bf16.mxu0 0
        %2314 = vmatpush1.bf16.msra.mxu0 0
        %2315 = vmatprep.subr.bf16.mxu0 0
        %2316 = vmatpush1.bf16.msra.mxu0 0
        %2317 = vmatprep.subr.bf16.mxu0 0
        %2318 = vmatpush1.bf16.msra.mxu0 0
        %2319 = vmatprep.subr.bf16.mxu0 0
        %2320 = vmatpush1.bf16.msra.mxu0 0
        %2321 = vmatprep.subr.bf16.mxu0 0
        %2322 = vmatpush1.bf16.msra.mxu0 0
        %2323 = vmatprep.subr.bf16.mxu0 0
        %2324 = vmatpush1.bf16.msra.mxu0 0
        %2325 = vmatprep.subr.bf16.mxu0 0
        %2326 = vmatpush1.bf16.msra.mxu0 0
        %2327 = vmatprep.mubr.bf16.mxu0 0
        %2328 = vmatmul.mubr.bf16.gmra.mrb[0].mxu0 %v647
        %v2329 = vpop.f32.mrb[0].mxu0
        %v2330 = vadd.f32 %v2286, %v2329
        %v2331 = vpop.f32.mrb[0].mxu0
        %v2332 = vpop.f32.mrb[0].mxu0
        %v2333 = vadd.f32 %v2286, %v2332
        %v2334 = vpop.f32.mrb[0].mxu0
        %2335 = vdwg.mxu0
        %v2336 = vmul.f32 %v2330, 0.35355338
        %v2337 = vmul.f32 %v2333, 0.35355338
        %v2338 = vpack.c.bf16 %v2282, %v2282
        %v2339 = vlaneseq
        %v2340 = vshrl.u32 %v2339, 7
        %v2341 = vsub.s32 2, %v2340
        %v2342 = vrot.slane %v561, %v2341
        %2343 = vrot.lane.b32.xlu0 %v2291, 96
        %v2344 = vpop.permute.xlu0 %2343
        %2345 = vrot.lane.b32.xlu0 %v2292, 96
        %v2346 = vpop.permute.xlu0 %2345
        %v2350 = vsel %vm590, %v2338, 0
        %2352 = vmatprep.subr.bf16.mxu0 0
        %2353 = vmatpush1.bf16.msra.mxu0 %v2344
        %2354 = vmatprep.subr.bf16.mxu0 0
        %2355 = vmatpush1.bf16.msra.mxu0 %v2346
        %2356 = vmatprep.subr.bf16.mxu0 0
        %2357 = vmatpush1.bf16.msra.mxu0 0
        %2358 = vmatprep.subr.bf16.mxu0 0
        %2359 = vmatpush1.bf16.msra.mxu0 0
        %2360 = vmatprep.subr.bf16.mxu0 0
        %2361 = vmatpush1.bf16.msra.mxu0 0
        %2362 = vmatprep.subr.bf16.mxu0 0
        %2363 = vmatpush1.bf16.msra.mxu0 0
        %2364 = vmatprep.subr.bf16.mxu0 0
        %2365 = vmatpush1.bf16.msra.mxu0 0
        %2366 = vmatprep.subr.bf16.mxu0 0
        %2367 = vmatpush1.bf16.msra.mxu0 0
        %2368 = vmatprep.subr.bf16.mxu0 0
        %2369 = vmatpush1.bf16.msra.mxu0 0
        %2370 = vmatprep.subr.bf16.mxu0 0
        %2371 = vmatpush1.bf16.msra.mxu0 0
        %2372 = vmatprep.subr.bf16.mxu0 0
        %2373 = vmatpush1.bf16.msra.mxu0 0
        %2374 = vmatprep.subr.bf16.mxu0 0
        %2375 = vmatpush1.bf16.msra.mxu0 0
        %2376 = vmatprep.subr.bf16.mxu0 0
        %2377 = vmatpush1.bf16.msra.mxu0 0
        %2378 = vmatprep.subr.bf16.mxu0 0
        %2379 = vmatpush1.bf16.msra.mxu0 0
        %2380 = vmatprep.subr.bf16.mxu0 0
        %2381 = vmatpush1.bf16.msra.mxu0 0
        %2382 = vmatprep.subr.bf16.mxu0 0
        %2383 = vmatpush1.bf16.msra.mxu0 0
        %2384 = vmatprep.mubr.bf16.mxu0 0
        %2385 = vmatmul.mubr.bf16.gmra.mrb[0].mxu0 %v2350
        %v2386 = vpop.f32.mrb[0].mxu0
        %v2387 = vadd.f32 %v2342, %v2386
        %v2388 = vpop.f32.mrb[0].mxu0
        %v2389 = vpop.f32.mrb[0].mxu0
        %v2390 = vpop.f32.mrb[0].mxu0
        %2391 = vdwg.mxu0
        %v2392 = vpack.c.bf16 %v2281, %v2281
        %v2393 = vlaneseq
        %v2394 = vshrl.u32 %v2393, 7
        %v2395 = vsub.s32 3, %v2394
        %v2396 = vrot.slane %v561, %v2395
        %2397 = vrot.lane.b32.xlu0 %v2291, 64
        %v2398 = vpop.permute.xlu0 %2397
        %2399 = vrot.lane.b32.xlu0 %v2292, 64
        %v2400 = vpop.permute.xlu0 %2399
        %v2404 = vsel %vm590, %v2392, 0
        %2406 = vmatprep.subr.bf16.mxu0 0
        %2407 = vmatpush1.bf16.msra.mxu0 %v2398
        %2408 = vmatprep.subr.bf16.mxu0 0
        %2409 = vmatpush1.bf16.msra.mxu0 %v2400
        %2410 = vmatprep.subr.bf16.mxu0 0
        %2411 = vmatpush1.bf16.msra.mxu0 0
        %2412 = vmatprep.subr.bf16.mxu0 0
        %2413 = vmatpush1.bf16.msra.mxu0 0
        %2414 = vmatprep.subr.bf16.mxu0 0
        %2415 = vmatpush1.bf16.msra.mxu0 0
        %2416 = vmatprep.subr.bf16.mxu0 0
        %2417 = vmatpush1.bf16.msra.mxu0 0
        %2418 = vmatprep.subr.bf16.mxu0 0
        %2419 = vmatpush1.bf16.msra.mxu0 0
        %2420 = vmatprep.subr.bf16.mxu0 0
        %2421 = vmatpush1.bf16.msra.mxu0 0
        %2422 = vmatprep.subr.bf16.mxu0 0
        %2423 = vmatpush1.bf16.msra.mxu0 0
        %2424 = vmatprep.subr.bf16.mxu0 0
        %2425 = vmatpush1.bf16.msra.mxu0 0
        %2426 = vmatprep.subr.bf16.mxu0 0
        %2427 = vmatpush1.bf16.msra.mxu0 0
        %2428 = vmatprep.subr.bf16.mxu0 0
        %2429 = vmatpush1.bf16.msra.mxu0 0
        %2430 = vmatprep.subr.bf16.mxu0 0
        %2431 = vmatpush1.bf16.msra.mxu0 0
        %2432 = vmatprep.subr.bf16.mxu0 0
        %2433 = vmatpush1.bf16.msra.mxu0 0
        %2434 = vmatprep.subr.bf16.mxu0 0
        %2435 = vmatpush1.bf16.msra.mxu0 0
        %2436 = vmatprep.subr.bf16.mxu0 0
        %2437 = vmatpush1.bf16.msra.mxu0 0
        %2438 = vmatprep.mubr.bf16.mxu0 0
        %2439 = vmatmul.mubr.bf16.gmra.mrb[0].mxu0 %v2404
        %v2440 = vpop.f32.mrb[0].mxu0
        %v2441 = vadd.f32 %v2396, %v2440
        %v2442 = vpop.f32.mrb[0].mxu0
        %v2443 = vpop.f32.mrb[0].mxu0
        %v2444 = vpop.f32.mrb[0].mxu0
        %2445 = vdwg.mxu0
        %2448 = vrot.lane.b32.xlu0 %v2336, 120
        %v2449 = vpop.permute.xlu0 %2448
        %2450 = vrot.lane.b32.xlu0 %v2337, 120
        %v2451 = vpop.permute.xlu0 %2450
        %2454 = vrot.lane.b32.xlu0 %v2336, 112
        %v2455 = vpop.permute.xlu0 %2454
        %2456 = vrot.lane.b32.xlu0 %v2337, 112
        %v2457 = vpop.permute.xlu0 %2456
        %2460 = vrot.lane.b32.xlu0 %v2336, 104
        %v2461 = vpop.permute.xlu0 %2460
        %2462 = vrot.lane.b32.xlu0 %v2337, 104
        %v2463 = vpop.permute.xlu0 %2462
        %v2466 = vcombine.low %v2336, %v2455
        %v2467 = vcombine.high %v2336, %v2455
        %v2469 = vunpack.c.l.s4 1983009808
        %v2470 = vunpack.c.0.s8 %v2469
        %v2471 = vlaneseq
        %v2472 = vshrl.u32 %v2471, 7
        %v2473 = vsub.s32 %v2470, %v2472
        %v2474 = vrot.slane %v2466, %v2473
        %v2476 = vunpack.c.l.s4 1983009808
        %v2477 = vunpack.c.0.s8 %v2476
        %v2478 = vlaneseq
        %v2479 = vshrl.u32 %v2478, 7
        %v2480 = vsub.s32 %v2477, %v2479
        %v2481 = vrot.slane %v2467, %v2480
        %v2482 = vcombine.low %v2449, %v2461
        %v2483 = vcombine.high %v2449, %v2461
        %v2485 = vunpack.c.l.s4 1983009808
        %v2486 = vunpack.c.0.s8 %v2485
        %v2487 = vlaneseq
        %v2488 = vshrl.u32 %v2487, 7
        %v2489 = vsub.s32 %v2486, %v2488
        %v2490 = vrot.slane %v2482, %v2489
        %v2492 = vunpack.c.l.s4 1983009808
        %v2493 = vunpack.c.0.s8 %v2492
        %v2494 = vlaneseq
        %v2495 = vshrl.u32 %v2494, 7
        %v2496 = vsub.s32 %v2493, %v2495
        %v2497 = vrot.slane %v2483, %v2496
        %v2498 = vcombine.low %v2474, %v2490
        %v2499 = vcombine.high %v2474, %v2490
        %v2501 = vunpack.c.l.s4 1934713408
        %v2502 = vunpack.c.0.s8 %v2501
        %v2503 = vlaneseq
        %v2504 = vshrl.u32 %v2503, 7
        %v2505 = vsub.s32 %v2502, %v2504
        %v2506 = vrot.slane %v2498, %v2505
        %v2508 = vunpack.c.l.s4 1934713408
        %v2509 = vunpack.c.0.s8 %v2508
        %v2510 = vlaneseq
        %v2511 = vshrl.u32 %v2510, 7
        %v2512 = vsub.s32 %v2509, %v2511
        %v2513 = vrot.slane %v2499, %v2512
        %v2514 = vcombine.low %v2481, %v2497
        %v2515 = vcombine.high %v2481, %v2497
        %v2517 = vunpack.c.l.s4 1934713408
        %v2518 = vunpack.c.0.s8 %v2517
        %v2519 = vlaneseq
        %v2520 = vshrl.u32 %v2519, 7
        %v2521 = vsub.s32 %v2518, %v2520
        %v2522 = vrot.slane %v2514, %v2521
        %v2524 = vunpack.c.l.s4 1934713408
        %v2525 = vunpack.c.0.s8 %v2524
        %v2526 = vlaneseq
        %v2527 = vshrl.u32 %v2526, 7
        %v2528 = vsub.s32 %v2525, %v2527
        %v2529 = vrot.slane %v2515, %v2528
        %v2530 = vcombine.high %v2506, 0.0
        %v2531 = vcombine.high %v2513, 0.0
        %v2532 = vcombine.high %v2522, 0.0
        %v2533 = vcombine.high %v2529, 0.0
        %v2534 = vcombine.low %v2337, %v2457
        %v2535 = vcombine.high %v2337, %v2457
        %v2537 = vunpack.c.l.s4 1983009808
        %v2538 = vunpack.c.0.s8 %v2537
        %v2539 = vlaneseq
        %v2540 = vshrl.u32 %v2539, 7
        %v2541 = vsub.s32 %v2538, %v2540
        %v2542 = vrot.slane %v2534, %v2541
        %v2544 = vunpack.c.l.s4 1983009808
        %v2545 = vunpack.c.0.s8 %v2544
        %v2546 = vlaneseq
        %v2547 = vshrl.u32 %v2546, 7
        %v2548 = vsub.s32 %v2545, %v2547
        %v2549 = vrot.slane %v2535, %v2548
        %v2550 = vcombine.low %v2451, %v2463
        %v2551 = vcombine.high %v2451, %v2463
        %v2553 = vunpack.c.l.s4 1983009808
        %v2554 = vunpack.c.0.s8 %v2553
        %v2555 = vlaneseq
        %v2556 = vshrl.u32 %v2555, 7
        %v2557 = vsub.s32 %v2554, %v2556
        %v2558 = vrot.slane %v2550, %v2557
        %v2560 = vunpack.c.l.s4 1983009808
        %v2561 = vunpack.c.0.s8 %v2560
        %v2562 = vlaneseq
        %v2563 = vshrl.u32 %v2562, 7
        %v2564 = vsub.s32 %v2561, %v2563
        %v2565 = vrot.slane %v2551, %v2564
        %v2566 = vcombine.low %v2542, %v2558
        %v2567 = vcombine.high %v2542, %v2558
        %v2569 = vunpack.c.l.s4 1934713408
        %v2570 = vunpack.c.0.s8 %v2569
        %v2571 = vlaneseq
        %v2572 = vshrl.u32 %v2571, 7
        %v2573 = vsub.s32 %v2570, %v2572
        %v2574 = vrot.slane %v2566, %v2573
        %v2576 = vunpack.c.l.s4 1934713408
        %v2577 = vunpack.c.0.s8 %v2576
        %v2578 = vlaneseq
        %v2579 = vshrl.u32 %v2578, 7
        %v2580 = vsub.s32 %v2577, %v2579
        %v2581 = vrot.slane %v2567, %v2580
        %v2582 = vcombine.low %v2549, %v2565
        %v2583 = vcombine.high %v2549, %v2565
        %v2585 = vunpack.c.l.s4 1934713408
        %v2586 = vunpack.c.0.s8 %v2585
        %v2587 = vlaneseq
        %v2588 = vshrl.u32 %v2587, 7
        %v2589 = vsub.s32 %v2586, %v2588
        %v2590 = vrot.slane %v2582, %v2589
        %v2592 = vunpack.c.l.s4 1934713408
        %v2593 = vunpack.c.0.s8 %v2592
        %v2594 = vlaneseq
        %v2595 = vshrl.u32 %v2594, 7
        %v2596 = vsub.s32 %v2593, %v2595
        %v2597 = vrot.slane %v2583, %v2596
        %v2598 = vcombine.high %v2574, 0.0
        %v2599 = vcombine.high %v2581, 0.0
        %v2600 = vcombine.high %v2590, 0.0
        %v2601 = vcombine.high %v2597, 0.0
        %v2602 = vcombine.low %v2506, %v2513
        %v2604 = vunpack.c.l.s4 1983009808
        %v2605 = vunpack.c.0.s8 %v2604
        %v2606 = vlaneseq
        %v2607 = vshrl.u32 %v2606, 7
        %v2608 = vsub.s32 %v2605, %v2607
        %v2609 = vrot.slane %v2602, %v2608
        %v2610 = vcombine.low %v2530, %v2531
        %v2612 = vunpack.c.l.s4 1983009808
        %v2613 = vunpack.c.0.s8 %v2612
        %v2614 = vlaneseq
        %v2615 = vshrl.u32 %v2614, 7
        %v2616 = vsub.s32 %v2613, %v2615
        %v2617 = vrot.slane %v2610, %v2616
        %v2618 = vcombine.low %v2522, %v2529
        %v2620 = vunpack.c.l.s4 1983009808
        %v2621 = vunpack.c.0.s8 %v2620
        %v2622 = vlaneseq
        %v2623 = vshrl.u32 %v2622, 7
        %v2624 = vsub.s32 %v2621, %v2623
        %v2625 = vrot.slane %v2618, %v2624
        %v2626 = vcombine.low %v2532, %v2533
        %v2628 = vunpack.c.l.s4 1983009808
        %v2629 = vunpack.c.0.s8 %v2628
        %v2630 = vlaneseq
        %v2631 = vshrl.u32 %v2630, 7
        %v2632 = vsub.s32 %v2629, %v2631
        %v2633 = vrot.slane %v2626, %v2632
        %v2634 = vcombine.low %v2609, %v2617
        %v2635 = vcombine.high %v2609, %v2617
        %v2637 = vunpack.c.l.s4 1934713408
        %v2638 = vunpack.c.0.s8 %v2637
        %v2639 = vlaneseq
        %v2640 = vshrl.u32 %v2639, 7
        %v2641 = vsub.s32 %v2638, %v2640
        %v2642 = vrot.slane %v2634, %v2641
        %v2644 = vunpack.c.l.s4 1934713408
        %v2645 = vunpack.c.0.s8 %v2644
        %v2646 = vlaneseq
        %v2647 = vshrl.u32 %v2646, 7
        %v2648 = vsub.s32 %v2645, %v2647
        %v2649 = vrot.slane %v2635, %v2648
        %v2650 = vcombine.low %v2625, %v2633
        %v2651 = vcombine.high %v2625, %v2633
        %v2653 = vunpack.c.l.s4 1934713408
        %v2654 = vunpack.c.0.s8 %v2653
        %v2655 = vlaneseq
        %v2656 = vshrl.u32 %v2655, 7
        %v2657 = vsub.s32 %v2654, %v2656
        %v2658 = vrot.slane %v2650, %v2657
        %v2660 = vunpack.c.l.s4 1934713408
        %v2661 = vunpack.c.0.s8 %v2660
        %v2662 = vlaneseq
        %v2663 = vshrl.u32 %v2662, 7
        %v2664 = vsub.s32 %v2661, %v2663
        %v2665 = vrot.slane %v2651, %v2664
        %v2666 = vcombine.low %v2642, %v2658
        %v2667 = vcombine.high %v2642, %v2658
        %v2668 = vcombine.low %v2649, %v2665
        %v2669 = vcombine.high %v2649, %v2665
        %v2670 = vcombine.low %v2574, %v2581
        %v2672 = vunpack.c.l.s4 1983009808
        %v2673 = vunpack.c.0.s8 %v2672
        %v2674 = vlaneseq
        %v2675 = vshrl.u32 %v2674, 7
        %v2676 = vsub.s32 %v2673, %v2675
        %v2677 = vrot.slane %v2670, %v2676
        %v2678 = vcombine.low %v2598, %v2599
        %v2680 = vunpack.c.l.s4 1983009808
        %v2681 = vunpack.c.0.s8 %v2680
        %v2682 = vlaneseq
        %v2683 = vshrl.u32 %v2682, 7
        %v2684 = vsub.s32 %v2681, %v2683
        %v2685 = vrot.slane %v2678, %v2684
        %v2686 = vcombine.low %v2590, %v2597
        %v2688 = vunpack.c.l.s4 1983009808
        %v2689 = vunpack.c.0.s8 %v2688
        %v2690 = vlaneseq
        %v2691 = vshrl.u32 %v2690, 7
        %v2692 = vsub.s32 %v2689, %v2691
        %v2693 = vrot.slane %v2686, %v2692
        %v2694 = vcombine.low %v2600, %v2601
        %v2696 = vunpack.c.l.s4 1983009808
        %v2697 = vunpack.c.0.s8 %v2696
        %v2698 = vlaneseq
        %v2699 = vshrl.u32 %v2698, 7
        %v2700 = vsub.s32 %v2697, %v2699
        %v2701 = vrot.slane %v2694, %v2700
        %v2702 = vcombine.low %v2677, %v2685
        %v2703 = vcombine.high %v2677, %v2685
        %v2705 = vunpack.c.l.s4 1934713408
        %v2706 = vunpack.c.0.s8 %v2705
        %v2707 = vlaneseq
        %v2708 = vshrl.u32 %v2707, 7
        %v2709 = vsub.s32 %v2706, %v2708
        %v2710 = vrot.slane %v2702, %v2709
        %v2712 = vunpack.c.l.s4 1934713408
        %v2713 = vunpack.c.0.s8 %v2712
        %v2714 = vlaneseq
        %v2715 = vshrl.u32 %v2714, 7
        %v2716 = vsub.s32 %v2713, %v2715
        %v2717 = vrot.slane %v2703, %v2716
        %v2718 = vcombine.low %v2693, %v2701
        %v2719 = vcombine.high %v2693, %v2701
        %v2721 = vunpack.c.l.s4 1934713408
        %v2722 = vunpack.c.0.s8 %v2721
        %v2723 = vlaneseq
        %v2724 = vshrl.u32 %v2723, 7
        %v2725 = vsub.s32 %v2722, %v2724
        %v2726 = vrot.slane %v2718, %v2725
        %v2728 = vunpack.c.l.s4 1934713408
        %v2729 = vunpack.c.0.s8 %v2728
        %v2730 = vlaneseq
        %v2731 = vshrl.u32 %v2730, 7
        %v2732 = vsub.s32 %v2729, %v2731
        %v2733 = vrot.slane %v2719, %v2732
        %v2734 = vcombine.low %v2710, %v2726
        %v2735 = vcombine.high %v2710, %v2726
        %v2736 = vcombine.low %v2717, %v2733
        %v2737 = vcombine.high %v2717, %v2733
        %v2738 = vpack.c.bf16 %v2734, %v2666
        %v2739 = vpack.c.bf16 %v2735, %v2667
        %v2740 = vpack.c.bf16 %v2736, %v2668
        %v2741 = vpack.c.bf16 %v2737, %v2669
        %2743 = vrot.lane.b32.xlu0 %v2387, 120
        %v2744 = vpop.permute.xlu0 %2743
        %2746 = vrot.lane.b32.xlu0 %v2387, 112
        %v2747 = vpop.permute.xlu0 %2746
        %2749 = vrot.lane.b32.xlu0 %v2387, 104
        %v2750 = vpop.permute.xlu0 %2749
        %v2752 = vcombine.low %v2387, %v2747
        %v2753 = vcombine.high %v2387, %v2747
        %v2755 = vunpack.c.l.s4 1983009808
        %v2756 = vunpack.c.0.s8 %v2755
        %v2757 = vlaneseq
        %v2758 = vshrl.u32 %v2757, 7
        %v2759 = vsub.s32 %v2756, %v2758
        %v2760 = vrot.slane %v2752, %v2759
        %v2762 = vunpack.c.l.s4 1983009808
        %v2763 = vunpack.c.0.s8 %v2762
        %v2764 = vlaneseq
        %v2765 = vshrl.u32 %v2764, 7
        %v2766 = vsub.s32 %v2763, %v2765
        %v2767 = vrot.slane %v2753, %v2766
        %v2768 = vcombine.low %v2744, %v2750
        %v2769 = vcombine.high %v2744, %v2750
        %v2771 = vunpack.c.l.s4 1983009808
        %v2772 = vunpack.c.0.s8 %v2771
        %v2773 = vlaneseq
        %v2774 = vshrl.u32 %v2773, 7
        %v2775 = vsub.s32 %v2772, %v2774
        %v2776 = vrot.slane %v2768, %v2775
        %v2778 = vunpack.c.l.s4 1983009808
        %v2779 = vunpack.c.0.s8 %v2778
        %v2780 = vlaneseq
        %v2781 = vshrl.u32 %v2780, 7
        %v2782 = vsub.s32 %v2779, %v2781
        %v2783 = vrot.slane %v2769, %v2782
        %v2784 = vcombine.low %v2760, %v2776
        %v2785 = vcombine.high %v2760, %v2776
        %v2787 = vunpack.c.l.s4 1934713408
        %v2788 = vunpack.c.0.s8 %v2787
        %v2789 = vlaneseq
        %v2790 = vshrl.u32 %v2789, 7
        %v2791 = vsub.s32 %v2788, %v2790
        %v2792 = vrot.slane %v2784, %v2791
        %v2794 = vunpack.c.l.s4 1934713408
        %v2795 = vunpack.c.0.s8 %v2794
        %v2796 = vlaneseq
        %v2797 = vshrl.u32 %v2796, 7
        %v2798 = vsub.s32 %v2795, %v2797
        %v2799 = vrot.slane %v2785, %v2798
        %v2800 = vcombine.low %v2767, %v2783
        %v2801 = vcombine.high %v2767, %v2783
        %v2803 = vunpack.c.l.s4 1934713408
        %v2804 = vunpack.c.0.s8 %v2803
        %v2805 = vlaneseq
        %v2806 = vshrl.u32 %v2805, 7
        %v2807 = vsub.s32 %v2804, %v2806
        %v2808 = vrot.slane %v2800, %v2807
        %v2810 = vunpack.c.l.s4 1934713408
        %v2811 = vunpack.c.0.s8 %v2810
        %v2812 = vlaneseq
        %v2813 = vshrl.u32 %v2812, 7
        %v2814 = vsub.s32 %v2811, %v2813
        %v2815 = vrot.slane %v2801, %v2814
        %v2816 = vcombine.high %v2792, 0.0
        %v2817 = vcombine.high %v2799, 0.0
        %v2818 = vcombine.high %v2808, 0.0
        %v2819 = vcombine.high %v2815, 0.0
        %v2820 = vcombine.low %v2792, %v2799
        %v2822 = vunpack.c.l.s4 1983009808
        %v2823 = vunpack.c.0.s8 %v2822
        %v2824 = vlaneseq
        %v2825 = vshrl.u32 %v2824, 7
        %v2826 = vsub.s32 %v2823, %v2825
        %v2827 = vrot.slane %v2820, %v2826
        %v2828 = vcombine.low %v2816, %v2817
        %v2830 = vunpack.c.l.s4 1983009808
        %v2831 = vunpack.c.0.s8 %v2830
        %v2832 = vlaneseq
        %v2833 = vshrl.u32 %v2832, 7
        %v2834 = vsub.s32 %v2831, %v2833
        %v2835 = vrot.slane %v2828, %v2834
        %v2836 = vcombine.low %v2808, %v2815
        %v2838 = vunpack.c.l.s4 1983009808
        %v2839 = vunpack.c.0.s8 %v2838
        %v2840 = vlaneseq
        %v2841 = vshrl.u32 %v2840, 7
        %v2842 = vsub.s32 %v2839, %v2841
        %v2843 = vrot.slane %v2836, %v2842
        %v2844 = vcombine.low %v2818, %v2819
        %v2846 = vunpack.c.l.s4 1983009808
        %v2847 = vunpack.c.0.s8 %v2846
        %v2848 = vlaneseq
        %v2849 = vshrl.u32 %v2848, 7
        %v2850 = vsub.s32 %v2847, %v2849
        %v2851 = vrot.slane %v2844, %v2850
        %v2852 = vcombine.low %v2827, %v2835
        %v2853 = vcombine.high %v2827, %v2835
        %v2855 = vunpack.c.l.s4 1934713408
        %v2856 = vunpack.c.0.s8 %v2855
        %v2857 = vlaneseq
        %v2858 = vshrl.u32 %v2857, 7
        %v2859 = vsub.s32 %v2856, %v2858
        %v2860 = vrot.slane %v2852, %v2859
        %v2862 = vunpack.c.l.s4 1934713408
        %v2863 = vunpack.c.0.s8 %v2862
        %v2864 = vlaneseq
        %v2865 = vshrl.u32 %v2864, 7
        %v2866 = vsub.s32 %v2863, %v2865
        %v2867 = vrot.slane %v2853, %v2866
        %v2868 = vcombine.low %v2843, %v2851
        %v2869 = vcombine.high %v2843, %v2851
        %v2871 = vunpack.c.l.s4 1934713408
        %v2872 = vunpack.c.0.s8 %v2871
        %v2873 = vlaneseq
        %v2874 = vshrl.u32 %v2873, 7
        %v2875 = vsub.s32 %v2872, %v2874
        %v2876 = vrot.slane %v2868, %v2875
        %v2878 = vunpack.c.l.s4 1934713408
        %v2879 = vunpack.c.0.s8 %v2878
        %v2880 = vlaneseq
        %v2881 = vshrl.u32 %v2880, 7
        %v2882 = vsub.s32 %v2879, %v2881
        %v2883 = vrot.slane %v2869, %v2882
        %v2884 = vcombine.low %v2860, %v2876
        %v2885 = vcombine.high %v2860, %v2876
        %v2886 = vcombine.low %v2867, %v2883
        %v2887 = vcombine.high %v2867, %v2883
        %v2888 = vpack.c.bf16 %v2884, %v2884
        %v2889 = vpack.c.bf16 %v2885, %v2885
        %v2890 = vpack.c.bf16 %v2886, %v2886
        %v2891 = vpack.c.bf16 %v2887, %v2887
        %2893 = vrot.lane.b32.xlu0 %v2441, 120
        %v2894 = vpop.permute.xlu0 %2893
        %2896 = vrot.lane.b32.xlu0 %v2441, 112
        %v2897 = vpop.permute.xlu0 %2896
        %2899 = vrot.lane.b32.xlu0 %v2441, 104
        %v2900 = vpop.permute.xlu0 %2899
        %v2902 = vcombine.low %v2441, %v2897
        %v2903 = vcombine.high %v2441, %v2897
        %v2905 = vunpack.c.l.s4 1983009808
        %v2906 = vunpack.c.0.s8 %v2905
        %v2907 = vlaneseq
        %v2908 = vshrl.u32 %v2907, 7
        %v2909 = vsub.s32 %v2906, %v2908
        %v2910 = vrot.slane %v2902, %v2909
        %v2912 = vunpack.c.l.s4 1983009808
        %v2913 = vunpack.c.0.s8 %v2912
        %v2914 = vlaneseq
        %v2915 = vshrl.u32 %v2914, 7
        %v2916 = vsub.s32 %v2913, %v2915
        %v2917 = vrot.slane %v2903, %v2916
        %v2918 = vcombine.low %v2894, %v2900
        %v2919 = vcombine.high %v2894, %v2900
        %v2921 = vunpack.c.l.s4 1983009808
        %v2922 = vunpack.c.0.s8 %v2921
        %v2923 = vlaneseq
        %v2924 = vshrl.u32 %v2923, 7
        %v2925 = vsub.s32 %v2922, %v2924
        %v2926 = vrot.slane %v2918, %v2925
        %v2928 = vunpack.c.l.s4 1983009808
        %v2929 = vunpack.c.0.s8 %v2928
        %v2930 = vlaneseq
        %v2931 = vshrl.u32 %v2930, 7
        %v2932 = vsub.s32 %v2929, %v2931
        %v2933 = vrot.slane %v2919, %v2932
        %v2934 = vcombine.low %v2910, %v2926
        %v2935 = vcombine.high %v2910, %v2926
        %v2937 = vunpack.c.l.s4 1934713408
        %v2938 = vunpack.c.0.s8 %v2937
        %v2939 = vlaneseq
        %v2940 = vshrl.u32 %v2939, 7
        %v2941 = vsub.s32 %v2938, %v2940
        %v2942 = vrot.slane %v2934, %v2941
        %v2944 = vunpack.c.l.s4 1934713408
        %v2945 = vunpack.c.0.s8 %v2944
        %v2946 = vlaneseq
        %v2947 = vshrl.u32 %v2946, 7
        %v2948 = vsub.s32 %v2945, %v2947
        %v2949 = vrot.slane %v2935, %v2948
        %v2950 = vcombine.low %v2917, %v2933
        %v2951 = vcombine.high %v2917, %v2933
        %v2953 = vunpack.c.l.s4 1934713408
        %v2954 = vunpack.c.0.s8 %v2953
        %v2955 = vlaneseq
        %v2956 = vshrl.u32 %v2955, 7
        %v2957 = vsub.s32 %v2954, %v2956
        %v2958 = vrot.slane %v2950, %v2957
        %v2960 = vunpack.c.l.s4 1934713408
        %v2961 = vunpack.c.0.s8 %v2960
        %v2962 = vlaneseq
        %v2963 = vshrl.u32 %v2962, 7
        %v2964 = vsub.s32 %v2961, %v2963
        %v2965 = vrot.slane %v2951, %v2964
        %v2966 = vcombine.high %v2942, 0.0
        %v2967 = vcombine.high %v2949, 0.0
        %v2968 = vcombine.high %v2958, 0.0
        %v2969 = vcombine.high %v2965, 0.0
        %v2970 = vcombine.low %v2942, %v2949
        %v2972 = vunpack.c.l.s4 1983009808
        %v2973 = vunpack.c.0.s8 %v2972
        %v2974 = vlaneseq
        %v2975 = vshrl.u32 %v2974, 7
        %v2976 = vsub.s32 %v2973, %v2975
        %v2977 = vrot.slane %v2970, %v2976
        %v2978 = vcombine.low %v2966, %v2967
        %v2980 = vunpack.c.l.s4 1983009808
        %v2981 = vunpack.c.0.s8 %v2980
        %v2982 = vlaneseq
        %v2983 = vshrl.u32 %v2982, 7
        %v2984 = vsub.s32 %v2981, %v2983
        %v2985 = vrot.slane %v2978, %v2984
        %v2986 = vcombine.low %v2958, %v2965
        %v2988 = vunpack.c.l.s4 1983009808
        %v2989 = vunpack.c.0.s8 %v2988
        %v2990 = vlaneseq
        %v2991 = vshrl.u32 %v2990, 7
        %v2992 = vsub.s32 %v2989, %v2991
        %v2993 = vrot.slane %v2986, %v2992
        %v2994 = vcombine.low %v2968, %v2969
        %v2996 = vunpack.c.l.s4 1983009808
        %v2997 = vunpack.c.0.s8 %v2996
        %v2998 = vlaneseq
        %v2999 = vshrl.u32 %v2998, 7
        %v3000 = vsub.s32 %v2997, %v2999
        %v3001 = vrot.slane %v2994, %v3000
        %v3002 = vcombine.low %v2977, %v2985
        %v3003 = vcombine.high %v2977, %v2985
        %v3005 = vunpack.c.l.s4 1934713408
        %v3006 = vunpack.c.0.s8 %v3005
        %v3007 = vlaneseq
        %v3008 = vshrl.u32 %v3007, 7
        %v3009 = vsub.s32 %v3006, %v3008
        %v3010 = vrot.slane %v3002, %v3009
        %v3012 = vunpack.c.l.s4 1934713408
        %v3013 = vunpack.c.0.s8 %v3012
        %v3014 = vlaneseq
        %v3015 = vshrl.u32 %v3014, 7
        %v3016 = vsub.s32 %v3013, %v3015
        %v3017 = vrot.slane %v3003, %v3016
        %v3018 = vcombine.low %v2993, %v3001
        %v3019 = vcombine.high %v2993, %v3001
        %v3021 = vunpack.c.l.s4 1934713408
        %v3022 = vunpack.c.0.s8 %v3021
        %v3023 = vlaneseq
        %v3024 = vshrl.u32 %v3023, 7
        %v3025 = vsub.s32 %v3022, %v3024
        %v3026 = vrot.slane %v3018, %v3025
        %v3028 = vunpack.c.l.s4 1934713408
        %v3029 = vunpack.c.0.s8 %v3028
        %v3030 = vlaneseq
        %v3031 = vshrl.u32 %v3030, 7
        %v3032 = vsub.s32 %v3029, %v3031
        %v3033 = vrot.slane %v3019, %v3032
        %v3034 = vcombine.low %v3010, %v3026
        %v3035 = vcombine.high %v3010, %v3026
        %v3036 = vcombine.low %v3017, %v3033
        %v3037 = vcombine.high %v3017, %v3033
        %v3038 = vpack.c.bf16 %v3034, %v3034
        %v3039 = vpack.c.bf16 %v3035, %v3035
        %v3040 = vpack.c.bf16 %v3036, %v3036
        %v3041 = vpack.c.bf16 %v3037, %v3037
        %v3043 = vsel %vm1487, %v2738, 0
        %v3046 = vsel %vm1487, %v2888, 0
        %3048 = vmatprep.subr.bf16.mxu0 0
        %3049 = vmatpush1.bf16.xpose.msra.mxu0 %v3046
        %3050 = vmatprep.subr.bf16.mxu0 0
        %3051 = vmatpush1.bf16.xpose.msra.mxu0 0
        %3052 = vmatprep.subr.bf16.mxu0 0
        %3053 = vmatpush1.bf16.xpose.msra.mxu0 0
        %3054 = vmatprep.subr.bf16.mxu0 0
        %3055 = vmatpush1.bf16.xpose.msra.mxu0 0
        %3056 = vmatprep.subr.bf16.mxu0 0
        %3057 = vmatpush1.bf16.xpose.msra.mxu0 0
        %3058 = vmatprep.subr.bf16.mxu0 0
        %3059 = vmatpush1.bf16.xpose.msra.mxu0 0
        %3060 = vmatprep.subr.bf16.mxu0 0
        %3061 = vmatpush1.bf16.xpose.msra.mxu0 0
        %3062 = vmatprep.subr.bf16.mxu0 0
        %3063 = vmatpush1.bf16.xpose.msra.mxu0 0
        %3064 = vmatprep.subr.bf16.mxu0 0
        %3065 = vmatpush1.bf16.xpose.msra.mxu0 0
        %3066 = vmatprep.subr.bf16.mxu0 0
        %3067 = vmatpush1.bf16.xpose.msra.mxu0 0
        %3068 = vmatprep.subr.bf16.mxu0 0
        %3069 = vmatpush1.bf16.xpose.msra.mxu0 0
        %3070 = vmatprep.subr.bf16.mxu0 0
        %3071 = vmatpush1.bf16.xpose.msra.mxu0 0
        %3072 = vmatprep.subr.bf16.mxu0 0
        %3073 = vmatpush1.bf16.xpose.msra.mxu0 0
        %3074 = vmatprep.subr.bf16.mxu0 0
        %3075 = vmatpush1.bf16.xpose.msra.mxu0 0
        %3076 = vmatprep.subr.bf16.mxu0 0
        %3077 = vmatpush1.bf16.xpose.msra.mxu0 0
        %3078 = vmatprep.subr.bf16.mxu0 0
        %3079 = vmatpush1.bf16.xpose.msra.mxu0 0
        %3080 = vmatprep.mubr.bf16.mxu0 0
        %3081 = vmatmul.mubr.bf16.gmra.mrb[0].mxu0 %v3043
        %v3082 = vpop.f32.mrb[0].mxu0
        %v3083 = vadd.f32 0.0, %v3082
        %v3084 = vpop.f32.mrb[0].mxu0
        %v3085 = vpop.f32.mrb[0].mxu0
        %v3086 = vadd.f32 0.0, %v3085
        %v3087 = vpop.f32.mrb[0].mxu0
        %3088 = vdwg.mxu0
        %v3090 = vsel %vm1487, %v2739, 0
        %v3093 = vsel %vm1487, %v2889, 0
        %3095 = vmatprep.subr.bf16.mxu0 0
        %3096 = vmatpush1.bf16.xpose.msra.mxu0 %v3093
        %3097 = vmatprep.subr.bf16.mxu0 0
        %3098 = vmatpush1.bf16.xpose.msra.mxu0 0
        %3099 = vmatprep.subr.bf16.mxu0 0
        %3100 = vmatpush1.bf16.xpose.msra.mxu0 0
        %3101 = vmatprep.subr.bf16.mxu0 0
        %3102 = vmatpush1.bf16.xpose.msra.mxu0 0
        %3103 = vmatprep.subr.bf16.mxu0 0
        %3104 = vmatpush1.bf16.xpose.msra.mxu0 0
        %3105 = vmatprep.subr.bf16.mxu0 0
        %3106 = vmatpush1.bf16.xpose.msra.mxu0 0
        %3107 = vmatprep.subr.bf16.mxu0 0
        %3108 = vmatpush1.bf16.xpose.msra.mxu0 0
        %3109 = vmatprep.subr.bf16.mxu0 0
        %3110 = vmatpush1.bf16.xpose.msra.mxu0 0
        %3111 = vmatprep.subr.bf16.mxu0 0
        %3112 = vmatpush1.bf16.xpose.msra.mxu0 0
        %3113 = vmatprep.subr.bf16.mxu0 0
        %3114 = vmatpush1.bf16.xpose.msra.mxu0 0
        %3115 = vmatprep.subr.bf16.mxu0 0
        %3116 = vmatpush1.bf16.xpose.msra.mxu0 0
        %3117 = vmatprep.subr.bf16.mxu0 0
        %3118 = vmatpush1.bf16.xpose.msra.mxu0 0
        %3119 = vmatprep.subr.bf16.mxu0 0
        %3120 = vmatpush1.bf16.xpose.msra.mxu0 0
        %3121 = vmatprep.subr.bf16.mxu0 0
        %3122 = vmatpush1.bf16.xpose.msra.mxu0 0
        %3123 = vmatprep.subr.bf16.mxu0 0
        %3124 = vmatpush1.bf16.xpose.msra.mxu0 0
        %3125 = vmatprep.subr.bf16.mxu0 0
        %3126 = vmatpush1.bf16.xpose.msra.mxu0 0
        %3127 = vmatprep.mubr.bf16.mxu0 0
        %3128 = vmatmul.mubr.bf16.gmra.mrb[0].mxu0 %v3090
        %v3129 = vpop.f32.mrb[0].mxu0
        %v3130 = vadd.f32 0.0, %v3129
        %v3131 = vpop.f32.mrb[0].mxu0
        %v3132 = vpop.f32.mrb[0].mxu0
        %v3133 = vadd.f32 0.0, %v3132
        %v3134 = vpop.f32.mrb[0].mxu0
        %3135 = vdwg.mxu0
        %v3137 = vsel %vm1487, %v2740, 0
        %v3140 = vsel %vm1487, %v2890, 0
        %3142 = vmatprep.subr.bf16.mxu0 0
        %3143 = vmatpush1.bf16.xpose.msra.mxu0 %v3140
        %3144 = vmatprep.subr.bf16.mxu0 0
        %3145 = vmatpush1.bf16.xpose.msra.mxu0 0
        %3146 = vmatprep.subr.bf16.mxu0 0
        %3147 = vmatpush1.bf16.xpose.msra.mxu0 0
        %3148 = vmatprep.subr.bf16.mxu0 0
        %3149 = vmatpush1.bf16.xpose.msra.mxu0 0
        %3150 = vmatprep.subr.bf16.mxu0 0
        %3151 = vmatpush1.bf16.xpose.msra.mxu0 0
        %3152 = vmatprep.subr.bf16.mxu0 0
        %3153 = vmatpush1.bf16.xpose.msra.mxu0 0
        %3154 = vmatprep.subr.bf16.mxu0 0
        %3155 = vmatpush1.bf16.xpose.msra.mxu0 0
        %3156 = vmatprep.subr.bf16.mxu0 0
        %3157 = vmatpush1.bf16.xpose.msra.mxu0 0
        %3158 = vmatprep.subr.bf16.mxu0 0
        %3159 = vmatpush1.bf16.xpose.msra.mxu0 0
        %3160 = vmatprep.subr.bf16.mxu0 0
        %3161 = vmatpush1.bf16.xpose.msra.mxu0 0
        %3162 = vmatprep.subr.bf16.mxu0 0
        %3163 = vmatpush1.bf16.xpose.msra.mxu0 0
        %3164 = vmatprep.subr.bf16.mxu0 0
        %3165 = vmatpush1.bf16.xpose.msra.mxu0 0
        %3166 = vmatprep.subr.bf16.mxu0 0
        %3167 = vmatpush1.bf16.xpose.msra.mxu0 0
        %3168 = vmatprep.subr.bf16.mxu0 0
        %3169 = vmatpush1.bf16.xpose.msra.mxu0 0
        %3170 = vmatprep.subr.bf16.mxu0 0
        %3171 = vmatpush1.bf16.xpose.msra.mxu0 0
        %3172 = vmatprep.subr.bf16.mxu0 0
        %3173 = vmatpush1.bf16.xpose.msra.mxu0 0
        %3174 = vmatprep.mubr.bf16.mxu0 0
        %3175 = vmatmul.mubr.bf16.gmra.mrb[0].mxu0 %v3137
        %v3176 = vpop.f32.mrb[0].mxu0
        %v3177 = vadd.f32 0.0, %v3176
        %v3178 = vpop.f32.mrb[0].mxu0
        %v3179 = vpop.f32.mrb[0].mxu0
        %v3180 = vadd.f32 0.0, %v3179
        %v3181 = vpop.f32.mrb[0].mxu0
        %3182 = vdwg.mxu0
        %v3184 = vsel %vm1487, %v2741, 0
        %v3187 = vsel %vm1487, %v2891, 0
        %3189 = vmatprep.subr.bf16.mxu0 0
        %3190 = vmatpush1.bf16.xpose.msra.mxu0 %v3187
        %3191 = vmatprep.subr.bf16.mxu0 0
        %3192 = vmatpush1.bf16.xpose.msra.mxu0 0
        %3193 = vmatprep.subr.bf16.mxu0 0
        %3194 = vmatpush1.bf16.xpose.msra.mxu0 0
        %3195 = vmatprep.subr.bf16.mxu0 0
        %3196 = vmatpush1.bf16.xpose.msra.mxu0 0
        %3197 = vmatprep.subr.bf16.mxu0 0
        %3198 = vmatpush1.bf16.xpose.msra.mxu0 0
        %3199 = vmatprep.subr.bf16.mxu0 0
        %3200 = vmatpush1.bf16.xpose.msra.mxu0 0
        %3201 = vmatprep.subr.bf16.mxu0 0
        %3202 = vmatpush1.bf16.xpose.msra.mxu0 0
        %3203 = vmatprep.subr.bf16.mxu0 0
        %3204 = vmatpush1.bf16.xpose.msra.mxu0 0
        %3205 = vmatprep.subr.bf16.mxu0 0
        %3206 = vmatpush1.bf16.xpose.msra.mxu0 0
        %3207 = vmatprep.subr.bf16.mxu0 0
        %3208 = vmatpush1.bf16.xpose.msra.mxu0 0
        %3209 = vmatprep.subr.bf16.mxu0 0
        %3210 = vmatpush1.bf16.xpose.msra.mxu0 0
        %3211 = vmatprep.subr.bf16.mxu0 0
        %3212 = vmatpush1.bf16.xpose.msra.mxu0 0
        %3213 = vmatprep.subr.bf16.mxu0 0
        %3214 = vmatpush1.bf16.xpose.msra.mxu0 0
        %3215 = vmatprep.subr.bf16.mxu0 0
        %3216 = vmatpush1.bf16.xpose.msra.mxu0 0
        %3217 = vmatprep.subr.bf16.mxu0 0
        %3218 = vmatpush1.bf16.xpose.msra.mxu0 0
        %3219 = vmatprep.subr.bf16.mxu0 0
        %3220 = vmatpush1.bf16.xpose.msra.mxu0 0
        %3221 = vmatprep.mubr.bf16.mxu0 0
        %3222 = vmatmul.mubr.bf16.gmra.mrb[0].mxu0 %v3184
        %v3223 = vpop.f32.mrb[0].mxu0
        %v3224 = vadd.f32 0.0, %v3223
        %v3225 = vpop.f32.mrb[0].mxu0
        %v3226 = vpop.f32.mrb[0].mxu0
        %v3227 = vadd.f32 0.0, %v3226
        %v3228 = vpop.f32.mrb[0].mxu0
        %3229 = vdwg.mxu0
        %v3230 = vsel %vm1487, %v3083, -inf
        %3231 = vmax.xlane.f32.xlu0 %v3230
        %v3232 = vpop.xlane.xlu0 %3231
        %v3233 = vsel %vm1487, %v3086, -inf
        %3234 = vmax.xlane.f32.xlu0 %v3233
        %v3235 = vpop.xlane.xlu0 %3234
        %v3236 = vsel %vm1487, %v3130, -inf
        %3237 = vmax.xlane.f32.xlu0 %v3236
        %v3238 = vpop.xlane.xlu0 %3237
        %v3239 = vsel %vm1487, %v3133, -inf
        %3240 = vmax.xlane.f32.xlu0 %v3239
        %v3241 = vpop.xlane.xlu0 %3240
        %v3242 = vsel %vm1487, %v3177, -inf
        %3243 = vmax.xlane.f32.xlu0 %v3242
        %v3244 = vpop.xlane.xlu0 %3243
        %v3245 = vsel %vm1487, %v3180, -inf
        %3246 = vmax.xlane.f32.xlu0 %v3245
        %v3247 = vpop.xlane.xlu0 %3246
        %v3248 = vsel %vm1487, %v3224, -inf
        %3249 = vmax.xlane.f32.xlu0 %v3248
        %v3250 = vpop.xlane.xlu0 %3249
        %v3251 = vsel %vm1487, %v3227, -inf
        %3252 = vmax.xlane.f32.xlu0 %v3251
        %v3253 = vpop.xlane.xlu0 %3252
        %v3254 = vsub.f32 %v3083, %v3232
        %v3255 = vsub.f32 %v3086, %v3235
        %v3256 = vsub.f32 %v3130, %v3238
        %v3257 = vsub.f32 %v3133, %v3241
        %v3258 = vsub.f32 %v3177, %v3244
        %v3259 = vsub.f32 %v3180, %v3247
        %v3260 = vsub.f32 %v3224, %v3250
        %v3261 = vsub.f32 %v3227, %v3253
        %v3262 = vmul.f32 %v3254, 1.442695
        %v3263 = vpow.pop %v3262
        %v3264 = vmul.f32 %v3255, 1.442695
        %v3265 = vpow.pop %v3264
        %v3266 = vmul.f32 %v3256, 1.442695
        %v3267 = vpow.pop %v3266
        %v3268 = vmul.f32 %v3257, 1.442695
        %v3269 = vpow.pop %v3268
        %v3270 = vmul.f32 %v3258, 1.442695
        %v3271 = vpow.pop %v3270
        %v3272 = vmul.f32 %v3259, 1.442695
        %v3273 = vpow.pop %v3272
        %v3274 = vmul.f32 %v3260, 1.442695
        %v3275 = vpow.pop %v3274
        %v3276 = vmul.f32 %v3261, 1.442695
        %v3277 = vpow.pop %v3276
        %v3278 = vsel %vm1487, %v3263, 0.0
        %3279 = vadd.xlane.f32.xlu0 %v3278
        %v3280 = vpop.xlane.xlu0 %3279
        %v3281 = vsel %vm1487, %v3265, 0.0
        %3282 = vadd.xlane.f32.xlu0 %v3281
        %v3283 = vpop.xlane.xlu0 %3282
        %v3284 = vsel %vm1487, %v3267, 0.0
        %3285 = vadd.xlane.f32.xlu0 %v3284
        %v3286 = vpop.xlane.xlu0 %3285
        %v3287 = vsel %vm1487, %v3269, 0.0
        %3288 = vadd.xlane.f32.xlu0 %v3287
        %v3289 = vpop.xlane.xlu0 %3288
        %v3290 = vsel %vm1487, %v3271, 0.0
        %3291 = vadd.xlane.f32.xlu0 %v3290
        %v3292 = vpop.xlane.xlu0 %3291
        %v3293 = vsel %vm1487, %v3273, 0.0
        %3294 = vadd.xlane.f32.xlu0 %v3293
        %v3295 = vpop.xlane.xlu0 %3294
        %v3296 = vsel %vm1487, %v3275, 0.0
        %3297 = vadd.xlane.f32.xlu0 %v3296
        %v3298 = vpop.xlane.xlu0 %3297
        %v3299 = vsel %vm1487, %v3277, 0.0
        %3300 = vadd.xlane.f32.xlu0 %v3299
        %v3301 = vpop.xlane.xlu0 %3300
        %v3302 = vrcp.pop %v3280
        %v3303 = vrcp.pop %v3283
        %v3304 = vrcp.pop %v3286
        %v3305 = vrcp.pop %v3289
        %v3306 = vrcp.pop %v3292
        %v3307 = vrcp.pop %v3295
        %v3308 = vrcp.pop %v3298
        %v3309 = vrcp.pop %v3301
        %v3310 = vmul.f32 %v3263, %v3302
        %v3311 = vmul.f32 %v3265, %v3303
        %v3312 = vmul.f32 %v3267, %v3304
        %v3313 = vmul.f32 %v3269, %v3305
        %v3314 = vmul.f32 %v3271, %v3306
        %v3315 = vmul.f32 %v3273, %v3307
        %v3316 = vmul.f32 %v3275, %v3308
        %v3317 = vmul.f32 %v3277, %v3309
        %v3318 = vpack.c.bf16 %v3311, %v3310
        %v3319 = vpack.c.bf16 %v3313, %v3312
        %v3320 = vpack.c.bf16 %v3315, %v3314
        %v3321 = vpack.c.bf16 %v3317, %v3316
        %v3323 = vsel %vm1487, %v3318, 0
        %vm3325 = vcmask 1043456
        %v3327 = vsel %vm3325, %v3038, 0
        %3329 = vmatprep.subr.bf16.mxu0 0
        %3330 = vmatpush1.bf16.msra.mxu0 %v3327
        %3331 = vmatprep.subr.bf16.mxu0 0
        %3332 = vmatpush1.bf16.msra.mxu0 0
        %3333 = vmatprep.subr.bf16.mxu0 0
        %3334 = vmatpush1.bf16.msra.mxu0 0
        %3335 = vmatprep.subr.bf16.mxu0 0
        %3336 = vmatpush1.bf16.msra.mxu0 0
        %3337 = vmatprep.subr.bf16.mxu0 0
        %3338 = vmatpush1.bf16.msra.mxu0 0
        %3339 = vmatprep.subr.bf16.mxu0 0
        %3340 = vmatpush1.bf16.msra.mxu0 0
        %3341 = vmatprep.subr.bf16.mxu0 0
        %3342 = vmatpush1.bf16.msra.mxu0 0
        %3343 = vmatprep.subr.bf16.mxu0 0
        %3344 = vmatpush1.bf16.msra.mxu0 0
        %3345 = vmatprep.subr.bf16.mxu0 0
        %3346 = vmatpush1.bf16.msra.mxu0 0
        %3347 = vmatprep.subr.bf16.mxu0 0
        %3348 = vmatpush1.bf16.msra.mxu0 0
        %3349 = vmatprep.subr.bf16.mxu0 0
        %3350 = vmatpush1.bf16.msra.mxu0 0
        %3351 = vmatprep.subr.bf16.mxu0 0
        %3352 = vmatpush1.bf16.msra.mxu0 0
        %3353 = vmatprep.subr.bf16.mxu0 0
        %3354 = vmatpush1.bf16.msra.mxu0 0
        %3355 = vmatprep.subr.bf16.mxu0 0
        %3356 = vmatpush1.bf16.msra.mxu0 0
        %3357 = vmatprep.subr.bf16.mxu0 0
        %3358 = vmatpush1.bf16.msra.mxu0 0
        %3359 = vmatprep.subr.bf16.mxu0 0
        %3360 = vmatpush1.bf16.msra.mxu0 0
        %3361 = vmatprep.mubr.bf16.mxu0 0
        %3362 = vmatmul.mubr.bf16.gmra.mrb[0].mxu0 %v3323
        %v3363 = vpop.f32.mrb[0].mxu0
        %v3364 = vadd.f32 0.0, %v3363
        %v3365 = vpop.f32.mrb[0].mxu0
        %v3366 = vpop.f32.mrb[0].mxu0
        %v3367 = vadd.f32 0.0, %v3366
        %v3368 = vpop.f32.mrb[0].mxu0
        %3369 = vdwg.mxu0
        %v3371 = vsel %vm1487, %v3319, 0
        %v3374 = vsel %vm3325, %v3039, 0
        %3376 = vmatprep.subr.bf16.mxu0 0
        %3377 = vmatpush1.bf16.msra.mxu0 %v3374
        %3378 = vmatprep.subr.bf16.mxu0 0
        %3379 = vmatpush1.bf16.msra.mxu0 0
        %3380 = vmatprep.subr.bf16.mxu0 0
        %3381 = vmatpush1.bf16.msra.mxu0 0
        %3382 = vmatprep.subr.bf16.mxu0 0
        %3383 = vmatpush1.bf16.msra.mxu0 0
        %3384 = vmatprep.subr.bf16.mxu0 0
        %3385 = vmatpush1.bf16.msra.mxu0 0
        %3386 = vmatprep.subr.bf16.mxu0 0
        %3387 = vmatpush1.bf16.msra.mxu0 0
        %3388 = vmatprep.subr.bf16.mxu0 0
        %3389 = vmatpush1.bf16.msra.mxu0 0
        %3390 = vmatprep.subr.bf16.mxu0 0
        %3391 = vmatpush1.bf16.msra.mxu0 0
        %3392 = vmatprep.subr.bf16.mxu0 0
        %3393 = vmatpush1.bf16.msra.mxu0 0
        %3394 = vmatprep.subr.bf16.mxu0 0
        %3395 = vmatpush1.bf16.msra.mxu0 0
        %3396 = vmatprep.subr.bf16.mxu0 0
        %3397 = vmatpush1.bf16.msra.mxu0 0
        %3398 = vmatprep.subr.bf16.mxu0 0
        %3399 = vmatpush1.bf16.msra.mxu0 0
        %3400 = vmatprep.subr.bf16.mxu0 0
        %3401 = vmatpush1.bf16.msra.mxu0 0
        %3402 = vmatprep.subr.bf16.mxu0 0
        %3403 = vmatpush1.bf16.msra.mxu0 0
        %3404 = vmatprep.subr.bf16.mxu0 0
        %3405 = vmatpush1.bf16.msra.mxu0 0
        %3406 = vmatprep.subr.bf16.mxu0 0
        %3407 = vmatpush1.bf16.msra.mxu0 0
        %3408 = vmatprep.mubr.bf16.mxu0 0
        %3409 = vmatmul.mubr.bf16.gmra.mrb[0].mxu0 %v3371
        %v3410 = vpop.f32.mrb[0].mxu0
        %v3411 = vadd.f32 0.0, %v3410
        %v3412 = vpop.f32.mrb[0].mxu0
        %v3413 = vpop.f32.mrb[0].mxu0
        %v3414 = vadd.f32 0.0, %v3413
        %v3415 = vpop.f32.mrb[0].mxu0
        %3416 = vdwg.mxu0
        %v3418 = vsel %vm1487, %v3320, 0
        %v3421 = vsel %vm3325, %v3040, 0
        %3423 = vmatprep.subr.bf16.mxu0 0
        %3424 = vmatpush1.bf16.msra.mxu0 %v3421
        %3425 = vmatprep.subr.bf16.mxu0 0
        %3426 = vmatpush1.bf16.msra.mxu0 0
        %3427 = vmatprep.subr.bf16.mxu0 0
        %3428 = vmatpush1.bf16.msra.mxu0 0
        %3429 = vmatprep.subr.bf16.mxu0 0
        %3430 = vmatpush1.bf16.msra.mxu0 0
        %3431 = vmatprep.subr.bf16.mxu0 0
        %3432 = vmatpush1.bf16.msra.mxu0 0
        %3433 = vmatprep.subr.bf16.mxu0 0
        %3434 = vmatpush1.bf16.msra.mxu0 0
        %3435 = vmatprep.subr.bf16.mxu0 0
        %3436 = vmatpush1.bf16.msra.mxu0 0
        %3437 = vmatprep.subr.bf16.mxu0 0
        %3438 = vmatpush1.bf16.msra.mxu0 0
        %3439 = vmatprep.subr.bf16.mxu0 0
        %3440 = vmatpush1.bf16.msra.mxu0 0
        %3441 = vmatprep.subr.bf16.mxu0 0
        %3442 = vmatpush1.bf16.msra.mxu0 0
        %3443 = vmatprep.subr.bf16.mxu0 0
        %3444 = vmatpush1.bf16.msra.mxu0 0
        %3445 = vmatprep.subr.bf16.mxu0 0
        %3446 = vmatpush1.bf16.msra.mxu0 0
        %3447 = vmatprep.subr.bf16.mxu0 0
        %3448 = vmatpush1.bf16.msra.mxu0 0
        %3449 = vmatprep.subr.bf16.mxu0 0
        %3450 = vmatpush1.bf16.msra.mxu0 0
        %3451 = vmatprep.subr.bf16.mxu0 0
        %3452 = vmatpush1.bf16.msra.mxu0 0
        %3453 = vmatprep.subr.bf16.mxu0 0
        %3454 = vmatpush1.bf16.msra.mxu0 0
        %3455 = vmatprep.mubr.bf16.mxu0 0
        %3456 = vmatmul.mubr.bf16.gmra.mrb[0].mxu0 %v3418
        %v3457 = vpop.f32.mrb[0].mxu0
        %v3458 = vadd.f32 0.0, %v3457
        %v3459 = vpop.f32.mrb[0].mxu0
        %v3460 = vpop.f32.mrb[0].mxu0
        %v3461 = vadd.f32 0.0, %v3460
        %v3462 = vpop.f32.mrb[0].mxu0
        %3463 = vdwg.mxu0
        %v3465 = vsel %vm1487, %v3321, 0
        %v3468 = vsel %vm3325, %v3041, 0
        %3470 = vmatprep.subr.bf16.mxu0 0
        %3471 = vmatpush1.bf16.msra.mxu0 %v3468
        %3472 = vmatprep.subr.bf16.mxu0 0
        %3473 = vmatpush1.bf16.msra.mxu0 0
        %3474 = vmatprep.subr.bf16.mxu0 0
        %3475 = vmatpush1.bf16.msra.mxu0 0
        %3476 = vmatprep.subr.bf16.mxu0 0
        %3477 = vmatpush1.bf16.msra.mxu0 0
        %3478 = vmatprep.subr.bf16.mxu0 0
        %3479 = vmatpush1.bf16.msra.mxu0 0
        %3480 = vmatprep.subr.bf16.mxu0 0
        %3481 = vmatpush1.bf16.msra.mxu0 0
        %3482 = vmatprep.subr.bf16.mxu0 0
        %3483 = vmatpush1.bf16.msra.mxu0 0
        %3484 = vmatprep.subr.bf16.mxu0 0
        %3485 = vmatpush1.bf16.msra.mxu0 0
        %3486 = vmatprep.subr.bf16.mxu0 0
        %3487 = vmatpush1.bf16.msra.mxu0 0
        %3488 = vmatprep.subr.bf16.mxu0 0
        %3489 = vmatpush1.bf16.msra.mxu0 0
        %3490 = vmatprep.subr.bf16.mxu0 0
        %3491 = vmatpush1.bf16.msra.mxu0 0
        %3492 = vmatprep.subr.bf16.mxu0 0
        %3493 = vmatpush1.bf16.msra.mxu0 0
        %3494 = vmatprep.subr.bf16.mxu0 0
        %3495 = vmatpush1.bf16.msra.mxu0 0
        %3496 = vmatprep.subr.bf16.mxu0 0
        %3497 = vmatpush1.bf16.msra.mxu0 0
        %3498 = vmatprep.subr.bf16.mxu0 0
        %3499 = vmatpush1.bf16.msra.mxu0 0
        %3500 = vmatprep.subr.bf16.mxu0 0
        %3501 = vmatpush1.bf16.msra.mxu0 0
        %3502 = vmatprep.mubr.bf16.mxu0 0
        %3503 = vmatmul.mubr.bf16.gmra.mrb[0].mxu0 %v3465
        %v3504 = vpop.f32.mrb[0].mxu0
        %v3505 = vadd.f32 0.0, %v3504
        %v3506 = vpop.f32.mrb[0].mxu0
        %v3507 = vpop.f32.mrb[0].mxu0
        %v3508 = vadd.f32 0.0, %v3507
        %v3509 = vpop.f32.mrb[0].mxu0
        %3510 = vdwg.mxu0
        %v3511 = vcombine.low %v3364, %v3458
        %v3512 = vcombine.high %v3364, %v3458
        %v3514 = vunpack.c.l.s4 1983009808
        %v3515 = vunpack.c.0.s8 %v3514
        %v3516 = vlaneseq
        %v3517 = vshrl.u32 %v3516, 7
        %v3518 = vsub.s32 %v3515, %v3517
        %v3519 = vrot.slane %v3511, %v3518
        %v3521 = vunpack.c.l.s4 1983009808
        %v3522 = vunpack.c.0.s8 %v3521
        %v3523 = vlaneseq
        %v3524 = vshrl.u32 %v3523, 7
        %v3525 = vsub.s32 %v3522, %v3524
        %v3526 = vrot.slane %v3512, %v3525
        %v3527 = vcombine.low %v3411, %v3505
        %v3528 = vcombine.high %v3411, %v3505
        %v3530 = vunpack.c.l.s4 1983009808
        %v3531 = vunpack.c.0.s8 %v3530
        %v3532 = vlaneseq
        %v3533 = vshrl.u32 %v3532, 7
        %v3534 = vsub.s32 %v3531, %v3533
        %v3535 = vrot.slane %v3527, %v3534
        %v3537 = vunpack.c.l.s4 1983009808
        %v3538 = vunpack.c.0.s8 %v3537
        %v3539 = vlaneseq
        %v3540 = vshrl.u32 %v3539, 7
        %v3541 = vsub.s32 %v3538, %v3540
        %v3542 = vrot.slane %v3528, %v3541
        %v3543 = vcombine.low %v3519, %v3535
        %v3544 = vcombine.high %v3519, %v3535
        %v3546 = vunpack.c.l.s4 1934713408
        %v3547 = vunpack.c.0.s8 %v3546
        %v3548 = vlaneseq
        %v3549 = vshrl.u32 %v3548, 7
        %v3550 = vsub.s32 %v3547, %v3549
        %v3551 = vrot.slane %v3543, %v3550
        %v3553 = vunpack.c.l.s4 1934713408
        %v3554 = vunpack.c.0.s8 %v3553
        %v3555 = vlaneseq
        %v3556 = vshrl.u32 %v3555, 7
        %v3557 = vsub.s32 %v3554, %v3556
        %v3558 = vrot.slane %v3544, %v3557
        %v3559 = vcombine.low %v3526, %v3542
        %v3560 = vcombine.high %v3526, %v3542
        %v3562 = vunpack.c.l.s4 1934713408
        %v3563 = vunpack.c.0.s8 %v3562
        %v3564 = vlaneseq
        %v3565 = vshrl.u32 %v3564, 7
        %v3566 = vsub.s32 %v3563, %v3565
        %v3567 = vrot.slane %v3559, %v3566
        %v3569 = vunpack.c.l.s4 1934713408
        %v3570 = vunpack.c.0.s8 %v3569
        %v3571 = vlaneseq
        %v3572 = vshrl.u32 %v3571, 7
        %v3573 = vsub.s32 %v3570, %v3572
        %v3574 = vrot.slane %v3560, %v3573
        %v3575 = vcombine.high %v3551, 0.0
        %v3576 = vcombine.high %v3558, 0.0
        %v3577 = vcombine.high %v3567, 0.0
        %v3578 = vcombine.high %v3574, 0.0
        %v3579 = vcombine.low %v3367, %v3461
        %v3580 = vcombine.high %v3367, %v3461
        %v3582 = vunpack.c.l.s4 1983009808
        %v3583 = vunpack.c.0.s8 %v3582
        %v3584 = vlaneseq
        %v3585 = vshrl.u32 %v3584, 7
        %v3586 = vsub.s32 %v3583, %v3585
        %v3587 = vrot.slane %v3579, %v3586
        %v3589 = vunpack.c.l.s4 1983009808
        %v3590 = vunpack.c.0.s8 %v3589
        %v3591 = vlaneseq
        %v3592 = vshrl.u32 %v3591, 7
        %v3593 = vsub.s32 %v3590, %v3592
        %v3594 = vrot.slane %v3580, %v3593
        %v3595 = vcombine.low %v3414, %v3508
        %v3596 = vcombine.high %v3414, %v3508
        %v3598 = vunpack.c.l.s4 1983009808
        %v3599 = vunpack.c.0.s8 %v3598
        %v3600 = vlaneseq
        %v3601 = vshrl.u32 %v3600, 7
        %v3602 = vsub.s32 %v3599, %v3601
        %v3603 = vrot.slane %v3595, %v3602
        %v3605 = vunpack.c.l.s4 1983009808
        %v3606 = vunpack.c.0.s8 %v3605
        %v3607 = vlaneseq
        %v3608 = vshrl.u32 %v3607, 7
        %v3609 = vsub.s32 %v3606, %v3608
        %v3610 = vrot.slane %v3596, %v3609
        %v3611 = vcombine.low %v3587, %v3603
        %v3612 = vcombine.high %v3587, %v3603
        %v3614 = vunpack.c.l.s4 1934713408
        %v3615 = vunpack.c.0.s8 %v3614
        %v3616 = vlaneseq
        %v3617 = vshrl.u32 %v3616, 7
        %v3618 = vsub.s32 %v3615, %v3617
        %v3619 = vrot.slane %v3611, %v3618
        %v3621 = vunpack.c.l.s4 1934713408
        %v3622 = vunpack.c.0.s8 %v3621
        %v3623 = vlaneseq
        %v3624 = vshrl.u32 %v3623, 7
        %v3625 = vsub.s32 %v3622, %v3624
        %v3626 = vrot.slane %v3612, %v3625
        %v3627 = vcombine.low %v3594, %v3610
        %v3628 = vcombine.high %v3594, %v3610
        %v3630 = vunpack.c.l.s4 1934713408
        %v3631 = vunpack.c.0.s8 %v3630
        %v3632 = vlaneseq
        %v3633 = vshrl.u32 %v3632, 7
        %v3634 = vsub.s32 %v3631, %v3633
        %v3635 = vrot.slane %v3627, %v3634
        %v3637 = vunpack.c.l.s4 1934713408
        %v3638 = vunpack.c.0.s8 %v3637
        %v3639 = vlaneseq
        %v3640 = vshrl.u32 %v3639, 7
        %v3641 = vsub.s32 %v3638, %v3640
        %v3642 = vrot.slane %v3628, %v3641
        %v3643 = vcombine.high %v3619, 0.0
        %v3644 = vcombine.high %v3626, 0.0
        %v3645 = vcombine.high %v3635, 0.0
        %v3646 = vcombine.high %v3642, 0.0
        %v3647 = vcombine.low %v3551, %v3558
        %v3649 = vunpack.c.l.s4 1983009808
        %v3650 = vunpack.c.0.s8 %v3649
        %v3651 = vlaneseq
        %v3652 = vshrl.u32 %v3651, 7
        %v3653 = vsub.s32 %v3650, %v3652
        %v3654 = vrot.slane %v3647, %v3653
        %v3655 = vcombine.low %v3575, %v3576
        %v3657 = vunpack.c.l.s4 1983009808
        %v3658 = vunpack.c.0.s8 %v3657
        %v3659 = vlaneseq
        %v3660 = vshrl.u32 %v3659, 7
        %v3661 = vsub.s32 %v3658, %v3660
        %v3662 = vrot.slane %v3655, %v3661
        %v3663 = vcombine.low %v3567, %v3574
        %v3665 = vunpack.c.l.s4 1983009808
        %v3666 = vunpack.c.0.s8 %v3665
        %v3667 = vlaneseq
        %v3668 = vshrl.u32 %v3667, 7
        %v3669 = vsub.s32 %v3666, %v3668
        %v3670 = vrot.slane %v3663, %v3669
        %v3671 = vcombine.low %v3577, %v3578
        %v3673 = vunpack.c.l.s4 1983009808
        %v3674 = vunpack.c.0.s8 %v3673
        %v3675 = vlaneseq
        %v3676 = vshrl.u32 %v3675, 7
        %v3677 = vsub.s32 %v3674, %v3676
        %v3678 = vrot.slane %v3671, %v3677
        %v3679 = vcombine.low %v3654, %v3662
        %v3680 = vcombine.high %v3654, %v3662
        %v3682 = vunpack.c.l.s4 1934713408
        %v3683 = vunpack.c.0.s8 %v3682
        %v3684 = vlaneseq
        %v3685 = vshrl.u32 %v3684, 7
        %v3686 = vsub.s32 %v3683, %v3685
        %v3687 = vrot.slane %v3679, %v3686
        %v3689 = vunpack.c.l.s4 1934713408
        %v3690 = vunpack.c.0.s8 %v3689
        %v3691 = vlaneseq
        %v3692 = vshrl.u32 %v3691, 7
        %v3693 = vsub.s32 %v3690, %v3692
        %v3694 = vrot.slane %v3680, %v3693
        %v3695 = vcombine.low %v3670, %v3678
        %v3696 = vcombine.high %v3670, %v3678
        %v3698 = vunpack.c.l.s4 1934713408
        %v3699 = vunpack.c.0.s8 %v3698
        %v3700 = vlaneseq
        %v3701 = vshrl.u32 %v3700, 7
        %v3702 = vsub.s32 %v3699, %v3701
        %v3703 = vrot.slane %v3695, %v3702
        %v3705 = vunpack.c.l.s4 1934713408
        %v3706 = vunpack.c.0.s8 %v3705
        %v3707 = vlaneseq
        %v3708 = vshrl.u32 %v3707, 7
        %v3709 = vsub.s32 %v3706, %v3708
        %v3710 = vrot.slane %v3696, %v3709
        %v3711 = vcombine.low %v3687, %v3703
        %v3712 = vcombine.high %v3687, %v3703
        %v3713 = vcombine.low %v3694, %v3710
        %v3714 = vcombine.high %v3694, %v3710
        %v3715 = vcombine.low %v3619, %v3626
        %v3717 = vunpack.c.l.s4 1983009808
        %v3718 = vunpack.c.0.s8 %v3717
        %v3719 = vlaneseq
        %v3720 = vshrl.u32 %v3719, 7
        %v3721 = vsub.s32 %v3718, %v3720
        %v3722 = vrot.slane %v3715, %v3721
        %v3723 = vcombine.low %v3643, %v3644
        %v3725 = vunpack.c.l.s4 1983009808
        %v3726 = vunpack.c.0.s8 %v3725
        %v3727 = vlaneseq
        %v3728 = vshrl.u32 %v3727, 7
        %v3729 = vsub.s32 %v3726, %v3728
        %v3730 = vrot.slane %v3723, %v3729
        %v3731 = vcombine.low %v3635, %v3642
        %v3733 = vunpack.c.l.s4 1983009808
        %v3734 = vunpack.c.0.s8 %v3733
        %v3735 = vlaneseq
        %v3736 = vshrl.u32 %v3735, 7
        %v3737 = vsub.s32 %v3734, %v3736
        %v3738 = vrot.slane %v3731, %v3737
        %v3739 = vcombine.low %v3645, %v3646
        %v3741 = vunpack.c.l.s4 1983009808
        %v3742 = vunpack.c.0.s8 %v3741
        %v3743 = vlaneseq
        %v3744 = vshrl.u32 %v3743, 7
        %v3745 = vsub.s32 %v3742, %v3744
        %v3746 = vrot.slane %v3739, %v3745
        %v3747 = vcombine.low %v3722, %v3730
        %v3748 = vcombine.high %v3722, %v3730
        %v3750 = vunpack.c.l.s4 1934713408
        %v3751 = vunpack.c.0.s8 %v3750
        %v3752 = vlaneseq
        %v3753 = vshrl.u32 %v3752, 7
        %v3754 = vsub.s32 %v3751, %v3753
        %v3755 = vrot.slane %v3747, %v3754
        %v3757 = vunpack.c.l.s4 1934713408
        %v3758 = vunpack.c.0.s8 %v3757
        %v3759 = vlaneseq
        %v3760 = vshrl.u32 %v3759, 7
        %v3761 = vsub.s32 %v3758, %v3760
        %v3762 = vrot.slane %v3748, %v3761
        %v3763 = vcombine.low %v3738, %v3746
        %v3764 = vcombine.high %v3738, %v3746
        %v3766 = vunpack.c.l.s4 1934713408
        %v3767 = vunpack.c.0.s8 %v3766
        %v3768 = vlaneseq
        %v3769 = vshrl.u32 %v3768, 7
        %v3770 = vsub.s32 %v3767, %v3769
        %v3771 = vrot.slane %v3763, %v3770
        %v3773 = vunpack.c.l.s4 1934713408
        %v3774 = vunpack.c.0.s8 %v3773
        %v3775 = vlaneseq
        %v3776 = vshrl.u32 %v3775, 7
        %v3777 = vsub.s32 %v3774, %v3776
        %v3778 = vrot.slane %v3764, %v3777
        %v3779 = vcombine.low %v3755, %v3771
        %v3780 = vcombine.high %v3755, %v3771
        %v3781 = vcombine.low %v3762, %v3778
        %v3782 = vcombine.high %v3762, %v3778
        %3785 = vrot.lane.b32.xlu0 %v3712, 8
        %v3786 = vpop.permute.xlu0 %3785
        %3787 = vrot.lane.b32.xlu0 %v3780, 8
        %v3788 = vpop.permute.xlu0 %3787
        %3793 = vrot.lane.b32.xlu0 %v3713, 16
        %v3794 = vpop.permute.xlu0 %3793
        %3795 = vrot.lane.b32.xlu0 %v3781, 16
        %v3796 = vpop.permute.xlu0 %3795
        %3801 = vrot.lane.b32.xlu0 %v3714, 24
        %v3802 = vpop.permute.xlu0 %3801
        %3803 = vrot.lane.b32.xlu0 %v3782, 24
        %v3804 = vpop.permute.xlu0 %3803
        %v3807 = vsel %vm1487, %v3711, %v3786
        %v3808 = vsel %vm1487, %v3779, %v3788
        %v3809 = vsel %vm1672, %v3807, %v3794
        %v3810 = vsel %vm1672, %v3808, %v3796
        %v3811 = vsel %vm2043, %v3809, %v3802
        %v3812 = vsel %vm2043, %v3810, %v3804
        %v3813 = vpack.c.bf16 %v3812, %v3811
        %v3814 = vlaneseq
        %v3815 = vshrl.u32 %v3814, 7
        %v3816 = vsub.s32 4, %v3815
        %v3817 = vrot.slane %v561, %v3816
        %3818 = vrot.lane.b32.xlu0 %v2291, 32
        %v3819 = vpop.permute.xlu0 %3818
        %3820 = vrot.lane.b32.xlu0 %v2292, 32
        %v3821 = vpop.permute.xlu0 %3820
        %v3825 = vsel %vm590, %v3813, 0
        %3827 = vmatprep.subr.bf16.mxu0 0
        %3828 = vmatpush1.bf16.msra.mxu0 %v3819
        %3829 = vmatprep.subr.bf16.mxu0 0
        %3830 = vmatpush1.bf16.msra.mxu0 %v3821
        %3831 = vmatprep.subr.bf16.mxu0 0
        %3832 = vmatpush1.bf16.msra.mxu0 0
        %3833 = vmatprep.subr.bf16.mxu0 0
        %3834 = vmatpush1.bf16.msra.mxu0 0
        %3835 = vmatprep.subr.bf16.mxu0 0
        %3836 = vmatpush1.bf16.msra.mxu0 0
        %3837 = vmatprep.subr.bf16.mxu0 0
        %3838 = vmatpush1.bf16.msra.mxu0 0
        %3839 = vmatprep.subr.bf16.mxu0 0
        %3840 = vmatpush1.bf16.msra.mxu0 0
        %3841 = vmatprep.subr.bf16.mxu0 0
        %3842 = vmatpush1.bf16.msra.mxu0 0
        %3843 = vmatprep.subr.bf16.mxu0 0
        %3844 = vmatpush1.bf16.msra.mxu0 0
        %3845 = vmatprep.subr.bf16.mxu0 0
        %3846 = vmatpush1.bf16.msra.mxu0 0
        %3847 = vmatprep.subr.bf16.mxu0 0
        %3848 = vmatpush1.bf16.msra.mxu0 0
        %3849 = vmatprep.subr.bf16.mxu0 0
        %3850 = vmatpush1.bf16.msra.mxu0 0
        %3851 = vmatprep.subr.bf16.mxu0 0
        %3852 = vmatpush1.bf16.msra.mxu0 0
        %3853 = vmatprep.subr.bf16.mxu0 0
        %3854 = vmatpush1.bf16.msra.mxu0 0
        %3855 = vmatprep.subr.bf16.mxu0 0
        %3856 = vmatpush1.bf16.msra.mxu0 0
        %3857 = vmatprep.subr.bf16.mxu0 0
        %3858 = vmatpush1.bf16.msra.mxu0 0
        %3859 = vmatprep.mubr.bf16.mxu0 0
        %3860 = vmatmul.mubr.bf16.gmra.mrb[0].mxu0 %v3825
        %v3861 = vpop.f32.mrb[0].mxu0
        %v3862 = vadd.f32 %v3817, %v3861
        %v3863 = vpop.f32.mrb[0].mxu0
        %v3864 = vpop.f32.mrb[0].mxu0
        %v3865 = vadd.f32 %v3817, %v3864
        %v3866 = vpop.f32.mrb[0].mxu0
        %3867 = vdwg.mxu0
        %v3868 = vadd.f32 %v565, %v3862
        %v3869 = vadd.f32 %v566, %v3865
        %v3870 = vsel %vm590, %v3868, 0.0
        %3871 = vadd.xlane.f32.xlu0 %v3870
        %v3872 = vpop.xlane.xlu0 %3871
        %v3873 = vsel %vm590, %v3869, 0.0
        %3874 = vadd.xlane.f32.xlu0 %v3873
        %v3875 = vpop.xlane.xlu0 %3874
        %v3876 = vmul.f32 %v3872, %v2103
        %v3877 = vmul.f32 %v3875, %v2103
        %v3878 = vsub.f32 %v3868, %v3876
        %v3879 = vsub.f32 %v3869, %v3877
        %v3880 = vmul.f32 %v3878, %v3878
        %v3881 = vmul.f32 %v3879, %v3879
        %v3882 = vsel %vm590, %v3880, 0.0
        %3883 = vadd.xlane.f32.xlu0 %v3882
        %v3884 = vpop.xlane.xlu0 %3883
        %v3885 = vsel %vm590, %v3881, 0.0
        %3886 = vadd.xlane.f32.xlu0 %v3885
        %v3887 = vpop.xlane.xlu0 %3886
        %v3888 = vmul.f32 %v3884, %v2103
        %v3889 = vmul.f32 %v3887, %v2103
        %v3890 = vadd.f32 %v3888, 1e-05
        %v3891 = vadd.f32 %v3889, 1e-05
        %v3892 = vrsqrt.pop %v3890
        %v3893 = vrsqrt.pop %v3891
        %v3894 = vmul.f32 %v3878, %v3892
        %v3895 = vmul.f32 %v3879, %v3893
        %v3896 = vlaneseq
        %v3897 = vshrl.u32 %v3896, 7
        %v3898 = vsub.s32 5, %v3897
        %v3899 = vrot.slane %v561, %v3898
        %v3900 = vmul.f32 %v3894, %v3899
        %v3901 = vmul.f32 %v3895, %v3899
        %v3902 = vlaneseq
        %v3903 = vshrl.u32 %v3902, 7
        %v3904 = vsub.s32 6, %v3903
        %v3905 = vrot.slane %v561, %v3904
        %v3906 = vadd.f32 %v3900, %v3905
        %v3907 = vadd.f32 %v3901, %v3905
        %v3908 = vpack.c.bf16 %v3907, %v3906
        %v3909 = vlaneseq
        %v3910 = vshrl.u32 %v3909, 7
        %v3911 = vsub.s32 1, %v3910
        %v3912 = vrot.slane %v563, %v3911
        %3913 = vrot.lane.b32.xlu0 %v2137, 64
        %v3914 = vpop.permute.xlu0 %3913
        %3915 = vrot.lane.b32.xlu0 %v2138, 64
        %v3916 = vpop.permute.xlu0 %3915
        %v3920 = vsel %vm590, %v3908, 0
        %3922 = vmatprep.subr.bf16.mxu0 0
        %3923 = vmatpush1.bf16.msra.mxu0 %v3914
        %3924 = vmatprep.subr.bf16.mxu0 0
        %3925 = vmatpush1.bf16.msra.mxu0 %v3916
        %3926 = vmatprep.subr.bf16.mxu0 0
        %3927 = vmatpush1.bf16.msra.mxu0 0
        %3928 = vmatprep.subr.bf16.mxu0 0
        %3929 = vmatpush1.bf16.msra.mxu0 0
        %3930 = vmatprep.subr.bf16.mxu0 0
        %3931 = vmatpush1.bf16.msra.mxu0 0
        %3932 = vmatprep.subr.bf16.mxu0 0
        %3933 = vmatpush1.bf16.msra.mxu0 0
        %3934 = vmatprep.subr.bf16.mxu0 0
        %3935 = vmatpush1.bf16.msra.mxu0 0
        %3936 = vmatprep.subr.bf16.mxu0 0
        %3937 = vmatpush1.bf16.msra.mxu0 0
        %3938 = vmatprep.subr.bf16.mxu0 0
        %3939 = vmatpush1.bf16.msra.mxu0 0
        %3940 = vmatprep.subr.bf16.mxu0 0
        %3941 = vmatpush1.bf16.msra.mxu0 0
        %3942 = vmatprep.subr.bf16.mxu0 0
        %3943 = vmatpush1.bf16.msra.mxu0 0
        %3944 = vmatprep.subr.bf16.mxu0 0
        %3945 = vmatpush1.bf16.msra.mxu0 0
        %3946 = vmatprep.subr.bf16.mxu0 0
        %3947 = vmatpush1.bf16.msra.mxu0 0
        %3948 = vmatprep.subr.bf16.mxu0 0
        %3949 = vmatpush1.bf16.msra.mxu0 0
        %3950 = vmatprep.subr.bf16.mxu0 0
        %3951 = vmatpush1.bf16.msra.mxu0 0
        %3952 = vmatprep.subr.bf16.mxu0 0
        %3953 = vmatpush1.bf16.msra.mxu0 0
        %3954 = vmatprep.mubr.bf16.mxu0 0
        %3955 = vmatmul.mubr.bf16.gmra.mrb[0].mxu0 %v3920
        %v3956 = vpop.f32.mrb[0].mxu0
        %v3957 = vadd.f32 %v3912, %v3956
        %v3958 = vpop.f32.mrb[0].mxu0
        %v3959 = vpop.f32.mrb[0].mxu0
        %v3960 = vadd.f32 %v3912, %v3959
        %v3961 = vpop.f32.mrb[0].mxu0
        %3962 = vdwg.mxu0
        %v3963 = vmax.f32 %v3957, 0.0
        %v3964 = vmax.f32 %v3960, 0.0
        %v3965 = vpack.c.bf16 %v3964, %v3963
        %v3966 = vlaneseq
        %v3967 = vshrl.u32 %v3966, 7
        %v3968 = vsub.s32 7, %v3967
        %v3969 = vrot.slane %v561, %v3968
        %3970 = vrot.lane.b32.xlu0 %v2206, 96
        %v3971 = vpop.permute.xlu0 %3970
        %3972 = vrot.lane.b32.xlu0 %v2207, 96
        %v3973 = vpop.permute.xlu0 %3972
        %3974 = vrot.lane.b32.xlu0 %v2208, 96
        %v3975 = vpop.permute.xlu0 %3974
        %3976 = vrot.lane.b32.xlu0 %v2209, 96
        %v3977 = vpop.permute.xlu0 %3976
        %v3983 = vsel %vm2214, %v3965, 0
        %3985 = vmatprep.subr.bf16.mxu0 0
        %3986 = vmatpush1.bf16.msra.mxu0 %v3971
        %3987 = vmatprep.subr.bf16.mxu0 0
        %3988 = vmatpush1.bf16.msra.mxu0 %v3973
        %3989 = vmatprep.subr.bf16.mxu0 0
        %3990 = vmatpush1.bf16.msra.mxu0 %v3975
        %3991 = vmatprep.subr.bf16.mxu0 0
        %3992 = vmatpush1.bf16.msra.mxu0 %v3977
        %3993 = vmatprep.subr.bf16.mxu0 0
        %3994 = vmatpush1.bf16.msra.mxu0 0
        %3995 = vmatprep.subr.bf16.mxu0 0
        %3996 = vmatpush1.bf16.msra.mxu0 0
        %3997 = vmatprep.subr.bf16.mxu0 0
        %3998 = vmatpush1.bf16.msra.mxu0 0
        %3999 = vmatprep.subr.bf16.mxu0 0
        %4000 = vmatpush1.bf16.msra.mxu0 0
        %4001 = vmatprep.subr.bf16.mxu0 0
        %4002 = vmatpush1.bf16.msra.mxu0 0
        %4003 = vmatprep.subr.bf16.mxu0 0
        %4004 = vmatpush1.bf16.msra.mxu0 0
        %4005 = vmatprep.subr.bf16.mxu0 0
        %4006 = vmatpush1.bf16.msra.mxu0 0
        %4007 = vmatprep.subr.bf16.mxu0 0
        %4008 = vmatpush1.bf16.msra.mxu0 0
        %4009 = vmatprep.subr.bf16.mxu0 0
        %4010 = vmatpush1.bf16.msra.mxu0 0
        %4011 = vmatprep.subr.bf16.mxu0 0
        %4012 = vmatpush1.bf16.msra.mxu0 0
        %4013 = vmatprep.subr.bf16.mxu0 0
        %4014 = vmatpush1.bf16.msra.mxu0 0
        %4015 = vmatprep.subr.bf16.mxu0 0
        %4016 = vmatpush1.bf16.msra.mxu0 0
        %4017 = vmatprep.mubr.bf16.mxu0 0
        %4018 = vmatmul.mubr.bf16.gmra.mrb[0].mxu0 %v3983
        %v4019 = vpop.f32.mrb[0].mxu0
        %v4020 = vadd.f32 %v3969, %v4019
        %v4021 = vpop.f32.mrb[0].mxu0
        %v4022 = vpop.f32.mrb[0].mxu0
        %v4023 = vadd.f32 %v3969, %v4022
        %v4024 = vpop.f32.mrb[0].mxu0
        %4025 = vdwg.mxu0
        %v4026 = vadd.f32 %v3906, %v4020
        %v4027 = vadd.f32 %v3907, %v4023
        %v4028 = vsel %vm590, %v4026, 0.0
        %4029 = vadd.xlane.f32.xlu0 %v4028
        %v4030 = vpop.xlane.xlu0 %4029
        %v4031 = vsel %vm590, %v4027, 0.0
        %4032 = vadd.xlane.f32.xlu0 %v4031
        %v4033 = vpop.xlane.xlu0 %4032
        %v4034 = vmul.f32 %v4030, %v2103
        %v4035 = vmul.f32 %v4033, %v2103
        %v4036 = vsub.f32 %v4026, %v4034
        %v4037 = vsub.f32 %v4027, %v4035
        %v4038 = vmul.f32 %v4036, %v4036
        %v4039 = vmul.f32 %v4037, %v4037
        %v4040 = vsel %vm590, %v4038, 0.0
        %4041 = vadd.xlane.f32.xlu0 %v4040
        %v4042 = vpop.xlane.xlu0 %4041
        %v4043 = vsel %vm590, %v4039, 0.0
        %4044 = vadd.xlane.f32.xlu0 %v4043
        %v4045 = vpop.xlane.xlu0 %4044
        %v4046 = vmul.f32 %v4042, %v2103
        %v4047 = vmul.f32 %v4045, %v2103
        %v4048 = vadd.f32 %v4046, 1e-05
        %v4049 = vadd.f32 %v4047, 1e-05
        %v4050 = vrsqrt.pop %v4048
        %v4051 = vrsqrt.pop %v4049
        %v4052 = vmul.f32 %v4036, %v4050
        %v4053 = vmul.f32 %v4037, %v4051
        %v4054 = vlaneseq
        %v4055 = vshrl.u32 %v4054, 7
        %v4056 = vsub.s32 0, %v4055
        %v4057 = vrot.slane %v562, %v4056
        %v4058 = vmul.f32 %v4052, %v4057
        %v4059 = vmul.f32 %v4053, %v4057
        %v4060 = vlaneseq
        %v4061 = vshrl.u32 %v4060, 7
        %v4062 = vsub.s32 1, %v4061
        %v4063 = vrot.slane %v562, %v4062
        %v4064 = vadd.f32 %v4058, %v4063
        %v4065 = vadd.f32 %v4059, %v4063
        %4066 = vst.msk [vmem:[%s535] sm:$0xff] %vm590, %v2281
        %4067 = vst.msk [vmem:[%s542] sm:$0xff] %vm590, %v4064
        %4068 = vst.msk [vmem:[%s542 + $0x8] sm:$0xff] %vm590, %v4065
        %s4069 = sand.u32 %s255, 1
        %s4070 = scalar_lea.sflag [#allocation4], %s4069
        %s4071 = sand.u32 %s255, 1
        %s4072 = smul.addr %s4071, 8
        %s4073 = scalar_lea.vmem [#allocation14], %s4072
        %s4074 = sand.u32 %s281, 1
        %s4075 = scalar_lea.sflag [#allocation16], %s4074
        %s4076 = sand.u32 %s281, 1
        %s4077 = smul.addr %s4076, 16
        %s4078 = scalar_lea.vmem [#allocation15], %s4077
        // Predicated region
        $region85: #{tpu_custom_call.1} parent=55 // pred_check
          %p4079 = pneg %p265
        $region86: #{tpu_custom_call.1} parent=55 // pred_check_branch
          %4081 = sbr.rel (%p4079) target = $region88
        $region87: #{tpu_custom_call.1} parent=55 // pred_region
          %s4083 = ssub.s32 128, 128
          %4084 = vsyncadd %s4070, %s4083
          %s4085 = smul.addr %s38, 128
          %s4086 = scalar_lea.hbm %s9, %s4085
          %s4088 = sshll.u32 %s4073, 4
          %s4089 = int_to_ptr.vmem [resolvable:$true] %s4088
          %4091 = dma.vmem_to_hbm [thread:$0]  %s4089, 128, %s4086, %s4070
        $region88: #{tpu_custom_call.1} parent=55 // pred_fallthru
          _
        // Predicated region
        $region89: #{tpu_custom_call.1} parent=55 // pred_check
          %p4092 = pneg %p291
        $region90: #{tpu_custom_call.1} parent=55 // pred_check_branch
          %4094 = sbr.rel (%p4092) target = $region92
        $region91: #{tpu_custom_call.1} parent=55 // pred_region
          %s4096 = ssub.s32 256, 256
          %4097 = vsyncadd %s4075, %s4096
          %s4098 = smul.addr %s38, 2
          %s4099 = smul.addr %s4098, 128
          %s4100 = scalar_lea.hbm %s10, %s4099
          %s4101 = sshll.u32 %s4078, 4
          %s4102 = int_to_ptr.vmem [resolvable:$true] %s4101
          %4107 = dma.vmem_to_hbm [thread:$0]  %s4102, 256, %s4100, %s4075, 128, 128, 8
        $region92: #{tpu_custom_call.1} parent=55 // pred_fallthru
          _
      $region56: #{tpu_custom_call.1} parent=5 // pred_fallthru
        _
      %p4108 = scmp.le.s32.totalorder 2, %s33
      // Predicated region
      $region93: #{tpu_custom_call.1} parent=5 // pred_check
        %p4109 = pneg %p4108
      $region94: #{tpu_custom_call.1} parent=5 // pred_check_branch
        %4111 = sbr.rel (%p4109) target = $region96
      $region95: #{tpu_custom_call.1} parent=5 // pred_region
        %s4112 = ssub.s32 %s33, 2
        // Predicated region
        $region97: #{tpu_custom_call.1} parent=95 // pred_check
          %p4113 = pneg %p271
        $region98: #{tpu_custom_call.1} parent=95 // pred_check_branch
          %4115 = sbr.rel (%p4113) target = $region100
        $region99: #{tpu_custom_call.1} parent=95 // pred_region
          %s4116 = sand.u32 %s256, 1
          %s4117 = scalar_lea.sflag [#allocation4], %s4116
          %s4118 = sand.u32 %s256, 1
          %s4119 = smul.addr %s4118, 8
          %s4120 = scalar_lea.vmem [#allocation14], %s4119
          %4121 = dma.done %s4117, 128
        $region100: #{tpu_custom_call.1} parent=95 // pred_fallthru
          _
        // Predicated region
        $region101: #{tpu_custom_call.1} parent=95 // pred_check
          %p4122 = pneg %p297
        $region102: #{tpu_custom_call.1} parent=95 // pred_check_branch
          %4124 = sbr.rel (%p4122) target = $region104
        $region103: #{tpu_custom_call.1} parent=95 // pred_region
          %s4125 = sand.u32 %s282, 1
          %s4126 = scalar_lea.sflag [#allocation16], %s4125
          %s4127 = sand.u32 %s282, 1
          %s4128 = smul.addr %s4127, 16
          %s4129 = scalar_lea.vmem [#allocation15], %s4128
          %4130 = dma.done %s4126, 256
        $region104: #{tpu_custom_call.1} parent=95 // pred_fallthru
          _
      $region96: #{tpu_custom_call.1} parent=5 // pred_fallthru
        _
    $region6: #{tpu_custom_call.1} parent=1 // loop_footer
      %s37 = sadd.s32 1, %s33
    $region7: #{tpu_custom_call.1} parent=1 // loop_footer_branch
      %32 = sbr.rel target = $region3
    $region8: #{tpu_custom_call.1} parent=1 // loop_exit
      _
    %4131 = vsyncpa [#allocation3], 1
    %s4132 = scalar_lea.sflag [#allocation3], 1
    %4133 = vsyncpa %s4132, 1
    %4134 = vsyncpa [#allocation6], 1
    %s4135 = scalar_lea.sflag [#allocation6], 1
    %4136 = vsyncpa %s4135, 1
    %4137 = vsyncpa [#allocation9], 1
    %s4138 = scalar_lea.sflag [#allocation9], 1
    %4139 = vsyncpa %s4138, 1
    %4140 = vsyncpa [#allocation12], 1
    %4141 = vsyncpa [#allocation4], 1
    %s4142 = scalar_lea.sflag [#allocation4], 1
    %4143 = vsyncpa %s4142, 1
    %4144 = vsyncpa [#allocation16], 1
    %s4145 = scalar_lea.sflag [#allocation16], 1
    %4146 = vsyncpa %s4145, 1

</llo_original>
